<compile_context>
chip_gen: v7x
topology: tpu7x:2x2x1
jax: 0.10.0
libtpu: 0.0.40
codegen_flags: <defaults>
</compile_context>

<pallas_src>
import functools

import jax
import jax.numpy as jnp
from jax.experimental import pallas as pl
from jax.experimental.pallas import tpu as pltpu


def _conv_bn_relu_kernel(x_ref, w_ref, scale_ref, bias_ref, o_ref, *, width):
    """One batch image per grid step.

    x_ref:     (1, (H+2)*W, Cin)  row-padded (1 zero row above/below),
                                  channels-last, spatial dims flattened
    w_ref:     (9, Cin, Cout)     conv taps, tap k = (kh*3 + kw)
    scale_ref: (1, Cout)          folded BN scale = gamma / sqrt(var + eps)
    bias_ref:  (1, Cout)          folded BN bias  = beta - mean * scale
    o_ref:     (1, H*W, Cout)     channels-last output, spatial flattened
    """
    hw = o_ref.shape[1]
    cout = o_ref.shape[2]

    xp = x_ref[0]                                   # ((H+2)*W, Cin)

    # Column-validity masks for the +-1 horizontal shifts, shape (HW, 1)
    # (lane-broadcast against the channel axis).  Computed once, reused.
    col = jax.lax.broadcasted_iota(jnp.int32, (hw, 1), 0) % width
    ok_left = col >= 1               # source column w-1 is valid (dw = -1)
    ok_right = col <= width - 2      # source column w+1 is valid (dw = +1)

    acc = jnp.zeros((hw, cout), jnp.float32)
    for kh in range(3):
        # Vertical tap: contiguous slab of HW rows; halo rows are real zeros
        # coming from the wrapper-side row padding.
        rows = xp[kh * width: kh * width + hw, :]   # (HW, Cin)
        for kw in range(3):
            dw = kw - 1
            if dw == 0:
                patch = rows
            else:
                # patch[i] = rows[i + dw], zeroed where the source column
                # falls outside the image (also kills the roll wrap-around).
                shifted = jnp.roll(rows, -dw, axis=0)
                mask = ok_right if dw == 1 else ok_left
                patch = jnp.where(mask, shifted, 0.0)
            acc = acc + jnp.dot(patch, w_ref[kh * 3 + kw],
                                preferred_element_type=jnp.float32)

    # Fused BatchNorm (per-channel affine, free lane broadcast) + ReLU.
    y = acc * scale_ref[...] + bias_ref[...]
    o_ref[0] = jnp.maximum(y, 0.0).astype(o_ref.dtype)


def _vmem_limit_bytes(H, W, Cin, Cout, itemsize):
    x_blk = (H + 2) * W * Cin * itemsize
    o_blk = H * W * Cout * itemsize
    resident = (9 * Cin * Cout + 2 * Cout) * 4
    need = 2 * (x_blk + o_blk) + resident          # double-buffered streams
    need = int(need * 1.5) + (2 << 20)             # accumulator / headroom
    # Cap at 32 MiB so the request is safe on v5e/v6e/v7x alike.
    return max(min(need, 32 * 1024 * 1024), 4 * 1024 * 1024)


def conv_bn_relu_forward(x, conv_w, gamma, beta, running_mean, running_var,
                         eps=1e-5):
    """x: (B, Cin, H, W) NCHW.  conv_w: (Cout, Cin, 3, 3) (PyTorch layout).
    gamma/beta/running_mean/running_var: (Cout,).  Returns (B, Cout, H, W)."""
    B, Cin, H, W = x.shape
    Cout, Cin2, KH, KW = conv_w.shape
    assert Cin2 == Cin and (KH, KW) == (3, 3)

    # --- layout plumbing (plain XLA, outside the kernel) --------------------
    # Channels-last, pad one zero ROW above/below (the conv's vertical halo),
    # then flatten the spatial dims; horizontal halo is handled in-kernel.
    x_nhwc = jnp.transpose(x, (0, 2, 3, 1))                      # (B, H, W, Cin)
    x_rowpad = jnp.pad(x_nhwc, ((0, 0), (1, 1), (0, 0), (0, 0)))  # (B, H+2, W, Cin)
    x_flat = x_rowpad.reshape(B, (H + 2) * W, Cin)

    # Conv taps: (Cout, Cin, KH, KW) -> (KH, KW, Cin, Cout) -> (9, Cin, Cout).
    w_taps = jnp.transpose(conv_w, (2, 3, 1, 0)).reshape(KH * KW, Cin, Cout)
    w_taps = w_taps.astype(jnp.float32)

    # Fold BatchNorm (inference / running-stats form) into per-channel affine.
    inv_std = 1.0 / jnp.sqrt(running_var.astype(jnp.float32) + eps)
    scale = (gamma.astype(jnp.float32) * inv_std).reshape(1, Cout)
    bias = (beta.astype(jnp.float32)
            - running_mean.astype(jnp.float32)
            * gamma.astype(jnp.float32) * inv_std).reshape(1, Cout)

    vmem_limit = _vmem_limit_bytes(H, W, Cin, Cout, x.dtype.itemsize)
    kernel = functools.partial(_conv_bn_relu_kernel, width=W)

    out_flat = pl.pallas_call(
        kernel,
        out_shape=jax.ShapeDtypeStruct((B, H * W, Cout), x.dtype),
        grid_spec=pltpu.PrefetchScalarGridSpec(
            num_scalar_prefetch=0,
            grid=(B,),
            in_specs=[
                pl.BlockSpec((1, (H + 2) * W, Cin), lambda b: (b, 0, 0)),
                pl.BlockSpec((KH * KW, Cin, Cout), lambda b: (0, 0, 0)),
                pl.BlockSpec((1, Cout), lambda b: (0, 0)),
                pl.BlockSpec((1, Cout), lambda b: (0, 0)),
            ],
            out_specs=pl.BlockSpec((1, H * W, Cout), lambda b: (b, 0, 0)),
        ),
        compiler_params=pltpu.CompilerParams(
            dimension_semantics=("parallel",),
            vmem_limit_bytes=vmem_limit,
        ),
    )(x_flat, w_taps, scale, bias)

    # (B, H*W, Cout) -> (B, Cout, H, W) to match the PyTorch NCHW output.
    return jnp.transpose(out_flat.reshape(B, H, W, Cout), (0, 3, 1, 2))


def _reference(x, conv_w, gamma, beta, running_mean, running_var, eps=1e-5):
    y = jax.lax.conv_general_dilated(
        x, conv_w, window_strides=(1, 1), padding=((1, 1), (1, 1)),
        dimension_numbers=("NCHW", "OIHW", "NCHW"))
    m = running_mean[None, :, None, None]
    v = running_var[None, :, None, None]
    g = gamma[None, :, None, None]
    b = beta[None, :, None, None]
    y = (y - m) / jnp.sqrt(v + eps) * g + b
    return jnp.maximum(y, 0.0)


if __name__ == "__main__":
    B, Cin, Cout, H, W = 2, 4, 8, 16, 16

    key = jax.random.PRNGKey(0)
    kx, kw, kg, kb, km, kv = jax.random.split(key, 6)

    x = jax.random.normal(kx, (B, Cin, H, W), dtype=jnp.float32)
    conv_w = jax.random.normal(kw, (Cout, Cin, 3, 3), dtype=jnp.float32) * 0.1
    gamma = 1.0 + 0.1 * jax.random.normal(kg, (Cout,), dtype=jnp.float32)
    beta = 0.1 * jax.random.normal(kb, (Cout,), dtype=jnp.float32)
    running_mean = 0.1 * jax.random.normal(km, (Cout,), dtype=jnp.float32)
    running_var = 1.0 + 0.1 * jnp.abs(
        jax.random.normal(kv, (Cout,), dtype=jnp.float32))

    out = conv_bn_relu_forward(x, conv_w, gamma, beta,
                               running_mean, running_var)
    jax.block_until_ready(out)

    ref = _reference(x, conv_w, gamma, beta, running_mean, running_var)
    assert out.shape == (B, Cout, H, W)
    assert jnp.allclose(out, ref, atol=1e-4, rtol=1e-4), \
        float(jnp.max(jnp.abs(out - ref)))

    print("KERNEL_OK")
</pallas_src>

<mosaic_0001>
module attributes {stable_mosaic.version = 11 : i64} {
  func.func @_conv_bn_relu_kernel(%arg0: i32, %arg1: memref<1x288x4xf32, #tpu.memory_space<vmem>>, %arg2: memref<9x4x8xf32, #tpu.memory_space<vmem>>, %arg3: memref<1x8xf32, #tpu.memory_space<vmem>>, %arg4: memref<1x8xf32, #tpu.memory_space<vmem>>, %arg5: memref<1x256x8xf32, #tpu.memory_space<vmem>>) attributes {dimension_semantics = [#tpu.dimension_semantics<parallel>], iteration_bounds = array<i64: 2>, scalar_prefetch = 0 : i64, scratch_operands = 0 : i64, tpu.core_type = #tpu.core_type<tc>, window_params = [{transform_indices = @transform_0, window_bounds = array<i64: 1, 288, 4>}, {pipeline_mode = #tpu.pipeline_mode<synchronous>, transform_indices = @transform_1, window_bounds = array<i64: 9, 4, 8>}, {pipeline_mode = #tpu.pipeline_mode<synchronous>, transform_indices = @transform_2, window_bounds = array<i64: 1, 8>}, {pipeline_mode = #tpu.pipeline_mode<synchronous>, transform_indices = @transform_3, window_bounds = array<i64: 1, 8>}, {transform_indices = @transform_4, window_bounds = array<i64: 1, 256, 8>}]} {
    %c0 = arith.constant 0 : index
    %c0_0 = arith.constant 0 : index
    %c0_1 = arith.constant 0 : index
    %0 = vector.load %arg1[%c0, %c0_0, %c0_1] : memref<1x288x4xf32, #tpu.memory_space<vmem>>, vector<1x288x4xf32>
    %1 = vector.shape_cast %0 : vector<1x288x4xf32> to vector<288x4xf32>
    %2 = tpu.iota {dimensions = array<i32: 0>} : vector<256x1xi32>
    %c16_i32 = arith.constant 16 : i32
    %c0_i32 = arith.constant 0 : i32
    %3 = arith.cmpi eq, %c16_i32, %c0_i32 : i32
    %c1_i32 = arith.constant 1 : i32
    %4 = arith.select %3, %c1_i32, %c16_i32 : i32
    %5 = vector.broadcast %4 : i32 to vector<256x1xi32>
    %6 = arith.remsi %2, %5 : vector<256x1xi32>
    %c0_i32_2 = arith.constant 0 : i32
    %7 = vector.broadcast %c0_i32_2 : i32 to vector<256x1xi32>
    %8 = arith.cmpi ne, %6, %7 : vector<256x1xi32>
    %c0_i32_3 = arith.constant 0 : i32
    %9 = vector.broadcast %c0_i32_3 : i32 to vector<256x1xi32>
    %10 = arith.cmpi slt, %6, %9 : vector<256x1xi32>
    %c0_i32_4 = arith.constant 0 : i32
    %11 = arith.cmpi slt, %4, %c0_i32_4 : i32
    %12 = vector.broadcast %11 : i1 to vector<256x1xi1>
    %13 = vector.broadcast %12 : vector<256x1xi1> to vector<256x1xi1>
    %14 = arith.xori %10, %13 : vector<256x1xi1>
    %15 = arith.andi %14, %8 : vector<256x1xi1>
    %16 = vector.broadcast %4 : i32 to vector<256x1xi32>
    %17 = arith.addi %6, %16 : vector<256x1xi32>
    %18 = arith.select %15, %17, %6 : vector<256x1xi1>, vector<256x1xi32>
    %c1_i32_5 = arith.constant 1 : i32
    %19 = vector.broadcast %c1_i32_5 : i32 to vector<256x1xi32>
    %20 = arith.cmpi sge, %18, %19 : vector<256x1xi32>
    %c14_i32 = arith.constant 14 : i32
    %21 = vector.broadcast %c14_i32 : i32 to vector<256x1xi32>
    %22 = arith.cmpi sle, %18, %21 : vector<256x1xi32>
    %cst = arith.constant 0.000000e+00 : f32
    %23 = vector.broadcast %cst : f32 to vector<256x8xf32>
    %24 = vector.extract_strided_slice %1 {offsets = [0, 0], sizes = [256, 4], strides = [1, 1]} : vector<288x4xf32> to vector<256x4xf32>
    %25 = vector.extract_strided_slice %24 {offsets = [255, 0], sizes = [1, 4], strides = [1, 1]} : vector<256x4xf32> to vector<1x4xf32>
    %26 = vector.extract_strided_slice %24 {offsets = [0, 0], sizes = [255, 4], strides = [1, 1]} : vector<256x4xf32> to vector<255x4xf32>
    %27 = tpu.concatenate %25, %26 in 0 : vector<1x4xf32>, vector<255x4xf32> -> vector<256x4xf32>
    %cst_6 = arith.constant 0.000000e+00 : f32
    %28 = vector.shape_cast %20 : vector<256x1xi1> to vector<256x1xi1>
    %29 = vector.broadcast %28 : vector<256x1xi1> to vector<256x4xi1>
    %30 = vector.broadcast %cst_6 : f32 to vector<256x4xf32>
    %31 = arith.select %29, %27, %30 : vector<256x4xi1>, vector<256x4xf32>
    %c0_7 = arith.constant 0 : index
    %c0_8 = arith.constant 0 : index
    %c0_9 = arith.constant 0 : index
    %32 = vector.load %arg2[%c0_7, %c0_8, %c0_9] : memref<9x4x8xf32, #tpu.memory_space<vmem>>, vector<1x4x8xf32>
    %33 = vector.shape_cast %32 : vector<1x4x8xf32> to vector<4x8xf32>
    %cst_10 = arith.constant dense<0.000000e+00> : vector<256x8xf32>
    %34 = tpu.matmul %31, %33, %cst_10 {dimension_numbers = #tpu.dot_dimension_numbers<[1], [0], [0], [1], [0, 0, 1, 1], [], []>} : vector<256x4xf32>, vector<4x8xf32>, vector<256x8xf32> -> vector<256x8xf32>
    %35 = arith.addf %23, %34 : vector<256x8xf32>
    %c1 = arith.constant 1 : index
    %c0_11 = arith.constant 0 : index
    %c0_12 = arith.constant 0 : index
    %36 = vector.load %arg2[%c1, %c0_11, %c0_12] : memref<9x4x8xf32, #tpu.memory_space<vmem>>, vector<1x4x8xf32>
    %37 = vector.shape_cast %36 : vector<1x4x8xf32> to vector<4x8xf32>
    %cst_13 = arith.constant dense<0.000000e+00> : vector<256x8xf32>
    %38 = tpu.matmul %24, %37, %cst_13 {dimension_numbers = #tpu.dot_dimension_numbers<[1], [0], [0], [1], [0, 0, 1, 1], [], []>} : vector<256x4xf32>, vector<4x8xf32>, vector<256x8xf32> -> vector<256x8xf32>
    %39 = arith.addf %35, %38 : vector<256x8xf32>
    %40 = vector.extract_strided_slice %24 {offsets = [1, 0], sizes = [255, 4], strides = [1, 1]} : vector<256x4xf32> to vector<255x4xf32>
    %41 = vector.extract_strided_slice %24 {offsets = [0, 0], sizes = [1, 4], strides = [1, 1]} : vector<256x4xf32> to vector<1x4xf32>
    %42 = tpu.concatenate %40, %41 in 0 : vector<255x4xf32>, vector<1x4xf32> -> vector<256x4xf32>
    %cst_14 = arith.constant 0.000000e+00 : f32
    %43 = vector.shape_cast %22 : vector<256x1xi1> to vector<256x1xi1>
    %44 = vector.broadcast %43 : vector<256x1xi1> to vector<256x4xi1>
    %45 = vector.broadcast %cst_14 : f32 to vector<256x4xf32>
    %46 = arith.select %44, %42, %45 : vector<256x4xi1>, vector<256x4xf32>
    %c2 = arith.constant 2 : index
    %c0_15 = arith.constant 0 : index
    %c0_16 = arith.constant 0 : index
    %47 = vector.load %arg2[%c2, %c0_15, %c0_16] : memref<9x4x8xf32, #tpu.memory_space<vmem>>, vector<1x4x8xf32>
    %48 = vector.shape_cast %47 : vector<1x4x8xf32> to vector<4x8xf32>
    %cst_17 = arith.constant dense<0.000000e+00> : vector<256x8xf32>
    %49 = tpu.matmul %46, %48, %cst_17 {dimension_numbers = #tpu.dot_dimension_numbers<[1], [0], [0], [1], [0, 0, 1, 1], [], []>} : vector<256x4xf32>, vector<4x8xf32>, vector<256x8xf32> -> vector<256x8xf32>
    %50 = arith.addf %39, %49 : vector<256x8xf32>
    %51 = vector.extract_strided_slice %1 {offsets = [16, 0], sizes = [256, 4], strides = [1, 1]} : vector<288x4xf32> to vector<256x4xf32>
    %52 = vector.extract_strided_slice %51 {offsets = [255, 0], sizes = [1, 4], strides = [1, 1]} : vector<256x4xf32> to vector<1x4xf32>
    %53 = vector.extract_strided_slice %51 {offsets = [0, 0], sizes = [255, 4], strides = [1, 1]} : vector<256x4xf32> to vector<255x4xf32>
    %54 = tpu.concatenate %52, %53 in 0 : vector<1x4xf32>, vector<255x4xf32> -> vector<256x4xf32>
    %cst_18 = arith.constant 0.000000e+00 : f32
    %55 = vector.shape_cast %20 : vector<256x1xi1> to vector<256x1xi1>
    %56 = vector.broadcast %55 : vector<256x1xi1> to vector<256x4xi1>
    %57 = vector.broadcast %cst_18 : f32 to vector<256x4xf32>
    %58 = arith.select %56, %54, %57 : vector<256x4xi1>, vector<256x4xf32>
    %c3 = arith.constant 3 : index
    %c0_19 = arith.constant 0 : index
    %c0_20 = arith.constant 0 : index
    %59 = vector.load %arg2[%c3, %c0_19, %c0_20] : memref<9x4x8xf32, #tpu.memory_space<vmem>>, vector<1x4x8xf32>
    %60 = vector.shape_cast %59 : vector<1x4x8xf32> to vector<4x8xf32>
    %cst_21 = arith.constant dense<0.000000e+00> : vector<256x8xf32>
    %61 = tpu.matmul %58, %60, %cst_21 {dimension_numbers = #tpu.dot_dimension_numbers<[1], [0], [0], [1], [0, 0, 1, 1], [], []>} : vector<256x4xf32>, vector<4x8xf32>, vector<256x8xf32> -> vector<256x8xf32>
    %62 = arith.addf %50, %61 : vector<256x8xf32>
    %c4 = arith.constant 4 : index
    %c0_22 = arith.constant 0 : index
    %c0_23 = arith.constant 0 : index
    %63 = vector.load %arg2[%c4, %c0_22, %c0_23] : memref<9x4x8xf32, #tpu.memory_space<vmem>>, vector<1x4x8xf32>
    %64 = vector.shape_cast %63 : vector<1x4x8xf32> to vector<4x8xf32>
    %cst_24 = arith.constant dense<0.000000e+00> : vector<256x8xf32>
    %65 = tpu.matmul %51, %64, %cst_24 {dimension_numbers = #tpu.dot_dimension_numbers<[1], [0], [0], [1], [0, 0, 1, 1], [], []>} : vector<256x4xf32>, vector<4x8xf32>, vector<256x8xf32> -> vector<256x8xf32>
    %66 = arith.addf %62, %65 : vector<256x8xf32>
    %67 = vector.extract_strided_slice %51 {offsets = [1, 0], sizes = [255, 4], strides = [1, 1]} : vector<256x4xf32> to vector<255x4xf32>
    %68 = vector.extract_strided_slice %51 {offsets = [0, 0], sizes = [1, 4], strides = [1, 1]} : vector<256x4xf32> to vector<1x4xf32>
    %69 = tpu.concatenate %67, %68 in 0 : vector<255x4xf32>, vector<1x4xf32> -> vector<256x4xf32>
    %cst_25 = arith.constant 0.000000e+00 : f32
    %70 = vector.shape_cast %22 : vector<256x1xi1> to vector<256x1xi1>
    %71 = vector.broadcast %70 : vector<256x1xi1> to vector<256x4xi1>
    %72 = vector.broadcast %cst_25 : f32 to vector<256x4xf32>
    %73 = arith.select %71, %69, %72 : vector<256x4xi1>, vector<256x4xf32>
    %c5 = arith.constant 5 : index
    %c0_26 = arith.constant 0 : index
    %c0_27 = arith.constant 0 : index
    %74 = vector.load %arg2[%c5, %c0_26, %c0_27] : memref<9x4x8xf32, #tpu.memory_space<vmem>>, vector<1x4x8xf32>
    %75 = vector.shape_cast %74 : vector<1x4x8xf32> to vector<4x8xf32>
    %cst_28 = arith.constant dense<0.000000e+00> : vector<256x8xf32>
    %76 = tpu.matmul %73, %75, %cst_28 {dimension_numbers = #tpu.dot_dimension_numbers<[1], [0], [0], [1], [0, 0, 1, 1], [], []>} : vector<256x4xf32>, vector<4x8xf32>, vector<256x8xf32> -> vector<256x8xf32>
    %77 = arith.addf %66, %76 : vector<256x8xf32>
    %78 = vector.extract_strided_slice %1 {offsets = [32, 0], sizes = [256, 4], strides = [1, 1]} : vector<288x4xf32> to vector<256x4xf32>
    %79 = vector.extract_strided_slice %78 {offsets = [255, 0], sizes = [1, 4], strides = [1, 1]} : vector<256x4xf32> to vector<1x4xf32>
    %80 = vector.extract_strided_slice %78 {offsets = [0, 0], sizes = [255, 4], strides = [1, 1]} : vector<256x4xf32> to vector<255x4xf32>
    %81 = tpu.concatenate %79, %80 in 0 : vector<1x4xf32>, vector<255x4xf32> -> vector<256x4xf32>
    %cst_29 = arith.constant 0.000000e+00 : f32
    %82 = vector.shape_cast %20 : vector<256x1xi1> to vector<256x1xi1>
    %83 = vector.broadcast %82 : vector<256x1xi1> to vector<256x4xi1>
    %84 = vector.broadcast %cst_29 : f32 to vector<256x4xf32>
    %85 = arith.select %83, %81, %84 : vector<256x4xi1>, vector<256x4xf32>
    %c6 = arith.constant 6 : index
    %c0_30 = arith.constant 0 : index
    %c0_31 = arith.constant 0 : index
    %86 = vector.load %arg2[%c6, %c0_30, %c0_31] : memref<9x4x8xf32, #tpu.memory_space<vmem>>, vector<1x4x8xf32>
    %87 = vector.shape_cast %86 : vector<1x4x8xf32> to vector<4x8xf32>
    %cst_32 = arith.constant dense<0.000000e+00> : vector<256x8xf32>
    %88 = tpu.matmul %85, %87, %cst_32 {dimension_numbers = #tpu.dot_dimension_numbers<[1], [0], [0], [1], [0, 0, 1, 1], [], []>} : vector<256x4xf32>, vector<4x8xf32>, vector<256x8xf32> -> vector<256x8xf32>
    %89 = arith.addf %77, %88 : vector<256x8xf32>
    %c7 = arith.constant 7 : index
    %c0_33 = arith.constant 0 : index
    %c0_34 = arith.constant 0 : index
    %90 = vector.load %arg2[%c7, %c0_33, %c0_34] : memref<9x4x8xf32, #tpu.memory_space<vmem>>, vector<1x4x8xf32>
    %91 = vector.shape_cast %90 : vector<1x4x8xf32> to vector<4x8xf32>
    %cst_35 = arith.constant dense<0.000000e+00> : vector<256x8xf32>
    %92 = tpu.matmul %78, %91, %cst_35 {dimension_numbers = #tpu.dot_dimension_numbers<[1], [0], [0], [1], [0, 0, 1, 1], [], []>} : vector<256x4xf32>, vector<4x8xf32>, vector<256x8xf32> -> vector<256x8xf32>
    %93 = arith.addf %89, %92 : vector<256x8xf32>
    %94 = vector.extract_strided_slice %78 {offsets = [1, 0], sizes = [255, 4], strides = [1, 1]} : vector<256x4xf32> to vector<255x4xf32>
    %95 = vector.extract_strided_slice %78 {offsets = [0, 0], sizes = [1, 4], strides = [1, 1]} : vector<256x4xf32> to vector<1x4xf32>
    %96 = tpu.concatenate %94, %95 in 0 : vector<255x4xf32>, vector<1x4xf32> -> vector<256x4xf32>
    %cst_36 = arith.constant 0.000000e+00 : f32
    %97 = vector.shape_cast %22 : vector<256x1xi1> to vector<256x1xi1>
    %98 = vector.broadcast %97 : vector<256x1xi1> to vector<256x4xi1>
    %99 = vector.broadcast %cst_36 : f32 to vector<256x4xf32>
    %100 = arith.select %98, %96, %99 : vector<256x4xi1>, vector<256x4xf32>
    %c8 = arith.constant 8 : index
    %c0_37 = arith.constant 0 : index
    %c0_38 = arith.constant 0 : index
    %101 = vector.load %arg2[%c8, %c0_37, %c0_38] : memref<9x4x8xf32, #tpu.memory_space<vmem>>, vector<1x4x8xf32>
    %102 = vector.shape_cast %101 : vector<1x4x8xf32> to vector<4x8xf32>
    %cst_39 = arith.constant dense<0.000000e+00> : vector<256x8xf32>
    %103 = tpu.matmul %100, %102, %cst_39 {dimension_numbers = #tpu.dot_dimension_numbers<[1], [0], [0], [1], [0, 0, 1, 1], [], []>} : vector<256x4xf32>, vector<4x8xf32>, vector<256x8xf32> -> vector<256x8xf32>
    %104 = arith.addf %93, %103 : vector<256x8xf32>
    %c0_40 = arith.constant 0 : index
    %c0_41 = arith.constant 0 : index
    %105 = vector.load %arg3[%c0_40, %c0_41] : memref<1x8xf32, #tpu.memory_space<vmem>>, vector<1x8xf32>
    %106 = vector.broadcast %105 : vector<1x8xf32> to vector<256x8xf32>
    %107 = arith.mulf %104, %106 : vector<256x8xf32>
    %c0_42 = arith.constant 0 : index
    %c0_43 = arith.constant 0 : index
    %108 = vector.load %arg4[%c0_42, %c0_43] : memref<1x8xf32, #tpu.memory_space<vmem>>, vector<1x8xf32>
    %109 = vector.broadcast %108 : vector<1x8xf32> to vector<256x8xf32>
    %110 = arith.addf %107, %109 : vector<256x8xf32>
    %cst_44 = arith.constant 0.000000e+00 : f32
    %111 = vector.broadcast %cst_44 : f32 to vector<256x8xf32>
    %112 = arith.maximumf %110, %111 : vector<256x8xf32>
    %c0_45 = arith.constant 0 : index
    %c0_46 = arith.constant 0 : index
    %c0_47 = arith.constant 0 : index
    %113 = vector.load %arg5[%c0_45, %c0_46, %c0_47] : memref<1x256x8xf32, #tpu.memory_space<vmem>>, vector<1x256x8xf32>
    %114 = vector.shape_cast %113 : vector<1x256x8xf32> to vector<256x8xf32>
    %115 = vector.shape_cast %112 : vector<256x8xf32> to vector<1x256x8xf32>
    tpu.vector_store %arg5[%c0_45, %c0_46, %c0_47], %115 {strides = array<i32>} : memref<1x256x8xf32, #tpu.memory_space<vmem>>, vector<1x256x8xf32>,
    return
  }
  func.func @transform_0(%arg0: i32) -> (i32, i32, i32) {
    %c0_i32 = arith.constant 0 : i32
    %c0_i32_0 = arith.constant 0 : i32
    %c0_i32_1 = arith.constant 0 : i32
    return %arg0, %c0_i32, %c0_i32_0 : i32, i32, i32
  }
  func.func @transform_1(%arg0: i32) -> (i32, i32, i32) {
    %c0_i32 = arith.constant 0 : i32
    %c0_i32_0 = arith.constant 0 : i32
    %c0_i32_1 = arith.constant 0 : i32
    %c0_i32_2 = arith.constant 0 : i32
    return %c0_i32, %c0_i32_0, %c0_i32_1 : i32, i32, i32
  }
  func.func @transform_2(%arg0: i32) -> (i32, i32) {
    %c0_i32 = arith.constant 0 : i32
    %c0_i32_0 = arith.constant 0 : i32
    %c0_i32_1 = arith.constant 0 : i32
    return %c0_i32, %c0_i32_0 : i32, i32
  }
  func.func @transform_3(%arg0: i32) -> (i32, i32) {
    %c0_i32 = arith.constant 0 : i32
    %c0_i32_0 = arith.constant 0 : i32
    %c0_i32_1 = arith.constant 0 : i32
    return %c0_i32, %c0_i32_0 : i32, i32
  }
  func.func @transform_4(%arg0: i32) -> (i32, i32, i32) {
    %c0_i32 = arith.constant 0 : i32
    %c0_i32_0 = arith.constant 0 : i32
    %c0_i32_1 = arith.constant 0 : i32
    return %arg0, %c0_i32, %c0_i32_0 : i32, i32, i32
  }
}

</mosaic_0001>

<llo_original>
// kernel: tpu_custom_call.1
$region0: #{tpu_custom_call.1}
  #allocation0 [shape = 'u32[]', space=smem, size = 0x4, offset = 0x4, fixed_abs, tag = 'smem constant byte address 0x4 - core index']
  #allocation1 [shape = 'u32[144,128]{1,0:T(1,128)}', space=vmem, size = 0x12000, scoped, tag = 'internal scratch']
  %s0 = inlined_call_operand.vmem [shape: f32[2,288,4], index: 0, kind: input, shape index: {}]
  %s1 = inlined_call_operand.vmem [shape: f32[9,4,8], index: 1, kind: input, shape index: {}]
  %s2 = inlined_call_operand.vmem [shape: f32[1,8], index: 2, kind: input, shape index: {}]
  %s3 = inlined_call_operand.vmem [shape: f32[1,8], index: 3, kind: input, shape index: {}]
  %s4 = inlined_call_operand.vmem [shape: f32[2,256,8], index: 4, kind: output, shape index: {}]
  %s5 = sld [smem:[#allocation0]]
  $region49: #{tpu_custom_call.1} parent=0
    _
  %s7 = ssub.s32 1, %s5
  %s8 = scalar_select 0, %s7, %s5
  loop: start=0, step=1, limit=4
  $region2: #{tpu_custom_call.1} parent=0 // loop_pre_header
    _
  $region3: #{tpu_custom_call.1} parent=0 // loop_header
    %s10 = sphi 0, %s14
    %p11 = scmp.ge.s32.totalorder %s10, 4
    %s20 = sphi 0, %s22
    %s23 = sphi 0, %s20
    %s24 = sphi 0, %s23
    %s40 = sphi 0, %s24
    %s44 = sphi 0, %s44
    %s46 = sphi 0, %s44
    %s47 = sphi 0, %s46
    %s61 = sphi 0, %s47
    %s65 = sphi 0, %s65
    %s67 = sphi 0, %s65
    %s68 = sphi 0, %s67
    %s82 = sphi 0, %s68
    %s86 = sphi 0, %s86
    %s88 = sphi 0, %s86
    %s89 = sphi 0, %s88
    %s103 = sphi 0, %s89
    %s109 = sphi 0, %s111
    %s112 = sphi 0, %s109
    %s113 = sphi 0, %s112
    %s129 = sphi 0, %s113
  $region4: #{tpu_custom_call.1} parent=0 // loop_header_branch
    %13 = sbr.rel (%p11) target = $region8
  $region5: #{tpu_custom_call.1} parent=0 // loop_body
    %s15 = ssub.s32 %s10, 1
    %s16 = ssub.s32 %s10, 2
    %s17 = sadd.s32 %s10, 1
    %s18 = ssub.s32 %s10, %s17
    %p19 = scmp.eq.s32.totalorder %s18, 0
    %s21 = sadd.s32 %s20, 1
    %s22 = scalar_select %p19, %s20, %s21
    %p25 = pneg %p19
    %p26 = scmp.eq.s32.totalorder %s10, 1
    %p27 = por %p25, %p26
    %p28 = scmp.ne.s32.totalorder %s20, %s23
    %p29 = scmp.eq.s32.totalorder %s10, 0
    %p30 = por %p28, %p29
    %p31 = scmp.ne.s32.totalorder %s20, %s23
    %p32 = scmp.eq.s32.totalorder %s15, 1
    %p33 = por %p31, %p32
    %p34 = scmp.ne.s32.totalorder %s23, %s24
    %p35 = scmp.eq.s32.totalorder %s15, 0
    %p36 = por %p34, %p35
    %p37 = scmp.ne.s32.totalorder %s23, %s24
    %p38 = scmp.eq.s32.totalorder %s16, 1
    %p39 = por %p37, %p38
    %p41 = scmp.ne.s32.totalorder %s24, %s40
    %p42 = scmp.eq.s32.totalorder %s16, 0
    %p43 = por %p41, %p42
    %s45 = sadd.s32 %s44, 1
    %p48 = scmp.eq.s32.totalorder %s10, 1
    %p49 = scmp.ne.s32.totalorder %s44, %s46
    %p50 = scmp.eq.s32.totalorder %s10, 0
    %p51 = por %p49, %p50
    %p52 = scmp.ne.s32.totalorder %s44, %s46
    %p53 = scmp.eq.s32.totalorder %s15, 1
    %p54 = por %p52, %p53
    %p55 = scmp.ne.s32.totalorder %s46, %s47
    %p56 = scmp.eq.s32.totalorder %s15, 0
    %p57 = por %p55, %p56
    %p58 = scmp.ne.s32.totalorder %s46, %s47
    %p59 = scmp.eq.s32.totalorder %s16, 1
    %p60 = por %p58, %p59
    %p62 = scmp.ne.s32.totalorder %s47, %s61
    %p63 = scmp.eq.s32.totalorder %s16, 0
    %p64 = por %p62, %p63
    %s66 = sadd.s32 %s65, 1
    %p69 = scmp.eq.s32.totalorder %s10, 1
    %p70 = scmp.ne.s32.totalorder %s65, %s67
    %p71 = scmp.eq.s32.totalorder %s10, 0
    %p72 = por %p70, %p71
    %p73 = scmp.ne.s32.totalorder %s65, %s67
    %p74 = scmp.eq.s32.totalorder %s15, 1
    %p75 = por %p73, %p74
    %p76 = scmp.ne.s32.totalorder %s67, %s68
    %p77 = scmp.eq.s32.totalorder %s15, 0
    %p78 = por %p76, %p77
    %p79 = scmp.ne.s32.totalorder %s67, %s68
    %p80 = scmp.eq.s32.totalorder %s16, 1
    %p81 = por %p79, %p80
    %p83 = scmp.ne.s32.totalorder %s68, %s82
    %p84 = scmp.eq.s32.totalorder %s16, 0
    %p85 = por %p83, %p84
    %s87 = sadd.s32 %s86, 1
    %p90 = scmp.eq.s32.totalorder %s10, 1
    %p91 = scmp.ne.s32.totalorder %s86, %s88
    %p92 = scmp.eq.s32.totalorder %s10, 0
    %p93 = por %p91, %p92
    %p94 = scmp.ne.s32.totalorder %s86, %s88
    %p95 = scmp.eq.s32.totalorder %s15, 1
    %p96 = por %p94, %p95
    %p97 = scmp.ne.s32.totalorder %s88, %s89
    %p98 = scmp.eq.s32.totalorder %s15, 0
    %p99 = por %p97, %p98
    %p100 = scmp.ne.s32.totalorder %s88, %s89
    %p101 = scmp.eq.s32.totalorder %s16, 1
    %p102 = por %p100, %p101
    %p104 = scmp.ne.s32.totalorder %s89, %s103
    %p105 = scmp.eq.s32.totalorder %s16, 0
    %p106 = por %p104, %p105
    %s107 = ssub.s32 %s10, %s17
    %p108 = scmp.eq.s32.totalorder %s107, 0
    %s110 = sadd.s32 %s109, 1
    %s111 = scalar_select %p108, %s109, %s110
    %p114 = pneg %p108
    %p115 = scmp.eq.s32.totalorder %s10, 1
    %p116 = por %p114, %p115
    %p117 = scmp.ne.s32.totalorder %s109, %s112
    %p118 = scmp.eq.s32.totalorder %s10, 0
    %p119 = por %p117, %p118
    %p120 = scmp.ne.s32.totalorder %s109, %s112
    %p121 = scmp.eq.s32.totalorder %s15, 1
    %p122 = por %p120, %p121
    %p123 = scmp.ne.s32.totalorder %s112, %s113
    %p124 = scmp.eq.s32.totalorder %s15, 0
    %p125 = por %p123, %p124
    %p126 = scmp.ne.s32.totalorder %s112, %s113
    %p127 = scmp.eq.s32.totalorder %s16, 1
    %p128 = por %p126, %p127
    %p130 = scmp.ne.s32.totalorder %s113, %s129
    %p131 = scmp.eq.s32.totalorder %s16, 0
    %p132 = por %p130, %p131
    %p133 = scmp.le.s32.totalorder 1, %s10
    %p134 = scmp.lt.s32.totalorder %s10, 3
    %p135 = pnand %p133, %p134
    %p136 = pneg %p135
    // Predicated region
    $region9: #{tpu_custom_call.1} parent=5 // pred_check
      _
    $region10: #{tpu_custom_call.1} parent=5 // pred_check_branch
      %138 = sbr.rel (%p135) target = $region12
    $region11: #{tpu_custom_call.1} parent=5 // pred_region
      %s139 = ssub.s32 %s10, 1
      // Predicated region
      $region13: #{tpu_custom_call.1} parent=11 // pred_check
        %p140 = pneg %p57
      $region14: #{tpu_custom_call.1} parent=11 // pred_check_branch
        %142 = sbr.rel (%p140) target = $region16
      $region15: #{tpu_custom_call.1} parent=11 // pred_region
        _
      $region16: #{tpu_custom_call.1} parent=11 // pred_fallthru
        _
      // Predicated region
      $region17: #{tpu_custom_call.1} parent=11 // pred_check
        %p143 = pneg %p78
      $region18: #{tpu_custom_call.1} parent=11 // pred_check_branch
        %145 = sbr.rel (%p143) target = $region20
      $region19: #{tpu_custom_call.1} parent=11 // pred_region
        _
      $region20: #{tpu_custom_call.1} parent=11 // pred_fallthru
        _
      // Predicated region
      $region21: #{tpu_custom_call.1} parent=11 // pred_check
        %p146 = pneg %p99
      $region22: #{tpu_custom_call.1} parent=11 // pred_check_branch
        %148 = sbr.rel (%p146) target = $region24
      $region23: #{tpu_custom_call.1} parent=11 // pred_region
        _
      $region24: #{tpu_custom_call.1} parent=11 // pred_fallthru
        _
    $region12: #{tpu_custom_call.1} parent=5 // pred_fallthru
      _
    %p149 = scmp.lt.s32.totalorder %s10, 2
    // Predicated region
    $region25: #{tpu_custom_call.1} parent=5 // pred_check
      %p150 = pneg %p149
    $region26: #{tpu_custom_call.1} parent=5 // pred_check_branch
      %152 = sbr.rel (%p150) target = $region28
    $region27: #{tpu_custom_call.1} parent=5 // pred_region
      // Predicated region
      $region29: #{tpu_custom_call.1} parent=27 // pred_check
        %p153 = pneg %p30
      $region30: #{tpu_custom_call.1} parent=27 // pred_check_branch
        %155 = sbr.rel (%p153) target = $region32
      $region31: #{tpu_custom_call.1} parent=27 // pred_region
        %p156 = scmp.lt.s32.totalorder %s10, 1
        %s157 = scalar_select %p156, %s10, 1
        %s158 = smul.addr %s157, 36
        %s159 = smul.addr %s158, 8
        %s160 = scalar_lea.vmem %s0, %s159
      $region32: #{tpu_custom_call.1} parent=27 // pred_fallthru
        _
    $region28: #{tpu_custom_call.1} parent=5 // pred_fallthru
      _
    %p161 = scmp.le.s32.totalorder 1, %s10
    %p162 = scmp.lt.s32.totalorder %s10, 3
    %p163 = pnand %p161, %p162
    %p164 = pneg %p163
    // Predicated region
    $region33: #{tpu_custom_call.1} parent=5 // pred_check
      _
    $region34: #{tpu_custom_call.1} parent=5 // pred_check_branch
      %166 = sbr.rel (%p163) target = $region36
    $region35: #{tpu_custom_call.1} parent=5 // pred_region
      %s167 = ssub.s32 %s10, 1
      %p168 = scmp.lt.s32.totalorder %s15, 1
      %s169 = scalar_select %p168, %s15, 1
      %s170 = smul.addr %s169, 36
      %s171 = smul.addr %s170, 8
      %s172 = scalar_lea.vmem %s0, %s171
      %p173 = pneg %p36
      %p174 = pneg %p33
      %p175 = pneg %p57
      %p176 = pneg %p54
      %p177 = pneg %p78
      %p178 = pneg %p75
      %p179 = pneg %p99
      %p180 = pneg %p96
      %p181 = pneg %p125
      %p182 = pneg %p122
      %p183 = scmp.lt.s32.totalorder %s15, 1
      %s184 = scalar_select %p183, %s15, 1
      %s185 = smul.addr %s184, 32
      %s186 = smul.addr %s185, 8
      %s187 = scalar_lea.vmem %s4, %s186
      %p188 = scmp.lt.s32.totalorder %s15, 1
      %s189 = scalar_select %p188, %s15, 1
      %s190 = smul.addr %s189, 36
      %s191 = smul.addr %s190, 8
      %s192 = scalar_lea.vmem %s0, %s191
      %p193 = scmp.lt.s32.totalorder %s15, 1
      %s194 = scalar_select %p193, %s15, 1
      %s195 = smul.addr %s194, 32
      %s196 = smul.addr %s195, 8
      %s197 = scalar_lea.vmem %s4, %s196
      %v198 = vld [vmem:[%s192] sm:$0xff]
      %v199 = vld [vmem:[%s192 + $0x8] sm:$0xff]
      %v200 = vld [vmem:[%s192 + $0x10] sm:$0xff]
      %v201 = vld [vmem:[%s192 + $0x18] sm:$0xff]
      %v202 = vld [vmem:[%s192 + $0x20] sm:$0xff]
      %v203 = vld [vmem:[%s192 + $0x28] sm:$0xff]
      %v204 = vld [vmem:[%s192 + $0x30] sm:$0xff]
      %v205 = vld [vmem:[%s192 + $0x38] sm:$0xff]
      %v206 = vld [vmem:[%s192 + $0x40] sm:$0xff]
      %v207 = vld [vmem:[%s192 + $0x48] sm:$0xff]
      %v208 = vld [vmem:[%s192 + $0x50] sm:$0xff]
      %v209 = vld [vmem:[%s192 + $0x58] sm:$0xff]
      %v210 = vld [vmem:[%s192 + $0x60] sm:$0xff]
      %v211 = vld [vmem:[%s192 + $0x68] sm:$0xff]
      %v212 = vld [vmem:[%s192 + $0x70] sm:$0xff]
      %v213 = vld [vmem:[%s192 + $0x78] sm:$0xff]
      %v214 = vld [vmem:[%s192 + $0x80] sm:$0xff]
      %v215 = vld [vmem:[%s192 + $0x88] sm:$0xff]
      %v216 = vld [vmem:[%s192 + $0x90] sm:$0xff]
      %v217 = vld [vmem:[%s192 + $0x98] sm:$0xff]
      %v218 = vld [vmem:[%s192 + $0xa0] sm:$0xff]
      %v219 = vld [vmem:[%s192 + $0xa8] sm:$0xff]
      %v220 = vld [vmem:[%s192 + $0xb0] sm:$0xff]
      %v221 = vld [vmem:[%s192 + $0xb8] sm:$0xff]
      %v222 = vld [vmem:[%s192 + $0xc0] sm:$0xff]
      %v223 = vld [vmem:[%s192 + $0xc8] sm:$0xff]
      %v224 = vld [vmem:[%s192 + $0xd0] sm:$0xff]
      %v225 = vld [vmem:[%s192 + $0xd8] sm:$0xff]
      %v226 = vld [vmem:[%s192 + $0xe0] sm:$0xff]
      %v227 = vld [vmem:[%s192 + $0xe8] sm:$0xff]
      %v228 = vld [vmem:[%s192 + $0xf0] sm:$0xff]
      %v229 = vld [vmem:[%s192 + $0xf8] sm:$0xff]
      %v230 = vld [vmem:[%s192 + $0x100] sm:$0xff]
      %v231 = vld [vmem:[%s192 + $0x108] sm:$0xff]
      %v232 = vld [vmem:[%s192 + $0x110] sm:$0xff]
      %v233 = vld [vmem:[%s192 + $0x118] sm:$0xff]
      %v234 = vlaneseq
      %v235 = vshrl.u32 %v234, 7
      %v236 = vadd.s32 %v235, 8
      %v237 = vadd.s32 %v235, 16
      %v238 = vadd.s32 %v235, 24
      %v239 = vadd.s32 %v235, 32
      %v240 = vadd.s32 %v235, 40
      %v241 = vadd.s32 %v235, 48
      %v242 = vadd.s32 %v235, 56
      %v243 = vadd.s32 %v235, 64
      %v244 = vadd.s32 %v235, 72
      %v245 = vadd.s32 %v235, 80
      %v246 = vadd.s32 %v235, 88
      %v247 = vadd.s32 %v235, 96
      %v248 = vadd.s32 %v235, 104
      %v249 = vadd.s32 %v235, 112
      %v250 = vadd.s32 %v235, 120
      %v251 = vadd.s32 %v235, 128
      %v252 = vadd.s32 %v235, 136
      %v253 = vadd.s32 %v235, 144
      %v254 = vadd.s32 %v235, 152
      %v255 = vadd.s32 %v235, 160
      %v256 = vadd.s32 %v235, 168
      %v257 = vadd.s32 %v235, 176
      %v258 = vadd.s32 %v235, 184
      %v259 = vadd.s32 %v235, 192
      %v260 = vadd.s32 %v235, 200
      %v261 = vadd.s32 %v235, 208
      %v262 = vadd.s32 %v235, 216
      %v263 = vadd.s32 %v235, 224
      %v264 = vadd.s32 %v235, 232
      %v265 = vadd.s32 %v235, 240
      %v266 = vadd.s32 %v235, 248
      %vm267 = vcmp.lt.s32.totalorder %v235, 0
      %v268 = vsub.s32 0, %v235
      %v269 = vsel %vm267, %v268, %v235
      %v270 = vshrl.u32 %v269, 4
      %v271 = vand.u32 %v269, 15
      %v272 = vsub.s32 0, %v271
      %v273 = vsel %vm267, %v272, %v271
      %vm274 = vcmp.lt.s32.totalorder %v236, 0
      %v275 = vsub.s32 0, %v236
      %v276 = vsel %vm274, %v275, %v236
      %v277 = vshrl.u32 %v276, 4
      %v278 = vand.u32 %v276, 15
      %v279 = vsub.s32 0, %v278
      %v280 = vsel %vm274, %v279, %v278
      %vm281 = vcmp.lt.s32.totalorder %v237, 0
      %v282 = vsub.s32 0, %v237
      %v283 = vsel %vm281, %v282, %v237
      %v284 = vshrl.u32 %v283, 4
      %v285 = vand.u32 %v283, 15
      %v286 = vsub.s32 0, %v285
      %v287 = vsel %vm281, %v286, %v285
      %vm288 = vcmp.lt.s32.totalorder %v238, 0
      %v289 = vsub.s32 0, %v238
      %v290 = vsel %vm288, %v289, %v238
      %v291 = vshrl.u32 %v290, 4
      %v292 = vand.u32 %v290, 15
      %v293 = vsub.s32 0, %v292
      %v294 = vsel %vm288, %v293, %v292
      %vm295 = vcmp.lt.s32.totalorder %v239, 0
      %v296 = vsub.s32 0, %v239
      %v297 = vsel %vm295, %v296, %v239
      %v298 = vshrl.u32 %v297, 4
      %v299 = vand.u32 %v297, 15
      %v300 = vsub.s32 0, %v299
      %v301 = vsel %vm295, %v300, %v299
      %vm302 = vcmp.lt.s32.totalorder %v240, 0
      %v303 = vsub.s32 0, %v240
      %v304 = vsel %vm302, %v303, %v240
      %v305 = vshrl.u32 %v304, 4
      %v306 = vand.u32 %v304, 15
      %v307 = vsub.s32 0, %v306
      %v308 = vsel %vm302, %v307, %v306
      %vm309 = vcmp.lt.s32.totalorder %v241, 0
      %v310 = vsub.s32 0, %v241
      %v311 = vsel %vm309, %v310, %v241
      %v312 = vshrl.u32 %v311, 4
      %v313 = vand.u32 %v311, 15
      %v314 = vsub.s32 0, %v313
      %v315 = vsel %vm309, %v314, %v313
      %vm316 = vcmp.lt.s32.totalorder %v242, 0
      %v317 = vsub.s32 0, %v242
      %v318 = vsel %vm316, %v317, %v242
      %v319 = vshrl.u32 %v318, 4
      %v320 = vand.u32 %v318, 15
      %v321 = vsub.s32 0, %v320
      %v322 = vsel %vm316, %v321, %v320
      %vm323 = vcmp.lt.s32.totalorder %v243, 0
      %v324 = vsub.s32 0, %v243
      %v325 = vsel %vm323, %v324, %v243
      %v326 = vshrl.u32 %v325, 4
      %v327 = vand.u32 %v325, 15
      %v328 = vsub.s32 0, %v327
      %v329 = vsel %vm323, %v328, %v327
      %vm330 = vcmp.lt.s32.totalorder %v244, 0
      %v331 = vsub.s32 0, %v244
      %v332 = vsel %vm330, %v331, %v244
      %v333 = vshrl.u32 %v332, 4
      %v334 = vand.u32 %v332, 15
      %v335 = vsub.s32 0, %v334
      %v336 = vsel %vm330, %v335, %v334
      %vm337 = vcmp.lt.s32.totalorder %v245, 0
      %v338 = vsub.s32 0, %v245
      %v339 = vsel %vm337, %v338, %v245
      %v340 = vshrl.u32 %v339, 4
      %v341 = vand.u32 %v339, 15
      %v342 = vsub.s32 0, %v341
      %v343 = vsel %vm337, %v342, %v341
      %vm344 = vcmp.lt.s32.totalorder %v246, 0
      %v345 = vsub.s32 0, %v246
      %v346 = vsel %vm344, %v345, %v246
      %v347 = vshrl.u32 %v346, 4
      %v348 = vand.u32 %v346, 15
      %v349 = vsub.s32 0, %v348
      %v350 = vsel %vm344, %v349, %v348
      %vm351 = vcmp.lt.s32.totalorder %v247, 0
      %v352 = vsub.s32 0, %v247
      %v353 = vsel %vm351, %v352, %v247
      %v354 = vshrl.u32 %v353, 4
      %v355 = vand.u32 %v353, 15
      %v356 = vsub.s32 0, %v355
      %v357 = vsel %vm351, %v356, %v355
      %vm358 = vcmp.lt.s32.totalorder %v248, 0
      %v359 = vsub.s32 0, %v248
      %v360 = vsel %vm358, %v359, %v248
      %v361 = vshrl.u32 %v360, 4
      %v362 = vand.u32 %v360, 15
      %v363 = vsub.s32 0, %v362
      %v364 = vsel %vm358, %v363, %v362
      %vm365 = vcmp.lt.s32.totalorder %v249, 0
      %v366 = vsub.s32 0, %v249
      %v367 = vsel %vm365, %v366, %v249
      %v368 = vshrl.u32 %v367, 4
      %v369 = vand.u32 %v367, 15
      %v370 = vsub.s32 0, %v369
      %v371 = vsel %vm365, %v370, %v369
      %vm372 = vcmp.lt.s32.totalorder %v250, 0
      %v373 = vsub.s32 0, %v250
      %v374 = vsel %vm372, %v373, %v250
      %v375 = vshrl.u32 %v374, 4
      %v376 = vand.u32 %v374, 15
      %v377 = vsub.s32 0, %v376
      %v378 = vsel %vm372, %v377, %v376
      %vm379 = vcmp.lt.s32.totalorder %v251, 0
      %v380 = vsub.s32 0, %v251
      %v381 = vsel %vm379, %v380, %v251
      %v382 = vshrl.u32 %v381, 4
      %v383 = vand.u32 %v381, 15
      %v384 = vsub.s32 0, %v383
      %v385 = vsel %vm379, %v384, %v383
      %vm386 = vcmp.lt.s32.totalorder %v252, 0
      %v387 = vsub.s32 0, %v252
      %v388 = vsel %vm386, %v387, %v252
      %v389 = vshrl.u32 %v388, 4
      %v390 = vand.u32 %v388, 15
      %v391 = vsub.s32 0, %v390
      %v392 = vsel %vm386, %v391, %v390
      %vm393 = vcmp.lt.s32.totalorder %v253, 0
      %v394 = vsub.s32 0, %v253
      %v395 = vsel %vm393, %v394, %v253
      %v396 = vshrl.u32 %v395, 4
      %v397 = vand.u32 %v395, 15
      %v398 = vsub.s32 0, %v397
      %v399 = vsel %vm393, %v398, %v397
      %vm400 = vcmp.lt.s32.totalorder %v254, 0
      %v401 = vsub.s32 0, %v254
      %v402 = vsel %vm400, %v401, %v254
      %v403 = vshrl.u32 %v402, 4
      %v404 = vand.u32 %v402, 15
      %v405 = vsub.s32 0, %v404
      %v406 = vsel %vm400, %v405, %v404
      %vm407 = vcmp.lt.s32.totalorder %v255, 0
      %v408 = vsub.s32 0, %v255
      %v409 = vsel %vm407, %v408, %v255
      %v410 = vshrl.u32 %v409, 4
      %v411 = vand.u32 %v409, 15
      %v412 = vsub.s32 0, %v411
      %v413 = vsel %vm407, %v412, %v411
      %vm414 = vcmp.lt.s32.totalorder %v256, 0
      %v415 = vsub.s32 0, %v256
      %v416 = vsel %vm414, %v415, %v256
      %v417 = vshrl.u32 %v416, 4
      %v418 = vand.u32 %v416, 15
      %v419 = vsub.s32 0, %v418
      %v420 = vsel %vm414, %v419, %v418
      %vm421 = vcmp.lt.s32.totalorder %v257, 0
      %v422 = vsub.s32 0, %v257
      %v423 = vsel %vm421, %v422, %v257
      %v424 = vshrl.u32 %v423, 4
      %v425 = vand.u32 %v423, 15
      %v426 = vsub.s32 0, %v425
      %v427 = vsel %vm421, %v426, %v425
      %vm428 = vcmp.lt.s32.totalorder %v258, 0
      %v429 = vsub.s32 0, %v258
      %v430 = vsel %vm428, %v429, %v258
      %v431 = vshrl.u32 %v430, 4
      %v432 = vand.u32 %v430, 15
      %v433 = vsub.s32 0, %v432
      %v434 = vsel %vm428, %v433, %v432
      %vm435 = vcmp.lt.s32.totalorder %v259, 0
      %v436 = vsub.s32 0, %v259
      %v437 = vsel %vm435, %v436, %v259
      %v438 = vshrl.u32 %v437, 4
      %v439 = vand.u32 %v437, 15
      %v440 = vsub.s32 0, %v439
      %v441 = vsel %vm435, %v440, %v439
      %vm442 = vcmp.lt.s32.totalorder %v260, 0
      %v443 = vsub.s32 0, %v260
      %v444 = vsel %vm442, %v443, %v260
      %v445 = vshrl.u32 %v444, 4
      %v446 = vand.u32 %v444, 15
      %v447 = vsub.s32 0, %v446
      %v448 = vsel %vm442, %v447, %v446
      %vm449 = vcmp.lt.s32.totalorder %v261, 0
      %v450 = vsub.s32 0, %v261
      %v451 = vsel %vm449, %v450, %v261
      %v452 = vshrl.u32 %v451, 4
      %v453 = vand.u32 %v451, 15
      %v454 = vsub.s32 0, %v453
      %v455 = vsel %vm449, %v454, %v453
      %vm456 = vcmp.lt.s32.totalorder %v262, 0
      %v457 = vsub.s32 0, %v262
      %v458 = vsel %vm456, %v457, %v262
      %v459 = vshrl.u32 %v458, 4
      %v460 = vand.u32 %v458, 15
      %v461 = vsub.s32 0, %v460
      %v462 = vsel %vm456, %v461, %v460
      %vm463 = vcmp.lt.s32.totalorder %v263, 0
      %v464 = vsub.s32 0, %v263
      %v465 = vsel %vm463, %v464, %v263
      %v466 = vshrl.u32 %v465, 4
      %v467 = vand.u32 %v465, 15
      %v468 = vsub.s32 0, %v467
      %v469 = vsel %vm463, %v468, %v467
      %vm470 = vcmp.lt.s32.totalorder %v264, 0
      %v471 = vsub.s32 0, %v264
      %v472 = vsel %vm470, %v471, %v264
      %v473 = vshrl.u32 %v472, 4
      %v474 = vand.u32 %v472, 15
      %v475 = vsub.s32 0, %v474
      %v476 = vsel %vm470, %v475, %v474
      %vm477 = vcmp.lt.s32.totalorder %v265, 0
      %v478 = vsub.s32 0, %v265
      %v479 = vsel %vm477, %v478, %v265
      %v480 = vshrl.u32 %v479, 4
      %v481 = vand.u32 %v479, 15
      %v482 = vsub.s32 0, %v481
      %v483 = vsel %vm477, %v482, %v481
      %vm484 = vcmp.lt.s32.totalorder %v266, 0
      %v485 = vsub.s32 0, %v266
      %v486 = vsel %vm484, %v485, %v266
      %v487 = vshrl.u32 %v486, 4
      %v488 = vand.u32 %v486, 15
      %v489 = vsub.s32 0, %v488
      %v490 = vsel %vm484, %v489, %v488
      %vm491 = vcmp.ne.s32.totalorder %v273, 0
      %vm492 = vcmp.ne.s32.totalorder %v280, 0
      %vm493 = vcmp.ne.s32.totalorder %v287, 0
      %vm494 = vcmp.ne.s32.totalorder %v294, 0
      %vm495 = vcmp.ne.s32.totalorder %v301, 0
      %vm496 = vcmp.ne.s32.totalorder %v308, 0
      %vm497 = vcmp.ne.s32.totalorder %v315, 0
      %vm498 = vcmp.ne.s32.totalorder %v322, 0
      %vm499 = vcmp.ne.s32.totalorder %v329, 0
      %vm500 = vcmp.ne.s32.totalorder %v336, 0
      %vm501 = vcmp.ne.s32.totalorder %v343, 0
      %vm502 = vcmp.ne.s32.totalorder %v350, 0
      %vm503 = vcmp.ne.s32.totalorder %v357, 0
      %vm504 = vcmp.ne.s32.totalorder %v364, 0
      %vm505 = vcmp.ne.s32.totalorder %v371, 0
      %vm506 = vcmp.ne.s32.totalorder %v378, 0
      %vm507 = vcmp.ne.s32.totalorder %v385, 0
      %vm508 = vcmp.ne.s32.totalorder %v392, 0
      %vm509 = vcmp.ne.s32.totalorder %v399, 0
      %vm510 = vcmp.ne.s32.totalorder %v406, 0
      %vm511 = vcmp.ne.s32.totalorder %v413, 0
      %vm512 = vcmp.ne.s32.totalorder %v420, 0
      %vm513 = vcmp.ne.s32.totalorder %v427, 0
      %vm514 = vcmp.ne.s32.totalorder %v434, 0
      %vm515 = vcmp.ne.s32.totalorder %v441, 0
      %vm516 = vcmp.ne.s32.totalorder %v448, 0
      %vm517 = vcmp.ne.s32.totalorder %v455, 0
      %vm518 = vcmp.ne.s32.totalorder %v462, 0
      %vm519 = vcmp.ne.s32.totalorder %v469, 0
      %vm520 = vcmp.ne.s32.totalorder %v476, 0
      %vm521 = vcmp.ne.s32.totalorder %v483, 0
      %vm522 = vcmp.ne.s32.totalorder %v490, 0
      %vm523 = vcmp.lt.s32.totalorder %v273, 0
      %vm524 = vcmp.lt.s32.totalorder %v280, 0
      %vm525 = vcmp.lt.s32.totalorder %v287, 0
      %vm526 = vcmp.lt.s32.totalorder %v294, 0
      %vm527 = vcmp.lt.s32.totalorder %v301, 0
      %vm528 = vcmp.lt.s32.totalorder %v308, 0
      %vm529 = vcmp.lt.s32.totalorder %v315, 0
      %vm530 = vcmp.lt.s32.totalorder %v322, 0
      %vm531 = vcmp.lt.s32.totalorder %v329, 0
      %vm532 = vcmp.lt.s32.totalorder %v336, 0
      %vm533 = vcmp.lt.s32.totalorder %v343, 0
      %vm534 = vcmp.lt.s32.totalorder %v350, 0
      %vm535 = vcmp.lt.s32.totalorder %v357, 0
      %vm536 = vcmp.lt.s32.totalorder %v364, 0
      %vm537 = vcmp.lt.s32.totalorder %v371, 0
      %vm538 = vcmp.lt.s32.totalorder %v378, 0
      %vm539 = vcmp.lt.s32.totalorder %v385, 0
      %vm540 = vcmp.lt.s32.totalorder %v392, 0
      %vm541 = vcmp.lt.s32.totalorder %v399, 0
      %vm542 = vcmp.lt.s32.totalorder %v406, 0
      %vm543 = vcmp.lt.s32.totalorder %v413, 0
      %vm544 = vcmp.lt.s32.totalorder %v420, 0
      %vm545 = vcmp.lt.s32.totalorder %v427, 0
      %vm546 = vcmp.lt.s32.totalorder %v434, 0
      %vm547 = vcmp.lt.s32.totalorder %v441, 0
      %vm548 = vcmp.lt.s32.totalorder %v448, 0
      %vm549 = vcmp.lt.s32.totalorder %v455, 0
      %vm550 = vcmp.lt.s32.totalorder %v462, 0
      %vm551 = vcmp.lt.s32.totalorder %v469, 0
      %vm552 = vcmp.lt.s32.totalorder %v476, 0
      %vm553 = vcmp.lt.s32.totalorder %v483, 0
      %vm554 = vcmp.lt.s32.totalorder %v490, 0
      %vm555 = vmand %vm523, %vm491
      %vm556 = vmand %vm524, %vm492
      %vm557 = vmand %vm525, %vm493
      %vm558 = vmand %vm526, %vm494
      %vm559 = vmand %vm527, %vm495
      %vm560 = vmand %vm528, %vm496
      %vm561 = vmand %vm529, %vm497
      %vm562 = vmand %vm530, %vm498
      %vm563 = vmand %vm531, %vm499
      %vm564 = vmand %vm532, %vm500
      %vm565 = vmand %vm533, %vm501
      %vm566 = vmand %vm534, %vm502
      %vm567 = vmand %vm535, %vm503
      %vm568 = vmand %vm536, %vm504
      %vm569 = vmand %vm537, %vm505
      %vm570 = vmand %vm538, %vm506
      %vm571 = vmand %vm539, %vm507
      %vm572 = vmand %vm540, %vm508
      %vm573 = vmand %vm541, %vm509
      %vm574 = vmand %vm542, %vm510
      %vm575 = vmand %vm543, %vm511
      %vm576 = vmand %vm544, %vm512
      %vm577 = vmand %vm545, %vm513
      %vm578 = vmand %vm546, %vm514
      %vm579 = vmand %vm547, %vm515
      %vm580 = vmand %vm548, %vm516
      %vm581 = vmand %vm549, %vm517
      %vm582 = vmand %vm550, %vm518
      %vm583 = vmand %vm551, %vm519
      %vm584 = vmand %vm552, %vm520
      %vm585 = vmand %vm553, %vm521
      %vm586 = vmand %vm554, %vm522
      %v587 = vadd.s32 %v273, 16
      %v588 = vadd.s32 %v280, 16
      %v589 = vadd.s32 %v287, 16
      %v590 = vadd.s32 %v294, 16
      %v591 = vadd.s32 %v301, 16
      %v592 = vadd.s32 %v308, 16
      %v593 = vadd.s32 %v315, 16
      %v594 = vadd.s32 %v322, 16
      %v595 = vadd.s32 %v329, 16
      %v596 = vadd.s32 %v336, 16
      %v597 = vadd.s32 %v343, 16
      %v598 = vadd.s32 %v350, 16
      %v599 = vadd.s32 %v357, 16
      %v600 = vadd.s32 %v364, 16
      %v601 = vadd.s32 %v371, 16
      %v602 = vadd.s32 %v378, 16
      %v603 = vadd.s32 %v385, 16
      %v604 = vadd.s32 %v392, 16
      %v605 = vadd.s32 %v399, 16
      %v606 = vadd.s32 %v406, 16
      %v607 = vadd.s32 %v413, 16
      %v608 = vadd.s32 %v420, 16
      %v609 = vadd.s32 %v427, 16
      %v610 = vadd.s32 %v434, 16
      %v611 = vadd.s32 %v441, 16
      %v612 = vadd.s32 %v448, 16
      %v613 = vadd.s32 %v455, 16
      %v614 = vadd.s32 %v462, 16
      %v615 = vadd.s32 %v469, 16
      %v616 = vadd.s32 %v476, 16
      %v617 = vadd.s32 %v483, 16
      %v618 = vadd.s32 %v490, 16
      %v619 = vsel %vm555, %v587, %v273
      %v620 = vsel %vm556, %v588, %v280
      %v621 = vsel %vm557, %v589, %v287
      %v622 = vsel %vm558, %v590, %v294
      %v623 = vsel %vm559, %v591, %v301
      %v624 = vsel %vm560, %v592, %v308
      %v625 = vsel %vm561, %v593, %v315
      %v626 = vsel %vm562, %v594, %v322
      %v627 = vsel %vm563, %v595, %v329
      %v628 = vsel %vm564, %v596, %v336
      %v629 = vsel %vm565, %v597, %v343
      %v630 = vsel %vm566, %v598, %v350
      %v631 = vsel %vm567, %v599, %v357
      %v632 = vsel %vm568, %v600, %v364
      %v633 = vsel %vm569, %v601, %v371
      %v634 = vsel %vm570, %v602, %v378
      %v635 = vsel %vm571, %v603, %v385
      %v636 = vsel %vm572, %v604, %v392
      %v637 = vsel %vm573, %v605, %v399
      %v638 = vsel %vm574, %v606, %v406
      %v639 = vsel %vm575, %v607, %v413
      %v640 = vsel %vm576, %v608, %v420
      %v641 = vsel %vm577, %v609, %v427
      %v642 = vsel %vm578, %v610, %v434
      %v643 = vsel %vm579, %v611, %v441
      %v644 = vsel %vm580, %v612, %v448
      %v645 = vsel %vm581, %v613, %v455
      %v646 = vsel %vm582, %v614, %v462
      %v647 = vsel %vm583, %v615, %v469
      %v648 = vsel %vm584, %v616, %v476
      %v649 = vsel %vm585, %v617, %v483
      %v650 = vsel %vm586, %v618, %v490
      %vm651 = vcmp.ge.s32.totalorder %v619, 1
      %vm652 = vcmp.ge.s32.totalorder %v620, 1
      %vm653 = vcmp.ge.s32.totalorder %v621, 1
      %vm654 = vcmp.ge.s32.totalorder %v622, 1
      %vm655 = vcmp.ge.s32.totalorder %v623, 1
      %vm656 = vcmp.ge.s32.totalorder %v624, 1
      %vm657 = vcmp.ge.s32.totalorder %v625, 1
      %vm658 = vcmp.ge.s32.totalorder %v626, 1
      %vm659 = vcmp.ge.s32.totalorder %v627, 1
      %vm660 = vcmp.ge.s32.totalorder %v628, 1
      %vm661 = vcmp.ge.s32.totalorder %v629, 1
      %vm662 = vcmp.ge.s32.totalorder %v630, 1
      %vm663 = vcmp.ge.s32.totalorder %v631, 1
      %vm664 = vcmp.ge.s32.totalorder %v632, 1
      %vm665 = vcmp.ge.s32.totalorder %v633, 1
      %vm666 = vcmp.ge.s32.totalorder %v634, 1
      %vm667 = vcmp.ge.s32.totalorder %v635, 1
      %vm668 = vcmp.ge.s32.totalorder %v636, 1
      %vm669 = vcmp.ge.s32.totalorder %v637, 1
      %vm670 = vcmp.ge.s32.totalorder %v638, 1
      %vm671 = vcmp.ge.s32.totalorder %v639, 1
      %vm672 = vcmp.ge.s32.totalorder %v640, 1
      %vm673 = vcmp.ge.s32.totalorder %v641, 1
      %vm674 = vcmp.ge.s32.totalorder %v642, 1
      %vm675 = vcmp.ge.s32.totalorder %v643, 1
      %vm676 = vcmp.ge.s32.totalorder %v644, 1
      %vm677 = vcmp.ge.s32.totalorder %v645, 1
      %vm678 = vcmp.ge.s32.totalorder %v646, 1
      %vm679 = vcmp.ge.s32.totalorder %v647, 1
      %vm680 = vcmp.ge.s32.totalorder %v648, 1
      %vm681 = vcmp.ge.s32.totalorder %v649, 1
      %vm682 = vcmp.ge.s32.totalorder %v650, 1
      %vm683 = vcmp.le.s32.totalorder %v619, 14
      %vm684 = vcmp.le.s32.totalorder %v620, 14
      %vm685 = vcmp.le.s32.totalorder %v621, 14
      %vm686 = vcmp.le.s32.totalorder %v622, 14
      %vm687 = vcmp.le.s32.totalorder %v623, 14
      %vm688 = vcmp.le.s32.totalorder %v624, 14
      %vm689 = vcmp.le.s32.totalorder %v625, 14
      %vm690 = vcmp.le.s32.totalorder %v626, 14
      %vm691 = vcmp.le.s32.totalorder %v627, 14
      %vm692 = vcmp.le.s32.totalorder %v628, 14
      %vm693 = vcmp.le.s32.totalorder %v629, 14
      %vm694 = vcmp.le.s32.totalorder %v630, 14
      %vm695 = vcmp.le.s32.totalorder %v631, 14
      %vm696 = vcmp.le.s32.totalorder %v632, 14
      %vm697 = vcmp.le.s32.totalorder %v633, 14
      %vm698 = vcmp.le.s32.totalorder %v634, 14
      %vm699 = vcmp.le.s32.totalorder %v635, 14
      %vm700 = vcmp.le.s32.totalorder %v636, 14
      %vm701 = vcmp.le.s32.totalorder %v637, 14
      %vm702 = vcmp.le.s32.totalorder %v638, 14
      %vm703 = vcmp.le.s32.totalorder %v639, 14
      %vm704 = vcmp.le.s32.totalorder %v640, 14
      %vm705 = vcmp.le.s32.totalorder %v641, 14
      %vm706 = vcmp.le.s32.totalorder %v642, 14
      %vm707 = vcmp.le.s32.totalorder %v643, 14
      %vm708 = vcmp.le.s32.totalorder %v644, 14
      %vm709 = vcmp.le.s32.totalorder %v645, 14
      %vm710 = vcmp.le.s32.totalorder %v646, 14
      %vm711 = vcmp.le.s32.totalorder %v647, 14
      %vm712 = vcmp.le.s32.totalorder %v648, 14
      %vm713 = vcmp.le.s32.totalorder %v649, 14
      %vm714 = vcmp.le.s32.totalorder %v650, 14
      %v716 = vrot.slane %v229, 7
      %vm749 = vcmask 1040384
      %v750 = vrot.slane %v198, 7
      %v751 = vrot.slane %v199, 7
      %v752 = vsel %vm749, %v750, %v751
      %v753 = vrot.slane %v200, 7
      %v754 = vsel %vm749, %v751, %v753
      %v755 = vrot.slane %v201, 7
      %v756 = vsel %vm749, %v753, %v755
      %v757 = vrot.slane %v202, 7
      %v758 = vsel %vm749, %v755, %v757
      %v759 = vrot.slane %v203, 7
      %v760 = vsel %vm749, %v757, %v759
      %v761 = vrot.slane %v204, 7
      %v762 = vsel %vm749, %v759, %v761
      %v763 = vrot.slane %v205, 7
      %v764 = vsel %vm749, %v761, %v763
      %v765 = vrot.slane %v206, 7
      %v766 = vsel %vm749, %v763, %v765
      %v767 = vrot.slane %v207, 7
      %v768 = vsel %vm749, %v765, %v767
      %v769 = vrot.slane %v208, 7
      %v770 = vsel %vm749, %v767, %v769
      %v771 = vrot.slane %v209, 7
      %v772 = vsel %vm749, %v769, %v771
      %v773 = vrot.slane %v210, 7
      %v774 = vsel %vm749, %v771, %v773
      %v775 = vrot.slane %v211, 7
      %v776 = vsel %vm749, %v773, %v775
      %v777 = vrot.slane %v212, 7
      %v778 = vsel %vm749, %v775, %v777
      %v779 = vrot.slane %v213, 7
      %v780 = vsel %vm749, %v777, %v779
      %v781 = vrot.slane %v214, 7
      %v782 = vsel %vm749, %v779, %v781
      %v783 = vrot.slane %v215, 7
      %v784 = vsel %vm749, %v781, %v783
      %v785 = vrot.slane %v216, 7
      %v786 = vsel %vm749, %v783, %v785
      %v787 = vrot.slane %v217, 7
      %v788 = vsel %vm749, %v785, %v787
      %v789 = vrot.slane %v218, 7
      %v790 = vsel %vm749, %v787, %v789
      %v791 = vrot.slane %v219, 7
      %v792 = vsel %vm749, %v789, %v791
      %v793 = vrot.slane %v220, 7
      %v794 = vsel %vm749, %v791, %v793
      %v795 = vrot.slane %v221, 7
      %v796 = vsel %vm749, %v793, %v795
      %v797 = vrot.slane %v222, 7
      %v798 = vsel %vm749, %v795, %v797
      %v799 = vrot.slane %v223, 7
      %v800 = vsel %vm749, %v797, %v799
      %v801 = vrot.slane %v224, 7
      %v802 = vsel %vm749, %v799, %v801
      %v803 = vrot.slane %v225, 7
      %v804 = vsel %vm749, %v801, %v803
      %v805 = vrot.slane %v226, 7
      %v806 = vsel %vm749, %v803, %v805
      %v807 = vrot.slane %v227, 7
      %v808 = vsel %vm749, %v805, %v807
      %v809 = vrot.slane %v228, 7
      %v810 = vsel %vm749, %v807, %v809
      %v811 = vsel %vm749, %v809, %v716
      %v844 = vsel %vm749, %v716, %v750
      %v845 = vsel %vm651, 1, 0
      %v846 = vsel %vm652, 1, 0
      %v847 = vsel %vm653, 1, 0
      %v848 = vsel %vm654, 1, 0
      %v849 = vsel %vm655, 1, 0
      %v850 = vsel %vm656, 1, 0
      %v851 = vsel %vm657, 1, 0
      %v852 = vsel %vm658, 1, 0
      %v853 = vsel %vm659, 1, 0
      %v854 = vsel %vm660, 1, 0
      %v855 = vsel %vm661, 1, 0
      %v856 = vsel %vm662, 1, 0
      %v857 = vsel %vm663, 1, 0
      %v858 = vsel %vm664, 1, 0
      %v859 = vsel %vm665, 1, 0
      %v860 = vsel %vm666, 1, 0
      %v861 = vsel %vm667, 1, 0
      %v862 = vsel %vm668, 1, 0
      %v863 = vsel %vm669, 1, 0
      %v864 = vsel %vm670, 1, 0
      %v865 = vsel %vm671, 1, 0
      %v866 = vsel %vm672, 1, 0
      %v867 = vsel %vm673, 1, 0
      %v868 = vsel %vm674, 1, 0
      %v869 = vsel %vm675, 1, 0
      %v870 = vsel %vm676, 1, 0
      %v871 = vsel %vm677, 1, 0
      %v872 = vsel %vm678, 1, 0
      %v873 = vsel %vm679, 1, 0
      %v874 = vsel %vm680, 1, 0
      %v875 = vsel %vm681, 1, 0
      %v876 = vsel %vm682, 1, 0
      %vm877 = vcmp.eq.s32.totalorder %v845, 1
      %vm878 = vcmp.eq.s32.totalorder %v846, 1
      %vm879 = vcmp.eq.s32.totalorder %v847, 1
      %vm880 = vcmp.eq.s32.totalorder %v848, 1
      %vm881 = vcmp.eq.s32.totalorder %v849, 1
      %vm882 = vcmp.eq.s32.totalorder %v850, 1
      %vm883 = vcmp.eq.s32.totalorder %v851, 1
      %vm884 = vcmp.eq.s32.totalorder %v852, 1
      %vm885 = vcmp.eq.s32.totalorder %v853, 1
      %vm886 = vcmp.eq.s32.totalorder %v854, 1
      %vm887 = vcmp.eq.s32.totalorder %v855, 1
      %vm888 = vcmp.eq.s32.totalorder %v856, 1
      %vm889 = vcmp.eq.s32.totalorder %v857, 1
      %vm890 = vcmp.eq.s32.totalorder %v858, 1
      %vm891 = vcmp.eq.s32.totalorder %v859, 1
      %vm892 = vcmp.eq.s32.totalorder %v860, 1
      %vm893 = vcmp.eq.s32.totalorder %v861, 1
      %vm894 = vcmp.eq.s32.totalorder %v862, 1
      %vm895 = vcmp.eq.s32.totalorder %v863, 1
      %vm896 = vcmp.eq.s32.totalorder %v864, 1
      %vm897 = vcmp.eq.s32.totalorder %v865, 1
      %vm898 = vcmp.eq.s32.totalorder %v866, 1
      %vm899 = vcmp.eq.s32.totalorder %v867, 1
      %vm900 = vcmp.eq.s32.totalorder %v868, 1
      %vm901 = vcmp.eq.s32.totalorder %v869, 1
      %vm902 = vcmp.eq.s32.totalorder %v870, 1
      %vm903 = vcmp.eq.s32.totalorder %v871, 1
      %vm904 = vcmp.eq.s32.totalorder %v872, 1
      %vm905 = vcmp.eq.s32.totalorder %v873, 1
      %vm906 = vcmp.eq.s32.totalorder %v874, 1
      %vm907 = vcmp.eq.s32.totalorder %v875, 1
      %vm908 = vcmp.eq.s32.totalorder %v876, 1
      %v909 = vsel %vm877, %v844, 0.0
      %v910 = vsel %vm878, %v752, 0.0
      %v911 = vsel %vm879, %v754, 0.0
      %v912 = vsel %vm880, %v756, 0.0
      %v913 = vsel %vm881, %v758, 0.0
      %v914 = vsel %vm882, %v760, 0.0
      %v915 = vsel %vm883, %v762, 0.0
      %v916 = vsel %vm884, %v764, 0.0
      %v917 = vsel %vm885, %v766, 0.0
      %v918 = vsel %vm886, %v768, 0.0
      %v919 = vsel %vm887, %v770, 0.0
      %v920 = vsel %vm888, %v772, 0.0
      %v921 = vsel %vm889, %v774, 0.0
      %v922 = vsel %vm890, %v776, 0.0
      %v923 = vsel %vm891, %v778, 0.0
      %v924 = vsel %vm892, %v780, 0.0
      %v925 = vsel %vm893, %v782, 0.0
      %v926 = vsel %vm894, %v784, 0.0
      %v927 = vsel %vm895, %v786, 0.0
      %v928 = vsel %vm896, %v788, 0.0
      %v929 = vsel %vm897, %v790, 0.0
      %v930 = vsel %vm898, %v792, 0.0
      %v931 = vsel %vm899, %v794, 0.0
      %v932 = vsel %vm900, %v796, 0.0
      %v933 = vsel %vm901, %v798, 0.0
      %v934 = vsel %vm902, %v800, 0.0
      %v935 = vsel %vm903, %v802, 0.0
      %v936 = vsel %vm904, %v804, 0.0
      %v937 = vsel %vm905, %v806, 0.0
      %v938 = vsel %vm906, %v808, 0.0
      %v939 = vsel %vm907, %v810, 0.0
      %v940 = vsel %vm908, %v811, 0.0
      %v941 = vld [vmem:[%s1] sm:$0xf]
      %s942 = scalar_lea.vmem %s1, 4
      %v943 = vld [vmem:[%s942] sm:$0xf]
      %vm944 = vcmask 31744
      %v945 = vsel %vm944, %v198, 0
      %v947 = vsel %vm944, %v199, 0
      %v949 = vsel %vm944, %v200, 0
      %v951 = vsel %vm944, %v201, 0
      %v953 = vsel %vm944, %v202, 0
      %v955 = vsel %vm944, %v203, 0
      %v957 = vsel %vm944, %v204, 0
      %v959 = vsel %vm944, %v205, 0
      %v961 = vsel %vm944, %v206, 0
      %v963 = vsel %vm944, %v207, 0
      %v965 = vsel %vm944, %v208, 0
      %v967 = vsel %vm944, %v209, 0
      %v969 = vsel %vm944, %v210, 0
      %v971 = vsel %vm944, %v211, 0
      %v973 = vsel %vm944, %v212, 0
      %v975 = vsel %vm944, %v213, 0
      %v977 = vsel %vm944, %v214, 0
      %v979 = vsel %vm944, %v215, 0
      %v981 = vsel %vm944, %v216, 0
      %v983 = vsel %vm944, %v217, 0
      %v985 = vsel %vm944, %v218, 0
      %v987 = vsel %vm944, %v219, 0
      %v989 = vsel %vm944, %v220, 0
      %v991 = vsel %vm944, %v221, 0
      %v993 = vsel %vm944, %v222, 0
      %v995 = vsel %vm944, %v223, 0
      %v997 = vsel %vm944, %v224, 0
      %v999 = vsel %vm944, %v225, 0
      %v1001 = vsel %vm944, %v226, 0
      %v1003 = vsel %vm944, %v227, 0
      %v1005 = vsel %vm944, %v228, 0
      %v1007 = vsel %vm944, %v229, 0
      %vm1009 = vcmask 1043456
      %v1011 = vsel %vm1009, %v943, 0
      %1013 = vmatprep.subr.mxu0 0.0
      %1014 = vmatpush1.msra.mxu0 %v1011
      %1015 = vmatprep.subr.mxu0 0.0
      %1016 = vmatpush1.msra.mxu0 0.0
      %1017 = vmatprep.subr.mxu0 0.0
      %1018 = vmatpush1.msra.mxu0 0.0
      %1019 = vmatprep.subr.mxu0 0.0
      %1020 = vmatpush1.msra.mxu0 0.0
      %1021 = vmatprep.subr.mxu0 0.0
      %1022 = vmatpush1.msra.mxu0 0.0
      %1023 = vmatprep.subr.mxu0 0.0
      %1024 = vmatpush1.msra.mxu0 0.0
      %1025 = vmatprep.subr.mxu0 0.0
      %1026 = vmatpush1.msra.mxu0 0.0
      %1027 = vmatprep.subr.mxu0 0.0
      %1028 = vmatpush1.msra.mxu0 0.0
      %1029 = vmatprep.subr.mxu0 0.0
      %1030 = vmatpush1.msra.mxu0 0.0
      %1031 = vmatprep.subr.mxu0 0.0
      %1032 = vmatpush1.msra.mxu0 0.0
      %1033 = vmatprep.subr.mxu0 0.0
      %1034 = vmatpush1.msra.mxu0 0.0
      %1035 = vmatprep.subr.mxu0 0.0
      %1036 = vmatpush1.msra.mxu0 0.0
      %1037 = vmatprep.subr.mxu0 0.0
      %1038 = vmatpush1.msra.mxu0 0.0
      %1039 = vmatprep.subr.mxu0 0.0
      %1040 = vmatpush1.msra.mxu0 0.0
      %1041 = vmatprep.subr.mxu0 0.0
      %1042 = vmatpush1.msra.mxu0 0.0
      %1043 = vmatprep.subr.mxu0 0.0
      %1044 = vmatpush1.msra.mxu0 0.0
      %1045 = vmatprep.subr.mxu0 0.0
      %1046 = vmatpush1.msra.mxu0 0.0
      %1047 = vmatprep.subr.mxu0 0.0
      %1048 = vmatpush1.msra.mxu0 0.0
      %1049 = vmatprep.subr.mxu0 0.0
      %1050 = vmatpush1.msra.mxu0 0.0
      %1051 = vmatprep.subr.mxu0 0.0
      %1052 = vmatpush1.msra.mxu0 0.0
      %1053 = vmatprep.subr.mxu0 0.0
      %1054 = vmatpush1.msra.mxu0 0.0
      %1055 = vmatprep.subr.mxu0 0.0
      %1056 = vmatpush1.msra.mxu0 0.0
      %1057 = vmatprep.subr.mxu0 0.0
      %1058 = vmatpush1.msra.mxu0 0.0
      %1059 = vmatprep.subr.mxu0 0.0
      %1060 = vmatpush1.msra.mxu0 0.0
      %1061 = vmatprep.subr.mxu0 0.0
      %1062 = vmatpush1.msra.mxu0 0.0
      %1063 = vmatprep.subr.mxu0 0.0
      %1064 = vmatpush1.msra.mxu0 0.0
      %1065 = vmatprep.subr.mxu0 0.0
      %1066 = vmatpush1.msra.mxu0 0.0
      %1067 = vmatprep.subr.mxu0 0.0
      %1068 = vmatpush1.msra.mxu0 0.0
      %1069 = vmatprep.subr.mxu0 0.0
      %1070 = vmatpush1.msra.mxu0 0.0
      %1071 = vmatprep.subr.mxu0 0.0
      %1072 = vmatpush1.msra.mxu0 0.0
      %1073 = vmatprep.subr.mxu0 0.0
      %1074 = vmatpush1.msra.mxu0 0.0
      %1075 = vmatprep.subr.mxu0 0.0
      %1076 = vmatpush1.msra.mxu0 0.0
      %1077 = vmatprep.mubr.f32.mxu0 0.0
      %1078 = vmatmul.mubr.f32.gmra.mrb[0].mxu0 %v945
      %v1079 = vpop.f32.mrb[0].mxu0
      %v1080 = vadd.f32 0.0, %v1079
      %v1081 = vpop.f32.mrb[0].mxu0
      %1082 = vmatprep.mubr.f32.mxu0 0.0
      %1083 = vmatmul.mubr.f32.gmra.mrb[0].mxu0 %v947
      %v1084 = vpop.f32.mrb[0].mxu0
      %v1085 = vadd.f32 0.0, %v1084
      %v1086 = vpop.f32.mrb[0].mxu0
      %1087 = vmatprep.mubr.f32.mxu0 0.0
      %1088 = vmatmul.mubr.f32.gmra.mrb[0].mxu0 %v949
      %v1089 = vpop.f32.mrb[0].mxu0
      %v1090 = vadd.f32 0.0, %v1089
      %v1091 = vpop.f32.mrb[0].mxu0
      %1092 = vmatprep.mubr.f32.mxu0 0.0
      %1093 = vmatmul.mubr.f32.gmra.mrb[0].mxu0 %v951
      %v1094 = vpop.f32.mrb[0].mxu0
      %v1095 = vadd.f32 0.0, %v1094
      %v1096 = vpop.f32.mrb[0].mxu0
      %1097 = vmatprep.mubr.f32.mxu0 0.0
      %1098 = vmatmul.mubr.f32.gmra.mrb[0].mxu0 %v953
      %v1099 = vpop.f32.mrb[0].mxu0
      %v1100 = vadd.f32 0.0, %v1099
      %v1101 = vpop.f32.mrb[0].mxu0
      %1102 = vmatprep.mubr.f32.mxu0 0.0
      %1103 = vmatmul.mubr.f32.gmra.mrb[0].mxu0 %v955
      %v1104 = vpop.f32.mrb[0].mxu0
      %v1105 = vadd.f32 0.0, %v1104
      %v1106 = vpop.f32.mrb[0].mxu0
      %1107 = vmatprep.mubr.f32.mxu0 0.0
      %1108 = vmatmul.mubr.f32.gmra.mrb[0].mxu0 %v957
      %v1109 = vpop.f32.mrb[0].mxu0
      %v1110 = vadd.f32 0.0, %v1109
      %v1111 = vpop.f32.mrb[0].mxu0
      %1112 = vmatprep.mubr.f32.mxu0 0.0
      %1113 = vmatmul.mubr.f32.gmra.mrb[0].mxu0 %v959
      %v1114 = vpop.f32.mrb[0].mxu0
      %v1115 = vadd.f32 0.0, %v1114
      %v1116 = vpop.f32.mrb[0].mxu0
      %1117 = vmatprep.mubr.f32.mxu0 0.0
      %1118 = vmatmul.mubr.f32.gmra.mrb[0].mxu0 %v961
      %v1119 = vpop.f32.mrb[0].mxu0
      %v1120 = vadd.f32 0.0, %v1119
      %v1121 = vpop.f32.mrb[0].mxu0
      %1122 = vmatprep.mubr.f32.mxu0 0.0
      %1123 = vmatmul.mubr.f32.gmra.mrb[0].mxu0 %v963
      %v1124 = vpop.f32.mrb[0].mxu0
      %v1125 = vadd.f32 0.0, %v1124
      %v1126 = vpop.f32.mrb[0].mxu0
      %1127 = vmatprep.mubr.f32.mxu0 0.0
      %1128 = vmatmul.mubr.f32.gmra.mrb[0].mxu0 %v965
      %v1129 = vpop.f32.mrb[0].mxu0
      %v1130 = vadd.f32 0.0, %v1129
      %v1131 = vpop.f32.mrb[0].mxu0
      %1132 = vmatprep.mubr.f32.mxu0 0.0
      %1133 = vmatmul.mubr.f32.gmra.mrb[0].mxu0 %v967
      %v1134 = vpop.f32.mrb[0].mxu0
      %v1135 = vadd.f32 0.0, %v1134
      %v1136 = vpop.f32.mrb[0].mxu0
      %1137 = vmatprep.mubr.f32.mxu0 0.0
      %1138 = vmatmul.mubr.f32.gmra.mrb[0].mxu0 %v969
      %v1139 = vpop.f32.mrb[0].mxu0
      %v1140 = vadd.f32 0.0, %v1139
      %v1141 = vpop.f32.mrb[0].mxu0
      %1142 = vmatprep.mubr.f32.mxu0 0.0
      %1143 = vmatmul.mubr.f32.gmra.mrb[0].mxu0 %v971
      %v1144 = vpop.f32.mrb[0].mxu0
      %v1145 = vadd.f32 0.0, %v1144
      %v1146 = vpop.f32.mrb[0].mxu0
      %1147 = vmatprep.mubr.f32.mxu0 0.0
      %1148 = vmatmul.mubr.f32.gmra.mrb[0].mxu0 %v973
      %v1149 = vpop.f32.mrb[0].mxu0
      %v1150 = vadd.f32 0.0, %v1149
      %v1151 = vpop.f32.mrb[0].mxu0
      %1152 = vmatprep.mubr.f32.mxu0 0.0
      %1153 = vmatmul.mubr.f32.gmra.mrb[0].mxu0 %v975
      %v1154 = vpop.f32.mrb[0].mxu0
      %v1155 = vadd.f32 0.0, %v1154
      %v1156 = vpop.f32.mrb[0].mxu0
      %1157 = vmatprep.mubr.f32.mxu0 0.0
      %1158 = vmatmul.mubr.f32.gmra.mrb[0].mxu0 %v977
      %v1159 = vpop.f32.mrb[0].mxu0
      %v1160 = vadd.f32 0.0, %v1159
      %v1161 = vpop.f32.mrb[0].mxu0
      %1162 = vmatprep.mubr.f32.mxu0 0.0
      %1163 = vmatmul.mubr.f32.gmra.mrb[0].mxu0 %v979
      %v1164 = vpop.f32.mrb[0].mxu0
      %v1165 = vadd.f32 0.0, %v1164
      %v1166 = vpop.f32.mrb[0].mxu0
      %1167 = vmatprep.mubr.f32.mxu0 0.0
      %1168 = vmatmul.mubr.f32.gmra.mrb[0].mxu0 %v981
      %v1169 = vpop.f32.mrb[0].mxu0
      %v1170 = vadd.f32 0.0, %v1169
      %v1171 = vpop.f32.mrb[0].mxu0
      %1172 = vmatprep.mubr.f32.mxu0 0.0
      %1173 = vmatmul.mubr.f32.gmra.mrb[0].mxu0 %v983
      %v1174 = vpop.f32.mrb[0].mxu0
      %v1175 = vadd.f32 0.0, %v1174
      %v1176 = vpop.f32.mrb[0].mxu0
      %1177 = vmatprep.mubr.f32.mxu0 0.0
      %1178 = vmatmul.mubr.f32.gmra.mrb[0].mxu0 %v985
      %v1179 = vpop.f32.mrb[0].mxu0
      %v1180 = vadd.f32 0.0, %v1179
      %v1181 = vpop.f32.mrb[0].mxu0
      %1182 = vmatprep.mubr.f32.mxu0 0.0
      %1183 = vmatmul.mubr.f32.gmra.mrb[0].mxu0 %v987
      %v1184 = vpop.f32.mrb[0].mxu0
      %v1185 = vadd.f32 0.0, %v1184
      %v1186 = vpop.f32.mrb[0].mxu0
      %1187 = vmatprep.mubr.f32.mxu0 0.0
      %1188 = vmatmul.mubr.f32.gmra.mrb[0].mxu0 %v989
      %v1189 = vpop.f32.mrb[0].mxu0
      %v1190 = vadd.f32 0.0, %v1189
      %v1191 = vpop.f32.mrb[0].mxu0
      %1192 = vmatprep.mubr.f32.mxu0 0.0
      %1193 = vmatmul.mubr.f32.gmra.mrb[0].mxu0 %v991
      %v1194 = vpop.f32.mrb[0].mxu0
      %v1195 = vadd.f32 0.0, %v1194
      %v1196 = vpop.f32.mrb[0].mxu0
      %1197 = vmatprep.mubr.f32.mxu0 0.0
      %1198 = vmatmul.mubr.f32.gmra.mrb[0].mxu0 %v993
      %v1199 = vpop.f32.mrb[0].mxu0
      %v1200 = vadd.f32 0.0, %v1199
      %v1201 = vpop.f32.mrb[0].mxu0
      %1202 = vmatprep.mubr.f32.mxu0 0.0
      %1203 = vmatmul.mubr.f32.gmra.mrb[0].mxu0 %v995
      %v1204 = vpop.f32.mrb[0].mxu0
      %v1205 = vadd.f32 0.0, %v1204
      %v1206 = vpop.f32.mrb[0].mxu0
      %1207 = vmatprep.mubr.f32.mxu0 0.0
      %1208 = vmatmul.mubr.f32.gmra.mrb[0].mxu0 %v997
      %v1209 = vpop.f32.mrb[0].mxu0
      %v1210 = vadd.f32 0.0, %v1209
      %v1211 = vpop.f32.mrb[0].mxu0
      %1212 = vmatprep.mubr.f32.mxu0 0.0
      %1213 = vmatmul.mubr.f32.gmra.mrb[0].mxu0 %v999
      %v1214 = vpop.f32.mrb[0].mxu0
      %v1215 = vadd.f32 0.0, %v1214
      %v1216 = vpop.f32.mrb[0].mxu0
      %1217 = vmatprep.mubr.f32.mxu0 0.0
      %1218 = vmatmul.mubr.f32.gmra.mrb[0].mxu0 %v1001
      %v1219 = vpop.f32.mrb[0].mxu0
      %v1220 = vadd.f32 0.0, %v1219
      %v1221 = vpop.f32.mrb[0].mxu0
      %1222 = vmatprep.mubr.f32.mxu0 0.0
      %1223 = vmatmul.mubr.f32.gmra.mrb[0].mxu0 %v1003
      %v1224 = vpop.f32.mrb[0].mxu0
      %v1225 = vadd.f32 0.0, %v1224
      %v1226 = vpop.f32.mrb[0].mxu0
      %1227 = vmatprep.mubr.f32.mxu0 0.0
      %1228 = vmatmul.mubr.f32.gmra.mrb[0].mxu0 %v1005
      %v1229 = vpop.f32.mrb[0].mxu0
      %v1230 = vadd.f32 0.0, %v1229
      %v1231 = vpop.f32.mrb[0].mxu0
      %1232 = vmatprep.mubr.f32.mxu0 0.0
      %1233 = vmatmul.mubr.f32.gmra.mrb[0].mxu0 %v1007
      %v1234 = vpop.f32.mrb[0].mxu0
      %v1235 = vadd.f32 0.0, %v1234
      %v1236 = vpop.f32.mrb[0].mxu0
      %1237 = vdwg.mxu0
      %v1239 = vsel %vm944, %v909, 0
      %v1242 = vsel %vm944, %v910, 0
      %v1245 = vsel %vm944, %v911, 0
      %v1248 = vsel %vm944, %v912, 0
      %v1251 = vsel %vm944, %v913, 0
      %v1254 = vsel %vm944, %v914, 0
      %v1257 = vsel %vm944, %v915, 0
      %v1260 = vsel %vm944, %v916, 0
      %v1263 = vsel %vm944, %v917, 0
      %v1266 = vsel %vm944, %v918, 0
      %v1269 = vsel %vm944, %v919, 0
      %v1272 = vsel %vm944, %v920, 0
      %v1275 = vsel %vm944, %v921, 0
      %v1278 = vsel %vm944, %v922, 0
      %v1281 = vsel %vm944, %v923, 0
      %v1284 = vsel %vm944, %v924, 0
      %v1287 = vsel %vm944, %v925, 0
      %v1290 = vsel %vm944, %v926, 0
      %v1293 = vsel %vm944, %v927, 0
      %v1296 = vsel %vm944, %v928, 0
      %v1299 = vsel %vm944, %v929, 0
      %v1302 = vsel %vm944, %v930, 0
      %v1305 = vsel %vm944, %v931, 0
      %v1308 = vsel %vm944, %v932, 0
      %v1311 = vsel %vm944, %v933, 0
      %v1314 = vsel %vm944, %v934, 0
      %v1317 = vsel %vm944, %v935, 0
      %v1320 = vsel %vm944, %v936, 0
      %v1323 = vsel %vm944, %v937, 0
      %v1326 = vsel %vm944, %v938, 0
      %v1329 = vsel %vm944, %v939, 0
      %v1332 = vsel %vm944, %v940, 0
      %v1335 = vsel %vm1009, %v941, 0
      %1337 = vmatprep.subr.mxu0 0.0
      %1338 = vmatpush1.msra.mxu0 %v1335
      %1339 = vmatprep.subr.mxu0 0.0
      %1340 = vmatpush1.msra.mxu0 0.0
      %1341 = vmatprep.subr.mxu0 0.0
      %1342 = vmatpush1.msra.mxu0 0.0
      %1343 = vmatprep.subr.mxu0 0.0
      %1344 = vmatpush1.msra.mxu0 0.0
      %1345 = vmatprep.subr.mxu0 0.0
      %1346 = vmatpush1.msra.mxu0 0.0
      %1347 = vmatprep.subr.mxu0 0.0
      %1348 = vmatpush1.msra.mxu0 0.0
      %1349 = vmatprep.subr.mxu0 0.0
      %1350 = vmatpush1.msra.mxu0 0.0
      %1351 = vmatprep.subr.mxu0 0.0
      %1352 = vmatpush1.msra.mxu0 0.0
      %1353 = vmatprep.subr.mxu0 0.0
      %1354 = vmatpush1.msra.mxu0 0.0
      %1355 = vmatprep.subr.mxu0 0.0
      %1356 = vmatpush1.msra.mxu0 0.0
      %1357 = vmatprep.subr.mxu0 0.0
      %1358 = vmatpush1.msra.mxu0 0.0
      %1359 = vmatprep.subr.mxu0 0.0
      %1360 = vmatpush1.msra.mxu0 0.0
      %1361 = vmatprep.subr.mxu0 0.0
      %1362 = vmatpush1.msra.mxu0 0.0
      %1363 = vmatprep.subr.mxu0 0.0
      %1364 = vmatpush1.msra.mxu0 0.0
      %1365 = vmatprep.subr.mxu0 0.0
      %1366 = vmatpush1.msra.mxu0 0.0
      %1367 = vmatprep.subr.mxu0 0.0
      %1368 = vmatpush1.msra.mxu0 0.0
      %1369 = vmatprep.subr.mxu0 0.0
      %1370 = vmatpush1.msra.mxu0 0.0
      %1371 = vmatprep.subr.mxu0 0.0
      %1372 = vmatpush1.msra.mxu0 0.0
      %1373 = vmatprep.subr.mxu0 0.0
      %1374 = vmatpush1.msra.mxu0 0.0
      %1375 = vmatprep.subr.mxu0 0.0
      %1376 = vmatpush1.msra.mxu0 0.0
      %1377 = vmatprep.subr.mxu0 0.0
      %1378 = vmatpush1.msra.mxu0 0.0
      %1379 = vmatprep.subr.mxu0 0.0
      %1380 = vmatpush1.msra.mxu0 0.0
      %1381 = vmatprep.subr.mxu0 0.0
      %1382 = vmatpush1.msra.mxu0 0.0
      %1383 = vmatprep.subr.mxu0 0.0
      %1384 = vmatpush1.msra.mxu0 0.0
      %1385 = vmatprep.subr.mxu0 0.0
      %1386 = vmatpush1.msra.mxu0 0.0
      %1387 = vmatprep.subr.mxu0 0.0
      %1388 = vmatpush1.msra.mxu0 0.0
      %1389 = vmatprep.subr.mxu0 0.0
      %1390 = vmatpush1.msra.mxu0 0.0
      %1391 = vmatprep.subr.mxu0 0.0
      %1392 = vmatpush1.msra.mxu0 0.0
      %1393 = vmatprep.subr.mxu0 0.0
      %1394 = vmatpush1.msra.mxu0 0.0
      %1395 = vmatprep.subr.mxu0 0.0
      %1396 = vmatpush1.msra.mxu0 0.0
      %1397 = vmatprep.subr.mxu0 0.0
      %1398 = vmatpush1.msra.mxu0 0.0
      %1399 = vmatprep.subr.mxu0 0.0
      %1400 = vmatpush1.msra.mxu0 0.0
      %1401 = vmatprep.mubr.f32.mxu0 0.0
      %1402 = vmatmul.mubr.f32.gmra.mrb[0].mxu0 %v1239
      %v1403 = vpop.f32.mrb[0].mxu0
      %v1404 = vadd.f32 %v1080, %v1403
      %v1405 = vpop.f32.mrb[0].mxu0
      %1406 = vmatprep.mubr.f32.mxu0 0.0
      %1407 = vmatmul.mubr.f32.gmra.mrb[0].mxu0 %v1242
      %v1408 = vpop.f32.mrb[0].mxu0
      %v1409 = vadd.f32 %v1085, %v1408
      %v1410 = vpop.f32.mrb[0].mxu0
      %1411 = vmatprep.mubr.f32.mxu0 0.0
      %1412 = vmatmul.mubr.f32.gmra.mrb[0].mxu0 %v1245
      %v1413 = vpop.f32.mrb[0].mxu0
      %v1414 = vadd.f32 %v1090, %v1413
      %v1415 = vpop.f32.mrb[0].mxu0
      %1416 = vmatprep.mubr.f32.mxu0 0.0
      %1417 = vmatmul.mubr.f32.gmra.mrb[0].mxu0 %v1248
      %v1418 = vpop.f32.mrb[0].mxu0
      %v1419 = vadd.f32 %v1095, %v1418
      %v1420 = vpop.f32.mrb[0].mxu0
      %1421 = vmatprep.mubr.f32.mxu0 0.0
      %1422 = vmatmul.mubr.f32.gmra.mrb[0].mxu0 %v1251
      %v1423 = vpop.f32.mrb[0].mxu0
      %v1424 = vadd.f32 %v1100, %v1423
      %v1425 = vpop.f32.mrb[0].mxu0
      %1426 = vmatprep.mubr.f32.mxu0 0.0
      %1427 = vmatmul.mubr.f32.gmra.mrb[0].mxu0 %v1254
      %v1428 = vpop.f32.mrb[0].mxu0
      %v1429 = vadd.f32 %v1105, %v1428
      %v1430 = vpop.f32.mrb[0].mxu0
      %1431 = vmatprep.mubr.f32.mxu0 0.0
      %1432 = vmatmul.mubr.f32.gmra.mrb[0].mxu0 %v1257
      %v1433 = vpop.f32.mrb[0].mxu0
      %v1434 = vadd.f32 %v1110, %v1433
      %v1435 = vpop.f32.mrb[0].mxu0
      %1436 = vmatprep.mubr.f32.mxu0 0.0
      %1437 = vmatmul.mubr.f32.gmra.mrb[0].mxu0 %v1260
      %v1438 = vpop.f32.mrb[0].mxu0
      %v1439 = vadd.f32 %v1115, %v1438
      %v1440 = vpop.f32.mrb[0].mxu0
      %1441 = vmatprep.mubr.f32.mxu0 0.0
      %1442 = vmatmul.mubr.f32.gmra.mrb[0].mxu0 %v1263
      %v1443 = vpop.f32.mrb[0].mxu0
      %v1444 = vadd.f32 %v1120, %v1443
      %v1445 = vpop.f32.mrb[0].mxu0
      %1446 = vmatprep.mubr.f32.mxu0 0.0
      %1447 = vmatmul.mubr.f32.gmra.mrb[0].mxu0 %v1266
      %v1448 = vpop.f32.mrb[0].mxu0
      %v1449 = vadd.f32 %v1125, %v1448
      %v1450 = vpop.f32.mrb[0].mxu0
      %1451 = vmatprep.mubr.f32.mxu0 0.0
      %1452 = vmatmul.mubr.f32.gmra.mrb[0].mxu0 %v1269
      %v1453 = vpop.f32.mrb[0].mxu0
      %v1454 = vadd.f32 %v1130, %v1453
      %v1455 = vpop.f32.mrb[0].mxu0
      %1456 = vmatprep.mubr.f32.mxu0 0.0
      %1457 = vmatmul.mubr.f32.gmra.mrb[0].mxu0 %v1272
      %v1458 = vpop.f32.mrb[0].mxu0
      %v1459 = vadd.f32 %v1135, %v1458
      %v1460 = vpop.f32.mrb[0].mxu0
      %1461 = vmatprep.mubr.f32.mxu0 0.0
      %1462 = vmatmul.mubr.f32.gmra.mrb[0].mxu0 %v1275
      %v1463 = vpop.f32.mrb[0].mxu0
      %v1464 = vadd.f32 %v1140, %v1463
      %v1465 = vpop.f32.mrb[0].mxu0
      %1466 = vmatprep.mubr.f32.mxu0 0.0
      %1467 = vmatmul.mubr.f32.gmra.mrb[0].mxu0 %v1278
      %v1468 = vpop.f32.mrb[0].mxu0
      %v1469 = vadd.f32 %v1145, %v1468
      %v1470 = vpop.f32.mrb[0].mxu0
      %1471 = vmatprep.mubr.f32.mxu0 0.0
      %1472 = vmatmul.mubr.f32.gmra.mrb[0].mxu0 %v1281
      %v1473 = vpop.f32.mrb[0].mxu0
      %v1474 = vadd.f32 %v1150, %v1473
      %v1475 = vpop.f32.mrb[0].mxu0
      %1476 = vmatprep.mubr.f32.mxu0 0.0
      %1477 = vmatmul.mubr.f32.gmra.mrb[0].mxu0 %v1284
      %v1478 = vpop.f32.mrb[0].mxu0
      %v1479 = vadd.f32 %v1155, %v1478
      %v1480 = vpop.f32.mrb[0].mxu0
      %1481 = vmatprep.mubr.f32.mxu0 0.0
      %1482 = vmatmul.mubr.f32.gmra.mrb[0].mxu0 %v1287
      %v1483 = vpop.f32.mrb[0].mxu0
      %v1484 = vadd.f32 %v1160, %v1483
      %v1485 = vpop.f32.mrb[0].mxu0
      %1486 = vmatprep.mubr.f32.mxu0 0.0
      %1487 = vmatmul.mubr.f32.gmra.mrb[0].mxu0 %v1290
      %v1488 = vpop.f32.mrb[0].mxu0
      %v1489 = vadd.f32 %v1165, %v1488
      %v1490 = vpop.f32.mrb[0].mxu0
      %1491 = vmatprep.mubr.f32.mxu0 0.0
      %1492 = vmatmul.mubr.f32.gmra.mrb[0].mxu0 %v1293
      %v1493 = vpop.f32.mrb[0].mxu0
      %v1494 = vadd.f32 %v1170, %v1493
      %v1495 = vpop.f32.mrb[0].mxu0
      %1496 = vmatprep.mubr.f32.mxu0 0.0
      %1497 = vmatmul.mubr.f32.gmra.mrb[0].mxu0 %v1296
      %v1498 = vpop.f32.mrb[0].mxu0
      %v1499 = vadd.f32 %v1175, %v1498
      %v1500 = vpop.f32.mrb[0].mxu0
      %1501 = vmatprep.mubr.f32.mxu0 0.0
      %1502 = vmatmul.mubr.f32.gmra.mrb[0].mxu0 %v1299
      %v1503 = vpop.f32.mrb[0].mxu0
      %v1504 = vadd.f32 %v1180, %v1503
      %v1505 = vpop.f32.mrb[0].mxu0
      %1506 = vmatprep.mubr.f32.mxu0 0.0
      %1507 = vmatmul.mubr.f32.gmra.mrb[0].mxu0 %v1302
      %v1508 = vpop.f32.mrb[0].mxu0
      %v1509 = vadd.f32 %v1185, %v1508
      %v1510 = vpop.f32.mrb[0].mxu0
      %1511 = vmatprep.mubr.f32.mxu0 0.0
      %1512 = vmatmul.mubr.f32.gmra.mrb[0].mxu0 %v1305
      %v1513 = vpop.f32.mrb[0].mxu0
      %v1514 = vadd.f32 %v1190, %v1513
      %v1515 = vpop.f32.mrb[0].mxu0
      %1516 = vmatprep.mubr.f32.mxu0 0.0
      %1517 = vmatmul.mubr.f32.gmra.mrb[0].mxu0 %v1308
      %v1518 = vpop.f32.mrb[0].mxu0
      %v1519 = vadd.f32 %v1195, %v1518
      %v1520 = vpop.f32.mrb[0].mxu0
      %1521 = vmatprep.mubr.f32.mxu0 0.0
      %1522 = vmatmul.mubr.f32.gmra.mrb[0].mxu0 %v1311
      %v1523 = vpop.f32.mrb[0].mxu0
      %v1524 = vadd.f32 %v1200, %v1523
      %v1525 = vpop.f32.mrb[0].mxu0
      %1526 = vmatprep.mubr.f32.mxu0 0.0
      %1527 = vmatmul.mubr.f32.gmra.mrb[0].mxu0 %v1314
      %v1528 = vpop.f32.mrb[0].mxu0
      %v1529 = vadd.f32 %v1205, %v1528
      %v1530 = vpop.f32.mrb[0].mxu0
      %1531 = vmatprep.mubr.f32.mxu0 0.0
      %1532 = vmatmul.mubr.f32.gmra.mrb[0].mxu0 %v1317
      %v1533 = vpop.f32.mrb[0].mxu0
      %v1534 = vadd.f32 %v1210, %v1533
      %v1535 = vpop.f32.mrb[0].mxu0
      %1536 = vmatprep.mubr.f32.mxu0 0.0
      %1537 = vmatmul.mubr.f32.gmra.mrb[0].mxu0 %v1320
      %v1538 = vpop.f32.mrb[0].mxu0
      %v1539 = vadd.f32 %v1215, %v1538
      %v1540 = vpop.f32.mrb[0].mxu0
      %1541 = vmatprep.mubr.f32.mxu0 0.0
      %1542 = vmatmul.mubr.f32.gmra.mrb[0].mxu0 %v1323
      %v1543 = vpop.f32.mrb[0].mxu0
      %v1544 = vadd.f32 %v1220, %v1543
      %v1545 = vpop.f32.mrb[0].mxu0
      %1546 = vmatprep.mubr.f32.mxu0 0.0
      %1547 = vmatmul.mubr.f32.gmra.mrb[0].mxu0 %v1326
      %v1548 = vpop.f32.mrb[0].mxu0
      %v1549 = vadd.f32 %v1225, %v1548
      %v1550 = vpop.f32.mrb[0].mxu0
      %1551 = vmatprep.mubr.f32.mxu0 0.0
      %1552 = vmatmul.mubr.f32.gmra.mrb[0].mxu0 %v1329
      %v1553 = vpop.f32.mrb[0].mxu0
      %v1554 = vadd.f32 %v1230, %v1553
      %v1555 = vpop.f32.mrb[0].mxu0
      %1556 = vmatprep.mubr.f32.mxu0 0.0
      %1557 = vmatmul.mubr.f32.gmra.mrb[0].mxu0 %v1332
      %v1558 = vpop.f32.mrb[0].mxu0
      %v1559 = vadd.f32 %v1235, %v1558
      %v1560 = vpop.f32.mrb[0].mxu0
      %1561 = vdwg.mxu0
      %vm1562 = vcmask 1046528
      %v1563 = vrot.slane %v198, 1
      %v1564 = vrot.slane %v199, 1
      %v1565 = vsel %vm1562, %v1563, %v1564
      %v1566 = vrot.slane %v200, 1
      %v1567 = vsel %vm1562, %v1564, %v1566
      %v1568 = vrot.slane %v201, 1
      %v1569 = vsel %vm1562, %v1566, %v1568
      %v1570 = vrot.slane %v202, 1
      %v1571 = vsel %vm1562, %v1568, %v1570
      %v1572 = vrot.slane %v203, 1
      %v1573 = vsel %vm1562, %v1570, %v1572
      %v1574 = vrot.slane %v204, 1
      %v1575 = vsel %vm1562, %v1572, %v1574
      %v1576 = vrot.slane %v205, 1
      %v1577 = vsel %vm1562, %v1574, %v1576
      %v1578 = vrot.slane %v206, 1
      %v1579 = vsel %vm1562, %v1576, %v1578
      %v1580 = vrot.slane %v207, 1
      %v1581 = vsel %vm1562, %v1578, %v1580
      %v1582 = vrot.slane %v208, 1
      %v1583 = vsel %vm1562, %v1580, %v1582
      %v1584 = vrot.slane %v209, 1
      %v1585 = vsel %vm1562, %v1582, %v1584
      %v1586 = vrot.slane %v210, 1
      %v1587 = vsel %vm1562, %v1584, %v1586
      %v1588 = vrot.slane %v211, 1
      %v1589 = vsel %vm1562, %v1586, %v1588
      %v1590 = vrot.slane %v212, 1
      %v1591 = vsel %vm1562, %v1588, %v1590
      %v1592 = vrot.slane %v213, 1
      %v1593 = vsel %vm1562, %v1590, %v1592
      %v1594 = vrot.slane %v214, 1
      %v1595 = vsel %vm1562, %v1592, %v1594
      %v1596 = vrot.slane %v215, 1
      %v1597 = vsel %vm1562, %v1594, %v1596
      %v1598 = vrot.slane %v216, 1
      %v1599 = vsel %vm1562, %v1596, %v1598
      %v1600 = vrot.slane %v217, 1
      %v1601 = vsel %vm1562, %v1598, %v1600
      %v1602 = vrot.slane %v218, 1
      %v1603 = vsel %vm1562, %v1600, %v1602
      %v1604 = vrot.slane %v219, 1
      %v1605 = vsel %vm1562, %v1602, %v1604
      %v1606 = vrot.slane %v220, 1
      %v1607 = vsel %vm1562, %v1604, %v1606
      %v1608 = vrot.slane %v221, 1
      %v1609 = vsel %vm1562, %v1606, %v1608
      %v1610 = vrot.slane %v222, 1
      %v1611 = vsel %vm1562, %v1608, %v1610
      %v1612 = vrot.slane %v223, 1
      %v1613 = vsel %vm1562, %v1610, %v1612
      %v1614 = vrot.slane %v224, 1
      %v1615 = vsel %vm1562, %v1612, %v1614
      %v1616 = vrot.slane %v225, 1
      %v1617 = vsel %vm1562, %v1614, %v1616
      %v1618 = vrot.slane %v226, 1
      %v1619 = vsel %vm1562, %v1616, %v1618
      %v1620 = vrot.slane %v227, 1
      %v1621 = vsel %vm1562, %v1618, %v1620
      %v1622 = vrot.slane %v228, 1
      %v1623 = vsel %vm1562, %v1620, %v1622
      %v1624 = vrot.slane %v229, 1
      %v1625 = vsel %vm1562, %v1622, %v1624
      %v1659 = vsel %vm1562, %v1624, %v1563
      %v1660 = vsel %vm683, 1, 0
      %v1661 = vsel %vm684, 1, 0
      %v1662 = vsel %vm685, 1, 0
      %v1663 = vsel %vm686, 1, 0
      %v1664 = vsel %vm687, 1, 0
      %v1665 = vsel %vm688, 1, 0
      %v1666 = vsel %vm689, 1, 0
      %v1667 = vsel %vm690, 1, 0
      %v1668 = vsel %vm691, 1, 0
      %v1669 = vsel %vm692, 1, 0
      %v1670 = vsel %vm693, 1, 0
      %v1671 = vsel %vm694, 1, 0
      %v1672 = vsel %vm695, 1, 0
      %v1673 = vsel %vm696, 1, 0
      %v1674 = vsel %vm697, 1, 0
      %v1675 = vsel %vm698, 1, 0
      %v1676 = vsel %vm699, 1, 0
      %v1677 = vsel %vm700, 1, 0
      %v1678 = vsel %vm701, 1, 0
      %v1679 = vsel %vm702, 1, 0
      %v1680 = vsel %vm703, 1, 0
      %v1681 = vsel %vm704, 1, 0
      %v1682 = vsel %vm705, 1, 0
      %v1683 = vsel %vm706, 1, 0
      %v1684 = vsel %vm707, 1, 0
      %v1685 = vsel %vm708, 1, 0
      %v1686 = vsel %vm709, 1, 0
      %v1687 = vsel %vm710, 1, 0
      %v1688 = vsel %vm711, 1, 0
      %v1689 = vsel %vm712, 1, 0
      %v1690 = vsel %vm713, 1, 0
      %v1691 = vsel %vm714, 1, 0
      %vm1692 = vcmp.eq.s32.totalorder %v1660, 1
      %vm1693 = vcmp.eq.s32.totalorder %v1661, 1
      %vm1694 = vcmp.eq.s32.totalorder %v1662, 1
      %vm1695 = vcmp.eq.s32.totalorder %v1663, 1
      %vm1696 = vcmp.eq.s32.totalorder %v1664, 1
      %vm1697 = vcmp.eq.s32.totalorder %v1665, 1
      %vm1698 = vcmp.eq.s32.totalorder %v1666, 1
      %vm1699 = vcmp.eq.s32.totalorder %v1667, 1
      %vm1700 = vcmp.eq.s32.totalorder %v1668, 1
      %vm1701 = vcmp.eq.s32.totalorder %v1669, 1
      %vm1702 = vcmp.eq.s32.totalorder %v1670, 1
      %vm1703 = vcmp.eq.s32.totalorder %v1671, 1
      %vm1704 = vcmp.eq.s32.totalorder %v1672, 1
      %vm1705 = vcmp.eq.s32.totalorder %v1673, 1
      %vm1706 = vcmp.eq.s32.totalorder %v1674, 1
      %vm1707 = vcmp.eq.s32.totalorder %v1675, 1
      %vm1708 = vcmp.eq.s32.totalorder %v1676, 1
      %vm1709 = vcmp.eq.s32.totalorder %v1677, 1
      %vm1710 = vcmp.eq.s32.totalorder %v1678, 1
      %vm1711 = vcmp.eq.s32.totalorder %v1679, 1
      %vm1712 = vcmp.eq.s32.totalorder %v1680, 1
      %vm1713 = vcmp.eq.s32.totalorder %v1681, 1
      %vm1714 = vcmp.eq.s32.totalorder %v1682, 1
      %vm1715 = vcmp.eq.s32.totalorder %v1683, 1
      %vm1716 = vcmp.eq.s32.totalorder %v1684, 1
      %vm1717 = vcmp.eq.s32.totalorder %v1685, 1
      %vm1718 = vcmp.eq.s32.totalorder %v1686, 1
      %vm1719 = vcmp.eq.s32.totalorder %v1687, 1
      %vm1720 = vcmp.eq.s32.totalorder %v1688, 1
      %vm1721 = vcmp.eq.s32.totalorder %v1689, 1
      %vm1722 = vcmp.eq.s32.totalorder %v1690, 1
      %vm1723 = vcmp.eq.s32.totalorder %v1691, 1
      %v1724 = vsel %vm1692, %v1565, 0.0
      %v1725 = vsel %vm1693, %v1567, 0.0
      %v1726 = vsel %vm1694, %v1569, 0.0
      %v1727 = vsel %vm1695, %v1571, 0.0
      %v1728 = vsel %vm1696, %v1573, 0.0
      %v1729 = vsel %vm1697, %v1575, 0.0
      %v1730 = vsel %vm1698, %v1577, 0.0
      %v1731 = vsel %vm1699, %v1579, 0.0
      %v1732 = vsel %vm1700, %v1581, 0.0
      %v1733 = vsel %vm1701, %v1583, 0.0
      %v1734 = vsel %vm1702, %v1585, 0.0
      %v1735 = vsel %vm1703, %v1587, 0.0
      %v1736 = vsel %vm1704, %v1589, 0.0
      %v1737 = vsel %vm1705, %v1591, 0.0
      %v1738 = vsel %vm1706, %v1593, 0.0
      %v1739 = vsel %vm1707, %v1595, 0.0
      %v1740 = vsel %vm1708, %v1597, 0.0
      %v1741 = vsel %vm1709, %v1599, 0.0
      %v1742 = vsel %vm1710, %v1601, 0.0
      %v1743 = vsel %vm1711, %v1603, 0.0
      %v1744 = vsel %vm1712, %v1605, 0.0
      %v1745 = vsel %vm1713, %v1607, 0.0
      %v1746 = vsel %vm1714, %v1609, 0.0
      %v1747 = vsel %vm1715, %v1611, 0.0
      %v1748 = vsel %vm1716, %v1613, 0.0
      %v1749 = vsel %vm1717, %v1615, 0.0
      %v1750 = vsel %vm1718, %v1617, 0.0
      %v1751 = vsel %vm1719, %v1619, 0.0
      %v1752 = vsel %vm1720, %v1621, 0.0
      %v1753 = vsel %vm1721, %v1623, 0.0
      %v1754 = vsel %vm1722, %v1625, 0.0
      %v1755 = vsel %vm1723, %v1659, 0.0
      %s1756 = scalar_lea.vmem %s1, 8
      %v1757 = vld [vmem:[%s1756] sm:$0xf]
      %v1759 = vsel %vm944, %v1724, 0
      %v1762 = vsel %vm944, %v1725, 0
      %v1765 = vsel %vm944, %v1726, 0
      %v1768 = vsel %vm944, %v1727, 0
      %v1771 = vsel %vm944, %v1728, 0
      %v1774 = vsel %vm944, %v1729, 0
      %v1777 = vsel %vm944, %v1730, 0
      %v1780 = vsel %vm944, %v1731, 0
      %v1783 = vsel %vm944, %v1732, 0
      %v1786 = vsel %vm944, %v1733, 0
      %v1789 = vsel %vm944, %v1734, 0
      %v1792 = vsel %vm944, %v1735, 0
      %v1795 = vsel %vm944, %v1736, 0
      %v1798 = vsel %vm944, %v1737, 0
      %v1801 = vsel %vm944, %v1738, 0
      %v1804 = vsel %vm944, %v1739, 0
      %v1807 = vsel %vm944, %v1740, 0
      %v1810 = vsel %vm944, %v1741, 0
      %v1813 = vsel %vm944, %v1742, 0
      %v1816 = vsel %vm944, %v1743, 0
      %v1819 = vsel %vm944, %v1744, 0
      %v1822 = vsel %vm944, %v1745, 0
      %v1825 = vsel %vm944, %v1746, 0
      %v1828 = vsel %vm944, %v1747, 0
      %v1831 = vsel %vm944, %v1748, 0
      %v1834 = vsel %vm944, %v1749, 0
      %v1837 = vsel %vm944, %v1750, 0
      %v1840 = vsel %vm944, %v1751, 0
      %v1843 = vsel %vm944, %v1752, 0
      %v1846 = vsel %vm944, %v1753, 0
      %v1849 = vsel %vm944, %v1754, 0
      %v1852 = vsel %vm944, %v1755, 0
      %v1855 = vsel %vm1009, %v1757, 0
      %1857 = vmatprep.subr.mxu0 0.0
      %1858 = vmatpush1.msra.mxu0 %v1855
      %1859 = vmatprep.subr.mxu0 0.0
      %1860 = vmatpush1.msra.mxu0 0.0
      %1861 = vmatprep.subr.mxu0 0.0
      %1862 = vmatpush1.msra.mxu0 0.0
      %1863 = vmatprep.subr.mxu0 0.0
      %1864 = vmatpush1.msra.mxu0 0.0
      %1865 = vmatprep.subr.mxu0 0.0
      %1866 = vmatpush1.msra.mxu0 0.0
      %1867 = vmatprep.subr.mxu0 0.0
      %1868 = vmatpush1.msra.mxu0 0.0
      %1869 = vmatprep.subr.mxu0 0.0
      %1870 = vmatpush1.msra.mxu0 0.0
      %1871 = vmatprep.subr.mxu0 0.0
      %1872 = vmatpush1.msra.mxu0 0.0
      %1873 = vmatprep.subr.mxu0 0.0
      %1874 = vmatpush1.msra.mxu0 0.0
      %1875 = vmatprep.subr.mxu0 0.0
      %1876 = vmatpush1.msra.mxu0 0.0
      %1877 = vmatprep.subr.mxu0 0.0
      %1878 = vmatpush1.msra.mxu0 0.0
      %1879 = vmatprep.subr.mxu0 0.0
      %1880 = vmatpush1.msra.mxu0 0.0
      %1881 = vmatprep.subr.mxu0 0.0
      %1882 = vmatpush1.msra.mxu0 0.0
      %1883 = vmatprep.subr.mxu0 0.0
      %1884 = vmatpush1.msra.mxu0 0.0
      %1885 = vmatprep.subr.mxu0 0.0
      %1886 = vmatpush1.msra.mxu0 0.0
      %1887 = vmatprep.subr.mxu0 0.0
      %1888 = vmatpush1.msra.mxu0 0.0
      %1889 = vmatprep.subr.mxu0 0.0
      %1890 = vmatpush1.msra.mxu0 0.0
      %1891 = vmatprep.subr.mxu0 0.0
      %1892 = vmatpush1.msra.mxu0 0.0
      %1893 = vmatprep.subr.mxu0 0.0
      %1894 = vmatpush1.msra.mxu0 0.0
      %1895 = vmatprep.subr.mxu0 0.0
      %1896 = vmatpush1.msra.mxu0 0.0
      %1897 = vmatprep.subr.mxu0 0.0
      %1898 = vmatpush1.msra.mxu0 0.0
      %1899 = vmatprep.subr.mxu0 0.0
      %1900 = vmatpush1.msra.mxu0 0.0
      %1901 = vmatprep.subr.mxu0 0.0
      %1902 = vmatpush1.msra.mxu0 0.0
      %1903 = vmatprep.subr.mxu0 0.0
      %1904 = vmatpush1.msra.mxu0 0.0
      %1905 = vmatprep.subr.mxu0 0.0
      %1906 = vmatpush1.msra.mxu0 0.0
      %1907 = vmatprep.subr.mxu0 0.0
      %1908 = vmatpush1.msra.mxu0 0.0
      %1909 = vmatprep.subr.mxu0 0.0
      %1910 = vmatpush1.msra.mxu0 0.0
      %1911 = vmatprep.subr.mxu0 0.0
      %1912 = vmatpush1.msra.mxu0 0.0
      %1913 = vmatprep.subr.mxu0 0.0
      %1914 = vmatpush1.msra.mxu0 0.0
      %1915 = vmatprep.subr.mxu0 0.0
      %1916 = vmatpush1.msra.mxu0 0.0
      %1917 = vmatprep.subr.mxu0 0.0
      %1918 = vmatpush1.msra.mxu0 0.0
      %1919 = vmatprep.subr.mxu0 0.0
      %1920 = vmatpush1.msra.mxu0 0.0
      %1921 = vmatprep.mubr.f32.mxu0 0.0
      %1922 = vmatmul.mubr.f32.gmra.mrb[0].mxu0 %v1759
      %v1923 = vpop.f32.mrb[0].mxu0
      %v1924 = vadd.f32 0.0, %v1923
      %v1925 = vpop.f32.mrb[0].mxu0
      %1926 = vmatprep.mubr.f32.mxu0 0.0
      %1927 = vmatmul.mubr.f32.gmra.mrb[0].mxu0 %v1762
      %v1928 = vpop.f32.mrb[0].mxu0
      %v1929 = vadd.f32 0.0, %v1928
      %v1930 = vpop.f32.mrb[0].mxu0
      %1931 = vmatprep.mubr.f32.mxu0 0.0
      %1932 = vmatmul.mubr.f32.gmra.mrb[0].mxu0 %v1765
      %v1933 = vpop.f32.mrb[0].mxu0
      %v1934 = vadd.f32 0.0, %v1933
      %v1935 = vpop.f32.mrb[0].mxu0
      %1936 = vmatprep.mubr.f32.mxu0 0.0
      %1937 = vmatmul.mubr.f32.gmra.mrb[0].mxu0 %v1768
      %v1938 = vpop.f32.mrb[0].mxu0
      %v1939 = vadd.f32 0.0, %v1938
      %v1940 = vpop.f32.mrb[0].mxu0
      %1941 = vmatprep.mubr.f32.mxu0 0.0
      %1942 = vmatmul.mubr.f32.gmra.mrb[0].mxu0 %v1771
      %v1943 = vpop.f32.mrb[0].mxu0
      %v1944 = vadd.f32 0.0, %v1943
      %v1945 = vpop.f32.mrb[0].mxu0
      %1946 = vmatprep.mubr.f32.mxu0 0.0
      %1947 = vmatmul.mubr.f32.gmra.mrb[0].mxu0 %v1774
      %v1948 = vpop.f32.mrb[0].mxu0
      %v1949 = vadd.f32 0.0, %v1948
      %v1950 = vpop.f32.mrb[0].mxu0
      %1951 = vmatprep.mubr.f32.mxu0 0.0
      %1952 = vmatmul.mubr.f32.gmra.mrb[0].mxu0 %v1777
      %v1953 = vpop.f32.mrb[0].mxu0
      %v1954 = vadd.f32 0.0, %v1953
      %v1955 = vpop.f32.mrb[0].mxu0
      %1956 = vmatprep.mubr.f32.mxu0 0.0
      %1957 = vmatmul.mubr.f32.gmra.mrb[0].mxu0 %v1780
      %v1958 = vpop.f32.mrb[0].mxu0
      %v1959 = vadd.f32 0.0, %v1958
      %v1960 = vpop.f32.mrb[0].mxu0
      %1961 = vmatprep.mubr.f32.mxu0 0.0
      %1962 = vmatmul.mubr.f32.gmra.mrb[0].mxu0 %v1783
      %v1963 = vpop.f32.mrb[0].mxu0
      %v1964 = vadd.f32 0.0, %v1963
      %v1965 = vpop.f32.mrb[0].mxu0
      %1966 = vmatprep.mubr.f32.mxu0 0.0
      %1967 = vmatmul.mubr.f32.gmra.mrb[0].mxu0 %v1786
      %v1968 = vpop.f32.mrb[0].mxu0
      %v1969 = vadd.f32 0.0, %v1968
      %v1970 = vpop.f32.mrb[0].mxu0
      %1971 = vmatprep.mubr.f32.mxu0 0.0
      %1972 = vmatmul.mubr.f32.gmra.mrb[0].mxu0 %v1789
      %v1973 = vpop.f32.mrb[0].mxu0
      %v1974 = vadd.f32 0.0, %v1973
      %v1975 = vpop.f32.mrb[0].mxu0
      %1976 = vmatprep.mubr.f32.mxu0 0.0
      %1977 = vmatmul.mubr.f32.gmra.mrb[0].mxu0 %v1792
      %v1978 = vpop.f32.mrb[0].mxu0
      %v1979 = vadd.f32 0.0, %v1978
      %v1980 = vpop.f32.mrb[0].mxu0
      %1981 = vmatprep.mubr.f32.mxu0 0.0
      %1982 = vmatmul.mubr.f32.gmra.mrb[0].mxu0 %v1795
      %v1983 = vpop.f32.mrb[0].mxu0
      %v1984 = vadd.f32 0.0, %v1983
      %v1985 = vpop.f32.mrb[0].mxu0
      %1986 = vmatprep.mubr.f32.mxu0 0.0
      %1987 = vmatmul.mubr.f32.gmra.mrb[0].mxu0 %v1798
      %v1988 = vpop.f32.mrb[0].mxu0
      %v1989 = vadd.f32 0.0, %v1988
      %v1990 = vpop.f32.mrb[0].mxu0
      %1991 = vmatprep.mubr.f32.mxu0 0.0
      %1992 = vmatmul.mubr.f32.gmra.mrb[0].mxu0 %v1801
      %v1993 = vpop.f32.mrb[0].mxu0
      %v1994 = vadd.f32 0.0, %v1993
      %v1995 = vpop.f32.mrb[0].mxu0
      %1996 = vmatprep.mubr.f32.mxu0 0.0
      %1997 = vmatmul.mubr.f32.gmra.mrb[0].mxu0 %v1804
      %v1998 = vpop.f32.mrb[0].mxu0
      %v1999 = vadd.f32 0.0, %v1998
      %v2000 = vpop.f32.mrb[0].mxu0
      %2001 = vmatprep.mubr.f32.mxu0 0.0
      %2002 = vmatmul.mubr.f32.gmra.mrb[0].mxu0 %v1807
      %v2003 = vpop.f32.mrb[0].mxu0
      %v2004 = vadd.f32 0.0, %v2003
      %v2005 = vpop.f32.mrb[0].mxu0
      %2006 = vmatprep.mubr.f32.mxu0 0.0
      %2007 = vmatmul.mubr.f32.gmra.mrb[0].mxu0 %v1810
      %v2008 = vpop.f32.mrb[0].mxu0
      %v2009 = vadd.f32 0.0, %v2008
      %v2010 = vpop.f32.mrb[0].mxu0
      %2011 = vmatprep.mubr.f32.mxu0 0.0
      %2012 = vmatmul.mubr.f32.gmra.mrb[0].mxu0 %v1813
      %v2013 = vpop.f32.mrb[0].mxu0
      %v2014 = vadd.f32 0.0, %v2013
      %v2015 = vpop.f32.mrb[0].mxu0
      %2016 = vmatprep.mubr.f32.mxu0 0.0
      %2017 = vmatmul.mubr.f32.gmra.mrb[0].mxu0 %v1816
      %v2018 = vpop.f32.mrb[0].mxu0
      %v2019 = vadd.f32 0.0, %v2018
      %v2020 = vpop.f32.mrb[0].mxu0
      %2021 = vmatprep.mubr.f32.mxu0 0.0
      %2022 = vmatmul.mubr.f32.gmra.mrb[0].mxu0 %v1819
      %v2023 = vpop.f32.mrb[0].mxu0
      %v2024 = vadd.f32 0.0, %v2023
      %v2025 = vpop.f32.mrb[0].mxu0
      %2026 = vmatprep.mubr.f32.mxu0 0.0
      %2027 = vmatmul.mubr.f32.gmra.mrb[0].mxu0 %v1822
      %v2028 = vpop.f32.mrb[0].mxu0
      %v2029 = vadd.f32 0.0, %v2028
      %v2030 = vpop.f32.mrb[0].mxu0
      %2031 = vmatprep.mubr.f32.mxu0 0.0
      %2032 = vmatmul.mubr.f32.gmra.mrb[0].mxu0 %v1825
      %v2033 = vpop.f32.mrb[0].mxu0
      %v2034 = vadd.f32 0.0, %v2033
      %v2035 = vpop.f32.mrb[0].mxu0
      %2036 = vmatprep.mubr.f32.mxu0 0.0
      %2037 = vmatmul.mubr.f32.gmra.mrb[0].mxu0 %v1828
      %v2038 = vpop.f32.mrb[0].mxu0
      %v2039 = vadd.f32 0.0, %v2038
      %v2040 = vpop.f32.mrb[0].mxu0
      %2041 = vmatprep.mubr.f32.mxu0 0.0
      %2042 = vmatmul.mubr.f32.gmra.mrb[0].mxu0 %v1831
      %v2043 = vpop.f32.mrb[0].mxu0
      %v2044 = vadd.f32 0.0, %v2043
      %v2045 = vpop.f32.mrb[0].mxu0
      %2046 = vmatprep.mubr.f32.mxu0 0.0
      %2047 = vmatmul.mubr.f32.gmra.mrb[0].mxu0 %v1834
      %v2048 = vpop.f32.mrb[0].mxu0
      %v2049 = vadd.f32 0.0, %v2048
      %v2050 = vpop.f32.mrb[0].mxu0
      %2051 = vmatprep.mubr.f32.mxu0 0.0
      %2052 = vmatmul.mubr.f32.gmra.mrb[0].mxu0 %v1837
      %v2053 = vpop.f32.mrb[0].mxu0
      %v2054 = vadd.f32 0.0, %v2053
      %v2055 = vpop.f32.mrb[0].mxu0
      %2056 = vmatprep.mubr.f32.mxu0 0.0
      %2057 = vmatmul.mubr.f32.gmra.mrb[0].mxu0 %v1840
      %v2058 = vpop.f32.mrb[0].mxu0
      %v2059 = vadd.f32 0.0, %v2058
      %v2060 = vpop.f32.mrb[0].mxu0
      %2061 = vmatprep.mubr.f32.mxu0 0.0
      %2062 = vmatmul.mubr.f32.gmra.mrb[0].mxu0 %v1843
      %v2063 = vpop.f32.mrb[0].mxu0
      %v2064 = vadd.f32 0.0, %v2063
      %v2065 = vpop.f32.mrb[0].mxu0
      %2066 = vmatprep.mubr.f32.mxu0 0.0
      %2067 = vmatmul.mubr.f32.gmra.mrb[0].mxu0 %v1846
      %v2068 = vpop.f32.mrb[0].mxu0
      %v2069 = vadd.f32 0.0, %v2068
      %v2070 = vpop.f32.mrb[0].mxu0
      %2071 = vmatprep.mubr.f32.mxu0 0.0
      %2072 = vmatmul.mubr.f32.gmra.mrb[0].mxu0 %v1849
      %v2073 = vpop.f32.mrb[0].mxu0
      %v2074 = vadd.f32 0.0, %v2073
      %v2075 = vpop.f32.mrb[0].mxu0
      %2076 = vmatprep.mubr.f32.mxu0 0.0
      %2077 = vmatmul.mubr.f32.gmra.mrb[0].mxu0 %v1852
      %v2078 = vpop.f32.mrb[0].mxu0
      %v2079 = vadd.f32 0.0, %v2078
      %v2080 = vpop.f32.mrb[0].mxu0
      %2081 = vdwg.mxu0
      %v2082 = vadd.f32 %v1404, %v1924
      %v2083 = vadd.f32 %v1409, %v1929
      %v2084 = vadd.f32 %v1414, %v1934
      %v2085 = vadd.f32 %v1419, %v1939
      %v2086 = vadd.f32 %v1424, %v1944
      %v2087 = vadd.f32 %v1429, %v1949
      %v2088 = vadd.f32 %v1434, %v1954
      %v2089 = vadd.f32 %v1439, %v1959
      %v2090 = vadd.f32 %v1444, %v1964
      %v2091 = vadd.f32 %v1449, %v1969
      %v2092 = vadd.f32 %v1454, %v1974
      %v2093 = vadd.f32 %v1459, %v1979
      %v2094 = vadd.f32 %v1464, %v1984
      %v2095 = vadd.f32 %v1469, %v1989
      %v2096 = vadd.f32 %v1474, %v1994
      %v2097 = vadd.f32 %v1479, %v1999
      %v2098 = vadd.f32 %v1484, %v2004
      %v2099 = vadd.f32 %v1489, %v2009
      %v2100 = vadd.f32 %v1494, %v2014
      %v2101 = vadd.f32 %v1499, %v2019
      %v2102 = vadd.f32 %v1504, %v2024
      %v2103 = vadd.f32 %v1509, %v2029
      %v2104 = vadd.f32 %v1514, %v2034
      %v2105 = vadd.f32 %v1519, %v2039
      %v2106 = vadd.f32 %v1524, %v2044
      %v2107 = vadd.f32 %v1529, %v2049
      %v2108 = vadd.f32 %v1534, %v2054
      %v2109 = vadd.f32 %v1539, %v2059
      %v2110 = vadd.f32 %v1544, %v2064
      %v2111 = vadd.f32 %v1549, %v2069
      %v2112 = vadd.f32 %v1554, %v2074
      %v2113 = vadd.f32 %v1559, %v2079
      %v2115 = vrot.slane %v231, 7
      %v2118 = vrot.slane %v230, 7
      %v2119 = vsel %vm749, %v716, %v2118
      %v2120 = vsel %vm749, %v2118, %v2115
      %v2124 = vsel %vm749, %v2115, %v753
      %v2125 = vsel %vm877, %v2124, 0.0
      %v2126 = vsel %vm878, %v756, 0.0
      %v2127 = vsel %vm879, %v758, 0.0
      %v2128 = vsel %vm880, %v760, 0.0
      %v2129 = vsel %vm881, %v762, 0.0
      %v2130 = vsel %vm882, %v764, 0.0
      %v2131 = vsel %vm883, %v766, 0.0
      %v2132 = vsel %vm884, %v768, 0.0
      %v2133 = vsel %vm885, %v770, 0.0
      %v2134 = vsel %vm886, %v772, 0.0
      %v2135 = vsel %vm887, %v774, 0.0
      %v2136 = vsel %vm888, %v776, 0.0
      %v2137 = vsel %vm889, %v778, 0.0
      %v2138 = vsel %vm890, %v780, 0.0
      %v2139 = vsel %vm891, %v782, 0.0
      %v2140 = vsel %vm892, %v784, 0.0
      %v2141 = vsel %vm893, %v786, 0.0
      %v2142 = vsel %vm894, %v788, 0.0
      %v2143 = vsel %vm895, %v790, 0.0
      %v2144 = vsel %vm896, %v792, 0.0
      %v2145 = vsel %vm897, %v794, 0.0
      %v2146 = vsel %vm898, %v796, 0.0
      %v2147 = vsel %vm899, %v798, 0.0
      %v2148 = vsel %vm900, %v800, 0.0
      %v2149 = vsel %vm901, %v802, 0.0
      %v2150 = vsel %vm902, %v804, 0.0
      %v2151 = vsel %vm903, %v806, 0.0
      %v2152 = vsel %vm904, %v808, 0.0
      %v2153 = vsel %vm905, %v810, 0.0
      %v2154 = vsel %vm906, %v811, 0.0
      %v2155 = vsel %vm907, %v2119, 0.0
      %v2156 = vsel %vm908, %v2120, 0.0
      %s2157 = scalar_lea.vmem %s1, 12
      %v2158 = vld [vmem:[%s2157] sm:$0xf]
      %v2160 = vsel %vm944, %v2125, 0
      %v2163 = vsel %vm944, %v2126, 0
      %v2166 = vsel %vm944, %v2127, 0
      %v2169 = vsel %vm944, %v2128, 0
      %v2172 = vsel %vm944, %v2129, 0
      %v2175 = vsel %vm944, %v2130, 0
      %v2178 = vsel %vm944, %v2131, 0
      %v2181 = vsel %vm944, %v2132, 0
      %v2184 = vsel %vm944, %v2133, 0
      %v2187 = vsel %vm944, %v2134, 0
      %v2190 = vsel %vm944, %v2135, 0
      %v2193 = vsel %vm944, %v2136, 0
      %v2196 = vsel %vm944, %v2137, 0
      %v2199 = vsel %vm944, %v2138, 0
      %v2202 = vsel %vm944, %v2139, 0
      %v2205 = vsel %vm944, %v2140, 0
      %v2208 = vsel %vm944, %v2141, 0
      %v2211 = vsel %vm944, %v2142, 0
      %v2214 = vsel %vm944, %v2143, 0
      %v2217 = vsel %vm944, %v2144, 0
      %v2220 = vsel %vm944, %v2145, 0
      %v2223 = vsel %vm944, %v2146, 0
      %v2226 = vsel %vm944, %v2147, 0
      %v2229 = vsel %vm944, %v2148, 0
      %v2232 = vsel %vm944, %v2149, 0
      %v2235 = vsel %vm944, %v2150, 0
      %v2238 = vsel %vm944, %v2151, 0
      %v2241 = vsel %vm944, %v2152, 0
      %v2244 = vsel %vm944, %v2153, 0
      %v2247 = vsel %vm944, %v2154, 0
      %v2250 = vsel %vm944, %v2155, 0
      %v2253 = vsel %vm944, %v2156, 0
      %v2256 = vsel %vm1009, %v2158, 0
      %2258 = vmatprep.subr.mxu0 0.0
      %2259 = vmatpush1.msra.mxu0 %v2256
      %2260 = vmatprep.subr.mxu0 0.0
      %2261 = vmatpush1.msra.mxu0 0.0
      %2262 = vmatprep.subr.mxu0 0.0
      %2263 = vmatpush1.msra.mxu0 0.0
      %2264 = vmatprep.subr.mxu0 0.0
      %2265 = vmatpush1.msra.mxu0 0.0
      %2266 = vmatprep.subr.mxu0 0.0
      %2267 = vmatpush1.msra.mxu0 0.0
      %2268 = vmatprep.subr.mxu0 0.0
      %2269 = vmatpush1.msra.mxu0 0.0
      %2270 = vmatprep.subr.mxu0 0.0
      %2271 = vmatpush1.msra.mxu0 0.0
      %2272 = vmatprep.subr.mxu0 0.0
      %2273 = vmatpush1.msra.mxu0 0.0
      %2274 = vmatprep.subr.mxu0 0.0
      %2275 = vmatpush1.msra.mxu0 0.0
      %2276 = vmatprep.subr.mxu0 0.0
      %2277 = vmatpush1.msra.mxu0 0.0
      %2278 = vmatprep.subr.mxu0 0.0
      %2279 = vmatpush1.msra.mxu0 0.0
      %2280 = vmatprep.subr.mxu0 0.0
      %2281 = vmatpush1.msra.mxu0 0.0
      %2282 = vmatprep.subr.mxu0 0.0
      %2283 = vmatpush1.msra.mxu0 0.0
      %2284 = vmatprep.subr.mxu0 0.0
      %2285 = vmatpush1.msra.mxu0 0.0
      %2286 = vmatprep.subr.mxu0 0.0
      %2287 = vmatpush1.msra.mxu0 0.0
      %2288 = vmatprep.subr.mxu0 0.0
      %2289 = vmatpush1.msra.mxu0 0.0
      %2290 = vmatprep.subr.mxu0 0.0
      %2291 = vmatpush1.msra.mxu0 0.0
      %2292 = vmatprep.subr.mxu0 0.0
      %2293 = vmatpush1.msra.mxu0 0.0
      %2294 = vmatprep.subr.mxu0 0.0
      %2295 = vmatpush1.msra.mxu0 0.0
      %2296 = vmatprep.subr.mxu0 0.0
      %2297 = vmatpush1.msra.mxu0 0.0
      %2298 = vmatprep.subr.mxu0 0.0
      %2299 = vmatpush1.msra.mxu0 0.0
      %2300 = vmatprep.subr.mxu0 0.0
      %2301 = vmatpush1.msra.mxu0 0.0
      %2302 = vmatprep.subr.mxu0 0.0
      %2303 = vmatpush1.msra.mxu0 0.0
      %2304 = vmatprep.subr.mxu0 0.0
      %2305 = vmatpush1.msra.mxu0 0.0
      %2306 = vmatprep.subr.mxu0 0.0
      %2307 = vmatpush1.msra.mxu0 0.0
      %2308 = vmatprep.subr.mxu0 0.0
      %2309 = vmatpush1.msra.mxu0 0.0
      %2310 = vmatprep.subr.mxu0 0.0
      %2311 = vmatpush1.msra.mxu0 0.0
      %2312 = vmatprep.subr.mxu0 0.0
      %2313 = vmatpush1.msra.mxu0 0.0
      %2314 = vmatprep.subr.mxu0 0.0
      %2315 = vmatpush1.msra.mxu0 0.0
      %2316 = vmatprep.subr.mxu0 0.0
      %2317 = vmatpush1.msra.mxu0 0.0
      %2318 = vmatprep.subr.mxu0 0.0
      %2319 = vmatpush1.msra.mxu0 0.0
      %2320 = vmatprep.subr.mxu0 0.0
      %2321 = vmatpush1.msra.mxu0 0.0
      %2322 = vmatprep.mubr.f32.mxu0 0.0
      %2323 = vmatmul.mubr.f32.gmra.mrb[0].mxu0 %v2160
      %v2324 = vpop.f32.mrb[0].mxu0
      %v2325 = vadd.f32 0.0, %v2324
      %v2326 = vpop.f32.mrb[0].mxu0
      %2327 = vmatprep.mubr.f32.mxu0 0.0
      %2328 = vmatmul.mubr.f32.gmra.mrb[0].mxu0 %v2163
      %v2329 = vpop.f32.mrb[0].mxu0
      %v2330 = vadd.f32 0.0, %v2329
      %v2331 = vpop.f32.mrb[0].mxu0
      %2332 = vmatprep.mubr.f32.mxu0 0.0
      %2333 = vmatmul.mubr.f32.gmra.mrb[0].mxu0 %v2166
      %v2334 = vpop.f32.mrb[0].mxu0
      %v2335 = vadd.f32 0.0, %v2334
      %v2336 = vpop.f32.mrb[0].mxu0
      %2337 = vmatprep.mubr.f32.mxu0 0.0
      %2338 = vmatmul.mubr.f32.gmra.mrb[0].mxu0 %v2169
      %v2339 = vpop.f32.mrb[0].mxu0
      %v2340 = vadd.f32 0.0, %v2339
      %v2341 = vpop.f32.mrb[0].mxu0
      %2342 = vmatprep.mubr.f32.mxu0 0.0
      %2343 = vmatmul.mubr.f32.gmra.mrb[0].mxu0 %v2172
      %v2344 = vpop.f32.mrb[0].mxu0
      %v2345 = vadd.f32 0.0, %v2344
      %v2346 = vpop.f32.mrb[0].mxu0
      %2347 = vmatprep.mubr.f32.mxu0 0.0
      %2348 = vmatmul.mubr.f32.gmra.mrb[0].mxu0 %v2175
      %v2349 = vpop.f32.mrb[0].mxu0
      %v2350 = vadd.f32 0.0, %v2349
      %v2351 = vpop.f32.mrb[0].mxu0
      %2352 = vmatprep.mubr.f32.mxu0 0.0
      %2353 = vmatmul.mubr.f32.gmra.mrb[0].mxu0 %v2178
      %v2354 = vpop.f32.mrb[0].mxu0
      %v2355 = vadd.f32 0.0, %v2354
      %v2356 = vpop.f32.mrb[0].mxu0
      %2357 = vmatprep.mubr.f32.mxu0 0.0
      %2358 = vmatmul.mubr.f32.gmra.mrb[0].mxu0 %v2181
      %v2359 = vpop.f32.mrb[0].mxu0
      %v2360 = vadd.f32 0.0, %v2359
      %v2361 = vpop.f32.mrb[0].mxu0
      %2362 = vmatprep.mubr.f32.mxu0 0.0
      %2363 = vmatmul.mubr.f32.gmra.mrb[0].mxu0 %v2184
      %v2364 = vpop.f32.mrb[0].mxu0
      %v2365 = vadd.f32 0.0, %v2364
      %v2366 = vpop.f32.mrb[0].mxu0
      %2367 = vmatprep.mubr.f32.mxu0 0.0
      %2368 = vmatmul.mubr.f32.gmra.mrb[0].mxu0 %v2187
      %v2369 = vpop.f32.mrb[0].mxu0
      %v2370 = vadd.f32 0.0, %v2369
      %v2371 = vpop.f32.mrb[0].mxu0
      %2372 = vmatprep.mubr.f32.mxu0 0.0
      %2373 = vmatmul.mubr.f32.gmra.mrb[0].mxu0 %v2190
      %v2374 = vpop.f32.mrb[0].mxu0
      %v2375 = vadd.f32 0.0, %v2374
      %v2376 = vpop.f32.mrb[0].mxu0
      %2377 = vmatprep.mubr.f32.mxu0 0.0
      %2378 = vmatmul.mubr.f32.gmra.mrb[0].mxu0 %v2193
      %v2379 = vpop.f32.mrb[0].mxu0
      %v2380 = vadd.f32 0.0, %v2379
      %v2381 = vpop.f32.mrb[0].mxu0
      %2382 = vmatprep.mubr.f32.mxu0 0.0
      %2383 = vmatmul.mubr.f32.gmra.mrb[0].mxu0 %v2196
      %v2384 = vpop.f32.mrb[0].mxu0
      %v2385 = vadd.f32 0.0, %v2384
      %v2386 = vpop.f32.mrb[0].mxu0
      %2387 = vmatprep.mubr.f32.mxu0 0.0
      %2388 = vmatmul.mubr.f32.gmra.mrb[0].mxu0 %v2199
      %v2389 = vpop.f32.mrb[0].mxu0
      %v2390 = vadd.f32 0.0, %v2389
      %v2391 = vpop.f32.mrb[0].mxu0
      %2392 = vmatprep.mubr.f32.mxu0 0.0
      %2393 = vmatmul.mubr.f32.gmra.mrb[0].mxu0 %v2202
      %v2394 = vpop.f32.mrb[0].mxu0
      %v2395 = vadd.f32 0.0, %v2394
      %v2396 = vpop.f32.mrb[0].mxu0
      %2397 = vmatprep.mubr.f32.mxu0 0.0
      %2398 = vmatmul.mubr.f32.gmra.mrb[0].mxu0 %v2205
      %v2399 = vpop.f32.mrb[0].mxu0
      %v2400 = vadd.f32 0.0, %v2399
      %v2401 = vpop.f32.mrb[0].mxu0
      %2402 = vmatprep.mubr.f32.mxu0 0.0
      %2403 = vmatmul.mubr.f32.gmra.mrb[0].mxu0 %v2208
      %v2404 = vpop.f32.mrb[0].mxu0
      %v2405 = vadd.f32 0.0, %v2404
      %v2406 = vpop.f32.mrb[0].mxu0
      %2407 = vmatprep.mubr.f32.mxu0 0.0
      %2408 = vmatmul.mubr.f32.gmra.mrb[0].mxu0 %v2211
      %v2409 = vpop.f32.mrb[0].mxu0
      %v2410 = vadd.f32 0.0, %v2409
      %v2411 = vpop.f32.mrb[0].mxu0
      %2412 = vmatprep.mubr.f32.mxu0 0.0
      %2413 = vmatmul.mubr.f32.gmra.mrb[0].mxu0 %v2214
      %v2414 = vpop.f32.mrb[0].mxu0
      %v2415 = vadd.f32 0.0, %v2414
      %v2416 = vpop.f32.mrb[0].mxu0
      %2417 = vmatprep.mubr.f32.mxu0 0.0
      %2418 = vmatmul.mubr.f32.gmra.mrb[0].mxu0 %v2217
      %v2419 = vpop.f32.mrb[0].mxu0
      %v2420 = vadd.f32 0.0, %v2419
      %v2421 = vpop.f32.mrb[0].mxu0
      %2422 = vmatprep.mubr.f32.mxu0 0.0
      %2423 = vmatmul.mubr.f32.gmra.mrb[0].mxu0 %v2220
      %v2424 = vpop.f32.mrb[0].mxu0
      %v2425 = vadd.f32 0.0, %v2424
      %v2426 = vpop.f32.mrb[0].mxu0
      %2427 = vmatprep.mubr.f32.mxu0 0.0
      %2428 = vmatmul.mubr.f32.gmra.mrb[0].mxu0 %v2223
      %v2429 = vpop.f32.mrb[0].mxu0
      %v2430 = vadd.f32 0.0, %v2429
      %v2431 = vpop.f32.mrb[0].mxu0
      %2432 = vmatprep.mubr.f32.mxu0 0.0
      %2433 = vmatmul.mubr.f32.gmra.mrb[0].mxu0 %v2226
      %v2434 = vpop.f32.mrb[0].mxu0
      %v2435 = vadd.f32 0.0, %v2434
      %v2436 = vpop.f32.mrb[0].mxu0
      %2437 = vmatprep.mubr.f32.mxu0 0.0
      %2438 = vmatmul.mubr.f32.gmra.mrb[0].mxu0 %v2229
      %v2439 = vpop.f32.mrb[0].mxu0
      %v2440 = vadd.f32 0.0, %v2439
      %v2441 = vpop.f32.mrb[0].mxu0
      %2442 = vmatprep.mubr.f32.mxu0 0.0
      %2443 = vmatmul.mubr.f32.gmra.mrb[0].mxu0 %v2232
      %v2444 = vpop.f32.mrb[0].mxu0
      %v2445 = vadd.f32 0.0, %v2444
      %v2446 = vpop.f32.mrb[0].mxu0
      %2447 = vmatprep.mubr.f32.mxu0 0.0
      %2448 = vmatmul.mubr.f32.gmra.mrb[0].mxu0 %v2235
      %v2449 = vpop.f32.mrb[0].mxu0
      %v2450 = vadd.f32 0.0, %v2449
      %v2451 = vpop.f32.mrb[0].mxu0
      %2452 = vmatprep.mubr.f32.mxu0 0.0
      %2453 = vmatmul.mubr.f32.gmra.mrb[0].mxu0 %v2238
      %v2454 = vpop.f32.mrb[0].mxu0
      %v2455 = vadd.f32 0.0, %v2454
      %v2456 = vpop.f32.mrb[0].mxu0
      %2457 = vmatprep.mubr.f32.mxu0 0.0
      %2458 = vmatmul.mubr.f32.gmra.mrb[0].mxu0 %v2241
      %v2459 = vpop.f32.mrb[0].mxu0
      %v2460 = vadd.f32 0.0, %v2459
      %v2461 = vpop.f32.mrb[0].mxu0
      %2462 = vmatprep.mubr.f32.mxu0 0.0
      %2463 = vmatmul.mubr.f32.gmra.mrb[0].mxu0 %v2244
      %v2464 = vpop.f32.mrb[0].mxu0
      %v2465 = vadd.f32 0.0, %v2464
      %v2466 = vpop.f32.mrb[0].mxu0
      %2467 = vmatprep.mubr.f32.mxu0 0.0
      %2468 = vmatmul.mubr.f32.gmra.mrb[0].mxu0 %v2247
      %v2469 = vpop.f32.mrb[0].mxu0
      %v2470 = vadd.f32 0.0, %v2469
      %v2471 = vpop.f32.mrb[0].mxu0
      %2472 = vmatprep.mubr.f32.mxu0 0.0
      %2473 = vmatmul.mubr.f32.gmra.mrb[0].mxu0 %v2250
      %v2474 = vpop.f32.mrb[0].mxu0
      %v2475 = vadd.f32 0.0, %v2474
      %v2476 = vpop.f32.mrb[0].mxu0
      %2477 = vmatprep.mubr.f32.mxu0 0.0
      %2478 = vmatmul.mubr.f32.gmra.mrb[0].mxu0 %v2253
      %v2479 = vpop.f32.mrb[0].mxu0
      %v2480 = vadd.f32 0.0, %v2479
      %v2481 = vpop.f32.mrb[0].mxu0
      %2482 = vdwg.mxu0
      %v2483 = vadd.f32 %v2082, %v2325
      %v2484 = vadd.f32 %v2083, %v2330
      %v2485 = vadd.f32 %v2084, %v2335
      %v2486 = vadd.f32 %v2085, %v2340
      %v2487 = vadd.f32 %v2086, %v2345
      %v2488 = vadd.f32 %v2087, %v2350
      %v2489 = vadd.f32 %v2088, %v2355
      %v2490 = vadd.f32 %v2089, %v2360
      %v2491 = vadd.f32 %v2090, %v2365
      %v2492 = vadd.f32 %v2091, %v2370
      %v2493 = vadd.f32 %v2092, %v2375
      %v2494 = vadd.f32 %v2093, %v2380
      %v2495 = vadd.f32 %v2094, %v2385
      %v2496 = vadd.f32 %v2095, %v2390
      %v2497 = vadd.f32 %v2096, %v2395
      %v2498 = vadd.f32 %v2097, %v2400
      %v2499 = vadd.f32 %v2098, %v2405
      %v2500 = vadd.f32 %v2099, %v2410
      %v2501 = vadd.f32 %v2100, %v2415
      %v2502 = vadd.f32 %v2101, %v2420
      %v2503 = vadd.f32 %v2102, %v2425
      %v2504 = vadd.f32 %v2103, %v2430
      %v2505 = vadd.f32 %v2104, %v2435
      %v2506 = vadd.f32 %v2105, %v2440
      %v2507 = vadd.f32 %v2106, %v2445
      %v2508 = vadd.f32 %v2107, %v2450
      %v2509 = vadd.f32 %v2108, %v2455
      %v2510 = vadd.f32 %v2109, %v2460
      %v2511 = vadd.f32 %v2110, %v2465
      %v2512 = vadd.f32 %v2111, %v2470
      %v2513 = vadd.f32 %v2112, %v2475
      %v2514 = vadd.f32 %v2113, %v2480
      %s2515 = scalar_lea.vmem %s1, 16
      %v2516 = vld [vmem:[%s2515] sm:$0xf]
      %v2517 = vsel %vm944, %v230, 0
      %v2519 = vsel %vm944, %v231, 0
      %v2522 = vsel %vm1009, %v2516, 0
      %2524 = vmatprep.subr.mxu0 0.0
      %2525 = vmatpush1.msra.mxu0 %v2522
      %2526 = vmatprep.subr.mxu0 0.0
      %2527 = vmatpush1.msra.mxu0 0.0
      %2528 = vmatprep.subr.mxu0 0.0
      %2529 = vmatpush1.msra.mxu0 0.0
      %2530 = vmatprep.subr.mxu0 0.0
      %2531 = vmatpush1.msra.mxu0 0.0
      %2532 = vmatprep.subr.mxu0 0.0
      %2533 = vmatpush1.msra.mxu0 0.0
      %2534 = vmatprep.subr.mxu0 0.0
      %2535 = vmatpush1.msra.mxu0 0.0
      %2536 = vmatprep.subr.mxu0 0.0
      %2537 = vmatpush1.msra.mxu0 0.0
      %2538 = vmatprep.subr.mxu0 0.0
      %2539 = vmatpush1.msra.mxu0 0.0
      %2540 = vmatprep.subr.mxu0 0.0
      %2541 = vmatpush1.msra.mxu0 0.0
      %2542 = vmatprep.subr.mxu0 0.0
      %2543 = vmatpush1.msra.mxu0 0.0
      %2544 = vmatprep.subr.mxu0 0.0
      %2545 = vmatpush1.msra.mxu0 0.0
      %2546 = vmatprep.subr.mxu0 0.0
      %2547 = vmatpush1.msra.mxu0 0.0
      %2548 = vmatprep.subr.mxu0 0.0
      %2549 = vmatpush1.msra.mxu0 0.0
      %2550 = vmatprep.subr.mxu0 0.0
      %2551 = vmatpush1.msra.mxu0 0.0
      %2552 = vmatprep.subr.mxu0 0.0
      %2553 = vmatpush1.msra.mxu0 0.0
      %2554 = vmatprep.subr.mxu0 0.0
      %2555 = vmatpush1.msra.mxu0 0.0
      %2556 = vmatprep.subr.mxu0 0.0
      %2557 = vmatpush1.msra.mxu0 0.0
      %2558 = vmatprep.subr.mxu0 0.0
      %2559 = vmatpush1.msra.mxu0 0.0
      %2560 = vmatprep.subr.mxu0 0.0
      %2561 = vmatpush1.msra.mxu0 0.0
      %2562 = vmatprep.subr.mxu0 0.0
      %2563 = vmatpush1.msra.mxu0 0.0
      %2564 = vmatprep.subr.mxu0 0.0
      %2565 = vmatpush1.msra.mxu0 0.0
      %2566 = vmatprep.subr.mxu0 0.0
      %2567 = vmatpush1.msra.mxu0 0.0
      %2568 = vmatprep.subr.mxu0 0.0
      %2569 = vmatpush1.msra.mxu0 0.0
      %2570 = vmatprep.subr.mxu0 0.0
      %2571 = vmatpush1.msra.mxu0 0.0
      %2572 = vmatprep.subr.mxu0 0.0
      %2573 = vmatpush1.msra.mxu0 0.0
      %2574 = vmatprep.subr.mxu0 0.0
      %2575 = vmatpush1.msra.mxu0 0.0
      %2576 = vmatprep.subr.mxu0 0.0
      %2577 = vmatpush1.msra.mxu0 0.0
      %2578 = vmatprep.subr.mxu0 0.0
      %2579 = vmatpush1.msra.mxu0 0.0
      %2580 = vmatprep.subr.mxu0 0.0
      %2581 = vmatpush1.msra.mxu0 0.0
      %2582 = vmatprep.subr.mxu0 0.0
      %2583 = vmatpush1.msra.mxu0 0.0
      %2584 = vmatprep.subr.mxu0 0.0
      %2585 = vmatpush1.msra.mxu0 0.0
      %2586 = vmatprep.subr.mxu0 0.0
      %2587 = vmatpush1.msra.mxu0 0.0
      %2588 = vmatprep.mubr.f32.mxu0 0.0
      %2589 = vmatmul.mubr.f32.gmra.mrb[0].mxu0 %v949
      %v2590 = vpop.f32.mrb[0].mxu0
      %v2591 = vadd.f32 0.0, %v2590
      %v2592 = vpop.f32.mrb[0].mxu0
      %2593 = vmatprep.mubr.f32.mxu0 0.0
      %2594 = vmatmul.mubr.f32.gmra.mrb[0].mxu0 %v951
      %v2595 = vpop.f32.mrb[0].mxu0
      %v2596 = vadd.f32 0.0, %v2595
      %v2597 = vpop.f32.mrb[0].mxu0
      %2598 = vmatprep.mubr.f32.mxu0 0.0
      %2599 = vmatmul.mubr.f32.gmra.mrb[0].mxu0 %v953
      %v2600 = vpop.f32.mrb[0].mxu0
      %v2601 = vadd.f32 0.0, %v2600
      %v2602 = vpop.f32.mrb[0].mxu0
      %2603 = vmatprep.mubr.f32.mxu0 0.0
      %2604 = vmatmul.mubr.f32.gmra.mrb[0].mxu0 %v955
      %v2605 = vpop.f32.mrb[0].mxu0
      %v2606 = vadd.f32 0.0, %v2605
      %v2607 = vpop.f32.mrb[0].mxu0
      %2608 = vmatprep.mubr.f32.mxu0 0.0
      %2609 = vmatmul.mubr.f32.gmra.mrb[0].mxu0 %v957
      %v2610 = vpop.f32.mrb[0].mxu0
      %v2611 = vadd.f32 0.0, %v2610
      %v2612 = vpop.f32.mrb[0].mxu0
      %2613 = vmatprep.mubr.f32.mxu0 0.0
      %2614 = vmatmul.mubr.f32.gmra.mrb[0].mxu0 %v959
      %v2615 = vpop.f32.mrb[0].mxu0
      %v2616 = vadd.f32 0.0, %v2615
      %v2617 = vpop.f32.mrb[0].mxu0
      %2618 = vmatprep.mubr.f32.mxu0 0.0
      %2619 = vmatmul.mubr.f32.gmra.mrb[0].mxu0 %v961
      %v2620 = vpop.f32.mrb[0].mxu0
      %v2621 = vadd.f32 0.0, %v2620
      %v2622 = vpop.f32.mrb[0].mxu0
      %2623 = vmatprep.mubr.f32.mxu0 0.0
      %2624 = vmatmul.mubr.f32.gmra.mrb[0].mxu0 %v963
      %v2625 = vpop.f32.mrb[0].mxu0
      %v2626 = vadd.f32 0.0, %v2625
      %v2627 = vpop.f32.mrb[0].mxu0
      %2628 = vmatprep.mubr.f32.mxu0 0.0
      %2629 = vmatmul.mubr.f32.gmra.mrb[0].mxu0 %v965
      %v2630 = vpop.f32.mrb[0].mxu0
      %v2631 = vadd.f32 0.0, %v2630
      %v2632 = vpop.f32.mrb[0].mxu0
      %2633 = vmatprep.mubr.f32.mxu0 0.0
      %2634 = vmatmul.mubr.f32.gmra.mrb[0].mxu0 %v967
      %v2635 = vpop.f32.mrb[0].mxu0
      %v2636 = vadd.f32 0.0, %v2635
      %v2637 = vpop.f32.mrb[0].mxu0
      %2638 = vmatprep.mubr.f32.mxu0 0.0
      %2639 = vmatmul.mubr.f32.gmra.mrb[0].mxu0 %v969
      %v2640 = vpop.f32.mrb[0].mxu0
      %v2641 = vadd.f32 0.0, %v2640
      %v2642 = vpop.f32.mrb[0].mxu0
      %2643 = vmatprep.mubr.f32.mxu0 0.0
      %2644 = vmatmul.mubr.f32.gmra.mrb[0].mxu0 %v971
      %v2645 = vpop.f32.mrb[0].mxu0
      %v2646 = vadd.f32 0.0, %v2645
      %v2647 = vpop.f32.mrb[0].mxu0
      %2648 = vmatprep.mubr.f32.mxu0 0.0
      %2649 = vmatmul.mubr.f32.gmra.mrb[0].mxu0 %v973
      %v2650 = vpop.f32.mrb[0].mxu0
      %v2651 = vadd.f32 0.0, %v2650
      %v2652 = vpop.f32.mrb[0].mxu0
      %2653 = vmatprep.mubr.f32.mxu0 0.0
      %2654 = vmatmul.mubr.f32.gmra.mrb[0].mxu0 %v975
      %v2655 = vpop.f32.mrb[0].mxu0
      %v2656 = vadd.f32 0.0, %v2655
      %v2657 = vpop.f32.mrb[0].mxu0
      %2658 = vmatprep.mubr.f32.mxu0 0.0
      %2659 = vmatmul.mubr.f32.gmra.mrb[0].mxu0 %v977
      %v2660 = vpop.f32.mrb[0].mxu0
      %v2661 = vadd.f32 0.0, %v2660
      %v2662 = vpop.f32.mrb[0].mxu0
      %2663 = vmatprep.mubr.f32.mxu0 0.0
      %2664 = vmatmul.mubr.f32.gmra.mrb[0].mxu0 %v979
      %v2665 = vpop.f32.mrb[0].mxu0
      %v2666 = vadd.f32 0.0, %v2665
      %v2667 = vpop.f32.mrb[0].mxu0
      %2668 = vmatprep.mubr.f32.mxu0 0.0
      %2669 = vmatmul.mubr.f32.gmra.mrb[0].mxu0 %v981
      %v2670 = vpop.f32.mrb[0].mxu0
      %v2671 = vadd.f32 0.0, %v2670
      %v2672 = vpop.f32.mrb[0].mxu0
      %2673 = vmatprep.mubr.f32.mxu0 0.0
      %2674 = vmatmul.mubr.f32.gmra.mrb[0].mxu0 %v983
      %v2675 = vpop.f32.mrb[0].mxu0
      %v2676 = vadd.f32 0.0, %v2675
      %v2677 = vpop.f32.mrb[0].mxu0
      %2678 = vmatprep.mubr.f32.mxu0 0.0
      %2679 = vmatmul.mubr.f32.gmra.mrb[0].mxu0 %v985
      %v2680 = vpop.f32.mrb[0].mxu0
      %v2681 = vadd.f32 0.0, %v2680
      %v2682 = vpop.f32.mrb[0].mxu0
      %2683 = vmatprep.mubr.f32.mxu0 0.0
      %2684 = vmatmul.mubr.f32.gmra.mrb[0].mxu0 %v987
      %v2685 = vpop.f32.mrb[0].mxu0
      %v2686 = vadd.f32 0.0, %v2685
      %v2687 = vpop.f32.mrb[0].mxu0
      %2688 = vmatprep.mubr.f32.mxu0 0.0
      %2689 = vmatmul.mubr.f32.gmra.mrb[0].mxu0 %v989
      %v2690 = vpop.f32.mrb[0].mxu0
      %v2691 = vadd.f32 0.0, %v2690
      %v2692 = vpop.f32.mrb[0].mxu0
      %2693 = vmatprep.mubr.f32.mxu0 0.0
      %2694 = vmatmul.mubr.f32.gmra.mrb[0].mxu0 %v991
      %v2695 = vpop.f32.mrb[0].mxu0
      %v2696 = vadd.f32 0.0, %v2695
      %v2697 = vpop.f32.mrb[0].mxu0
      %2698 = vmatprep.mubr.f32.mxu0 0.0
      %2699 = vmatmul.mubr.f32.gmra.mrb[0].mxu0 %v993
      %v2700 = vpop.f32.mrb[0].mxu0
      %v2701 = vadd.f32 0.0, %v2700
      %v2702 = vpop.f32.mrb[0].mxu0
      %2703 = vmatprep.mubr.f32.mxu0 0.0
      %2704 = vmatmul.mubr.f32.gmra.mrb[0].mxu0 %v995
      %v2705 = vpop.f32.mrb[0].mxu0
      %v2706 = vadd.f32 0.0, %v2705
      %v2707 = vpop.f32.mrb[0].mxu0
      %2708 = vmatprep.mubr.f32.mxu0 0.0
      %2709 = vmatmul.mubr.f32.gmra.mrb[0].mxu0 %v997
      %v2710 = vpop.f32.mrb[0].mxu0
      %v2711 = vadd.f32 0.0, %v2710
      %v2712 = vpop.f32.mrb[0].mxu0
      %2713 = vmatprep.mubr.f32.mxu0 0.0
      %2714 = vmatmul.mubr.f32.gmra.mrb[0].mxu0 %v999
      %v2715 = vpop.f32.mrb[0].mxu0
      %v2716 = vadd.f32 0.0, %v2715
      %v2717 = vpop.f32.mrb[0].mxu0
      %2718 = vmatprep.mubr.f32.mxu0 0.0
      %2719 = vmatmul.mubr.f32.gmra.mrb[0].mxu0 %v1001
      %v2720 = vpop.f32.mrb[0].mxu0
      %v2721 = vadd.f32 0.0, %v2720
      %v2722 = vpop.f32.mrb[0].mxu0
      %2723 = vmatprep.mubr.f32.mxu0 0.0
      %2724 = vmatmul.mubr.f32.gmra.mrb[0].mxu0 %v1003
      %v2725 = vpop.f32.mrb[0].mxu0
      %v2726 = vadd.f32 0.0, %v2725
      %v2727 = vpop.f32.mrb[0].mxu0
      %2728 = vmatprep.mubr.f32.mxu0 0.0
      %2729 = vmatmul.mubr.f32.gmra.mrb[0].mxu0 %v1005
      %v2730 = vpop.f32.mrb[0].mxu0
      %v2731 = vadd.f32 0.0, %v2730
      %v2732 = vpop.f32.mrb[0].mxu0
      %2733 = vmatprep.mubr.f32.mxu0 0.0
      %2734 = vmatmul.mubr.f32.gmra.mrb[0].mxu0 %v1007
      %v2735 = vpop.f32.mrb[0].mxu0
      %v2736 = vadd.f32 0.0, %v2735
      %v2737 = vpop.f32.mrb[0].mxu0
      %2738 = vmatprep.mubr.f32.mxu0 0.0
      %2739 = vmatmul.mubr.f32.gmra.mrb[0].mxu0 %v2517
      %v2740 = vpop.f32.mrb[0].mxu0
      %v2741 = vadd.f32 0.0, %v2740
      %v2742 = vpop.f32.mrb[0].mxu0
      %2743 = vmatprep.mubr.f32.mxu0 0.0
      %2744 = vmatmul.mubr.f32.gmra.mrb[0].mxu0 %v2519
      %v2745 = vpop.f32.mrb[0].mxu0
      %v2746 = vadd.f32 0.0, %v2745
      %v2747 = vpop.f32.mrb[0].mxu0
      %2748 = vdwg.mxu0
      %v2749 = vadd.f32 %v2483, %v2591
      %v2750 = vadd.f32 %v2484, %v2596
      %v2751 = vadd.f32 %v2485, %v2601
      %v2752 = vadd.f32 %v2486, %v2606
      %v2753 = vadd.f32 %v2487, %v2611
      %v2754 = vadd.f32 %v2488, %v2616
      %v2755 = vadd.f32 %v2489, %v2621
      %v2756 = vadd.f32 %v2490, %v2626
      %v2757 = vadd.f32 %v2491, %v2631
      %v2758 = vadd.f32 %v2492, %v2636
      %v2759 = vadd.f32 %v2493, %v2641
      %v2760 = vadd.f32 %v2494, %v2646
      %v2761 = vadd.f32 %v2495, %v2651
      %v2762 = vadd.f32 %v2496, %v2656
      %v2763 = vadd.f32 %v2497, %v2661
      %v2764 = vadd.f32 %v2498, %v2666
      %v2765 = vadd.f32 %v2499, %v2671
      %v2766 = vadd.f32 %v2500, %v2676
      %v2767 = vadd.f32 %v2501, %v2681
      %v2768 = vadd.f32 %v2502, %v2686
      %v2769 = vadd.f32 %v2503, %v2691
      %v2770 = vadd.f32 %v2504, %v2696
      %v2771 = vadd.f32 %v2505, %v2701
      %v2772 = vadd.f32 %v2506, %v2706
      %v2773 = vadd.f32 %v2507, %v2711
      %v2774 = vadd.f32 %v2508, %v2716
      %v2775 = vadd.f32 %v2509, %v2721
      %v2776 = vadd.f32 %v2510, %v2726
      %v2777 = vadd.f32 %v2511, %v2731
      %v2778 = vadd.f32 %v2512, %v2736
      %v2779 = vadd.f32 %v2513, %v2741
      %v2780 = vadd.f32 %v2514, %v2746
      %v2781 = vrot.slane %v230, 1
      %v2782 = vsel %vm1562, %v1624, %v2781
      %v2783 = vrot.slane %v231, 1
      %v2784 = vsel %vm1562, %v2781, %v2783
      %v2789 = vsel %vm1562, %v2783, %v1566
      %v2790 = vsel %vm1692, %v1569, 0.0
      %v2791 = vsel %vm1693, %v1571, 0.0
      %v2792 = vsel %vm1694, %v1573, 0.0
      %v2793 = vsel %vm1695, %v1575, 0.0
      %v2794 = vsel %vm1696, %v1577, 0.0
      %v2795 = vsel %vm1697, %v1579, 0.0
      %v2796 = vsel %vm1698, %v1581, 0.0
      %v2797 = vsel %vm1699, %v1583, 0.0
      %v2798 = vsel %vm1700, %v1585, 0.0
      %v2799 = vsel %vm1701, %v1587, 0.0
      %v2800 = vsel %vm1702, %v1589, 0.0
      %v2801 = vsel %vm1703, %v1591, 0.0
      %v2802 = vsel %vm1704, %v1593, 0.0
      %v2803 = vsel %vm1705, %v1595, 0.0
      %v2804 = vsel %vm1706, %v1597, 0.0
      %v2805 = vsel %vm1707, %v1599, 0.0
      %v2806 = vsel %vm1708, %v1601, 0.0
      %v2807 = vsel %vm1709, %v1603, 0.0
      %v2808 = vsel %vm1710, %v1605, 0.0
      %v2809 = vsel %vm1711, %v1607, 0.0
      %v2810 = vsel %vm1712, %v1609, 0.0
      %v2811 = vsel %vm1713, %v1611, 0.0
      %v2812 = vsel %vm1714, %v1613, 0.0
      %v2813 = vsel %vm1715, %v1615, 0.0
      %v2814 = vsel %vm1716, %v1617, 0.0
      %v2815 = vsel %vm1717, %v1619, 0.0
      %v2816 = vsel %vm1718, %v1621, 0.0
      %v2817 = vsel %vm1719, %v1623, 0.0
      %v2818 = vsel %vm1720, %v1625, 0.0
      %v2819 = vsel %vm1721, %v2782, 0.0
      %v2820 = vsel %vm1722, %v2784, 0.0
      %v2821 = vsel %vm1723, %v2789, 0.0
      %s2822 = scalar_lea.vmem %s1, 20
      %v2823 = vld [vmem:[%s2822] sm:$0xf]
      %v2825 = vsel %vm944, %v2790, 0
      %v2828 = vsel %vm944, %v2791, 0
      %v2831 = vsel %vm944, %v2792, 0
      %v2834 = vsel %vm944, %v2793, 0
      %v2837 = vsel %vm944, %v2794, 0
      %v2840 = vsel %vm944, %v2795, 0
      %v2843 = vsel %vm944, %v2796, 0
      %v2846 = vsel %vm944, %v2797, 0
      %v2849 = vsel %vm944, %v2798, 0
      %v2852 = vsel %vm944, %v2799, 0
      %v2855 = vsel %vm944, %v2800, 0
      %v2858 = vsel %vm944, %v2801, 0
      %v2861 = vsel %vm944, %v2802, 0
      %v2864 = vsel %vm944, %v2803, 0
      %v2867 = vsel %vm944, %v2804, 0
      %v2870 = vsel %vm944, %v2805, 0
      %v2873 = vsel %vm944, %v2806, 0
      %v2876 = vsel %vm944, %v2807, 0
      %v2879 = vsel %vm944, %v2808, 0
      %v2882 = vsel %vm944, %v2809, 0
      %v2885 = vsel %vm944, %v2810, 0
      %v2888 = vsel %vm944, %v2811, 0
      %v2891 = vsel %vm944, %v2812, 0
      %v2894 = vsel %vm944, %v2813, 0
      %v2897 = vsel %vm944, %v2814, 0
      %v2900 = vsel %vm944, %v2815, 0
      %v2903 = vsel %vm944, %v2816, 0
      %v2906 = vsel %vm944, %v2817, 0
      %v2909 = vsel %vm944, %v2818, 0
      %v2912 = vsel %vm944, %v2819, 0
      %v2915 = vsel %vm944, %v2820, 0
      %v2918 = vsel %vm944, %v2821, 0
      %v2921 = vsel %vm1009, %v2823, 0
      %2923 = vmatprep.subr.mxu0 0.0
      %2924 = vmatpush1.msra.mxu0 %v2921
      %2925 = vmatprep.subr.mxu0 0.0
      %2926 = vmatpush1.msra.mxu0 0.0
      %2927 = vmatprep.subr.mxu0 0.0
      %2928 = vmatpush1.msra.mxu0 0.0
      %2929 = vmatprep.subr.mxu0 0.0
      %2930 = vmatpush1.msra.mxu0 0.0
      %2931 = vmatprep.subr.mxu0 0.0
      %2932 = vmatpush1.msra.mxu0 0.0
      %2933 = vmatprep.subr.mxu0 0.0
      %2934 = vmatpush1.msra.mxu0 0.0
      %2935 = vmatprep.subr.mxu0 0.0
      %2936 = vmatpush1.msra.mxu0 0.0
      %2937 = vmatprep.subr.mxu0 0.0
      %2938 = vmatpush1.msra.mxu0 0.0
      %2939 = vmatprep.subr.mxu0 0.0
      %2940 = vmatpush1.msra.mxu0 0.0
      %2941 = vmatprep.subr.mxu0 0.0
      %2942 = vmatpush1.msra.mxu0 0.0
      %2943 = vmatprep.subr.mxu0 0.0
      %2944 = vmatpush1.msra.mxu0 0.0
      %2945 = vmatprep.subr.mxu0 0.0
      %2946 = vmatpush1.msra.mxu0 0.0
      %2947 = vmatprep.subr.mxu0 0.0
      %2948 = vmatpush1.msra.mxu0 0.0
      %2949 = vmatprep.subr.mxu0 0.0
      %2950 = vmatpush1.msra.mxu0 0.0
      %2951 = vmatprep.subr.mxu0 0.0
      %2952 = vmatpush1.msra.mxu0 0.0
      %2953 = vmatprep.subr.mxu0 0.0
      %2954 = vmatpush1.msra.mxu0 0.0
      %2955 = vmatprep.subr.mxu0 0.0
      %2956 = vmatpush1.msra.mxu0 0.0
      %2957 = vmatprep.subr.mxu0 0.0
      %2958 = vmatpush1.msra.mxu0 0.0
      %2959 = vmatprep.subr.mxu0 0.0
      %2960 = vmatpush1.msra.mxu0 0.0
      %2961 = vmatprep.subr.mxu0 0.0
      %2962 = vmatpush1.msra.mxu0 0.0
      %2963 = vmatprep.subr.mxu0 0.0
      %2964 = vmatpush1.msra.mxu0 0.0
      %2965 = vmatprep.subr.mxu0 0.0
      %2966 = vmatpush1.msra.mxu0 0.0
      %2967 = vmatprep.subr.mxu0 0.0
      %2968 = vmatpush1.msra.mxu0 0.0
      %2969 = vmatprep.subr.mxu0 0.0
      %2970 = vmatpush1.msra.mxu0 0.0
      %2971 = vmatprep.subr.mxu0 0.0
      %2972 = vmatpush1.msra.mxu0 0.0
      %2973 = vmatprep.subr.mxu0 0.0
      %2974 = vmatpush1.msra.mxu0 0.0
      %2975 = vmatprep.subr.mxu0 0.0
      %2976 = vmatpush1.msra.mxu0 0.0
      %2977 = vmatprep.subr.mxu0 0.0
      %2978 = vmatpush1.msra.mxu0 0.0
      %2979 = vmatprep.subr.mxu0 0.0
      %2980 = vmatpush1.msra.mxu0 0.0
      %2981 = vmatprep.subr.mxu0 0.0
      %2982 = vmatpush1.msra.mxu0 0.0
      %2983 = vmatprep.subr.mxu0 0.0
      %2984 = vmatpush1.msra.mxu0 0.0
      %2985 = vmatprep.subr.mxu0 0.0
      %2986 = vmatpush1.msra.mxu0 0.0
      %2987 = vmatprep.mubr.f32.mxu0 0.0
      %2988 = vmatmul.mubr.f32.gmra.mrb[0].mxu0 %v2825
      %v2989 = vpop.f32.mrb[0].mxu0
      %v2990 = vadd.f32 0.0, %v2989
      %v2991 = vpop.f32.mrb[0].mxu0
      %2992 = vmatprep.mubr.f32.mxu0 0.0
      %2993 = vmatmul.mubr.f32.gmra.mrb[0].mxu0 %v2828
      %v2994 = vpop.f32.mrb[0].mxu0
      %v2995 = vadd.f32 0.0, %v2994
      %v2996 = vpop.f32.mrb[0].mxu0
      %2997 = vmatprep.mubr.f32.mxu0 0.0
      %2998 = vmatmul.mubr.f32.gmra.mrb[0].mxu0 %v2831
      %v2999 = vpop.f32.mrb[0].mxu0
      %v3000 = vadd.f32 0.0, %v2999
      %v3001 = vpop.f32.mrb[0].mxu0
      %3002 = vmatprep.mubr.f32.mxu0 0.0
      %3003 = vmatmul.mubr.f32.gmra.mrb[0].mxu0 %v2834
      %v3004 = vpop.f32.mrb[0].mxu0
      %v3005 = vadd.f32 0.0, %v3004
      %v3006 = vpop.f32.mrb[0].mxu0
      %3007 = vmatprep.mubr.f32.mxu0 0.0
      %3008 = vmatmul.mubr.f32.gmra.mrb[0].mxu0 %v2837
      %v3009 = vpop.f32.mrb[0].mxu0
      %v3010 = vadd.f32 0.0, %v3009
      %v3011 = vpop.f32.mrb[0].mxu0
      %3012 = vmatprep.mubr.f32.mxu0 0.0
      %3013 = vmatmul.mubr.f32.gmra.mrb[0].mxu0 %v2840
      %v3014 = vpop.f32.mrb[0].mxu0
      %v3015 = vadd.f32 0.0, %v3014
      %v3016 = vpop.f32.mrb[0].mxu0
      %3017 = vmatprep.mubr.f32.mxu0 0.0
      %3018 = vmatmul.mubr.f32.gmra.mrb[0].mxu0 %v2843
      %v3019 = vpop.f32.mrb[0].mxu0
      %v3020 = vadd.f32 0.0, %v3019
      %v3021 = vpop.f32.mrb[0].mxu0
      %3022 = vmatprep.mubr.f32.mxu0 0.0
      %3023 = vmatmul.mubr.f32.gmra.mrb[0].mxu0 %v2846
      %v3024 = vpop.f32.mrb[0].mxu0
      %v3025 = vadd.f32 0.0, %v3024
      %v3026 = vpop.f32.mrb[0].mxu0
      %3027 = vmatprep.mubr.f32.mxu0 0.0
      %3028 = vmatmul.mubr.f32.gmra.mrb[0].mxu0 %v2849
      %v3029 = vpop.f32.mrb[0].mxu0
      %v3030 = vadd.f32 0.0, %v3029
      %v3031 = vpop.f32.mrb[0].mxu0
      %3032 = vmatprep.mubr.f32.mxu0 0.0
      %3033 = vmatmul.mubr.f32.gmra.mrb[0].mxu0 %v2852
      %v3034 = vpop.f32.mrb[0].mxu0
      %v3035 = vadd.f32 0.0, %v3034
      %v3036 = vpop.f32.mrb[0].mxu0
      %3037 = vmatprep.mubr.f32.mxu0 0.0
      %3038 = vmatmul.mubr.f32.gmra.mrb[0].mxu0 %v2855
      %v3039 = vpop.f32.mrb[0].mxu0
      %v3040 = vadd.f32 0.0, %v3039
      %v3041 = vpop.f32.mrb[0].mxu0
      %3042 = vmatprep.mubr.f32.mxu0 0.0
      %3043 = vmatmul.mubr.f32.gmra.mrb[0].mxu0 %v2858
      %v3044 = vpop.f32.mrb[0].mxu0
      %v3045 = vadd.f32 0.0, %v3044
      %v3046 = vpop.f32.mrb[0].mxu0
      %3047 = vmatprep.mubr.f32.mxu0 0.0
      %3048 = vmatmul.mubr.f32.gmra.mrb[0].mxu0 %v2861
      %v3049 = vpop.f32.mrb[0].mxu0
      %v3050 = vadd.f32 0.0, %v3049
      %v3051 = vpop.f32.mrb[0].mxu0
      %3052 = vmatprep.mubr.f32.mxu0 0.0
      %3053 = vmatmul.mubr.f32.gmra.mrb[0].mxu0 %v2864
      %v3054 = vpop.f32.mrb[0].mxu0
      %v3055 = vadd.f32 0.0, %v3054
      %v3056 = vpop.f32.mrb[0].mxu0
      %3057 = vmatprep.mubr.f32.mxu0 0.0
      %3058 = vmatmul.mubr.f32.gmra.mrb[0].mxu0 %v2867
      %v3059 = vpop.f32.mrb[0].mxu0
      %v3060 = vadd.f32 0.0, %v3059
      %v3061 = vpop.f32.mrb[0].mxu0
      %3062 = vmatprep.mubr.f32.mxu0 0.0
      %3063 = vmatmul.mubr.f32.gmra.mrb[0].mxu0 %v2870
      %v3064 = vpop.f32.mrb[0].mxu0
      %v3065 = vadd.f32 0.0, %v3064
      %v3066 = vpop.f32.mrb[0].mxu0
      %3067 = vmatprep.mubr.f32.mxu0 0.0
      %3068 = vmatmul.mubr.f32.gmra.mrb[0].mxu0 %v2873
      %v3069 = vpop.f32.mrb[0].mxu0
      %v3070 = vadd.f32 0.0, %v3069
      %v3071 = vpop.f32.mrb[0].mxu0
      %3072 = vmatprep.mubr.f32.mxu0 0.0
      %3073 = vmatmul.mubr.f32.gmra.mrb[0].mxu0 %v2876
      %v3074 = vpop.f32.mrb[0].mxu0
      %v3075 = vadd.f32 0.0, %v3074
      %v3076 = vpop.f32.mrb[0].mxu0
      %3077 = vmatprep.mubr.f32.mxu0 0.0
      %3078 = vmatmul.mubr.f32.gmra.mrb[0].mxu0 %v2879
      %v3079 = vpop.f32.mrb[0].mxu0
      %v3080 = vadd.f32 0.0, %v3079
      %v3081 = vpop.f32.mrb[0].mxu0
      %3082 = vmatprep.mubr.f32.mxu0 0.0
      %3083 = vmatmul.mubr.f32.gmra.mrb[0].mxu0 %v2882
      %v3084 = vpop.f32.mrb[0].mxu0
      %v3085 = vadd.f32 0.0, %v3084
      %v3086 = vpop.f32.mrb[0].mxu0
      %3087 = vmatprep.mubr.f32.mxu0 0.0
      %3088 = vmatmul.mubr.f32.gmra.mrb[0].mxu0 %v2885
      %v3089 = vpop.f32.mrb[0].mxu0
      %v3090 = vadd.f32 0.0, %v3089
      %v3091 = vpop.f32.mrb[0].mxu0
      %3092 = vmatprep.mubr.f32.mxu0 0.0
      %3093 = vmatmul.mubr.f32.gmra.mrb[0].mxu0 %v2888
      %v3094 = vpop.f32.mrb[0].mxu0
      %v3095 = vadd.f32 0.0, %v3094
      %v3096 = vpop.f32.mrb[0].mxu0
      %3097 = vmatprep.mubr.f32.mxu0 0.0
      %3098 = vmatmul.mubr.f32.gmra.mrb[0].mxu0 %v2891
      %v3099 = vpop.f32.mrb[0].mxu0
      %v3100 = vadd.f32 0.0, %v3099
      %v3101 = vpop.f32.mrb[0].mxu0
      %3102 = vmatprep.mubr.f32.mxu0 0.0
      %3103 = vmatmul.mubr.f32.gmra.mrb[0].mxu0 %v2894
      %v3104 = vpop.f32.mrb[0].mxu0
      %v3105 = vadd.f32 0.0, %v3104
      %v3106 = vpop.f32.mrb[0].mxu0
      %3107 = vmatprep.mubr.f32.mxu0 0.0
      %3108 = vmatmul.mubr.f32.gmra.mrb[0].mxu0 %v2897
      %v3109 = vpop.f32.mrb[0].mxu0
      %v3110 = vadd.f32 0.0, %v3109
      %v3111 = vpop.f32.mrb[0].mxu0
      %3112 = vmatprep.mubr.f32.mxu0 0.0
      %3113 = vmatmul.mubr.f32.gmra.mrb[0].mxu0 %v2900
      %v3114 = vpop.f32.mrb[0].mxu0
      %v3115 = vadd.f32 0.0, %v3114
      %v3116 = vpop.f32.mrb[0].mxu0
      %3117 = vmatprep.mubr.f32.mxu0 0.0
      %3118 = vmatmul.mubr.f32.gmra.mrb[0].mxu0 %v2903
      %v3119 = vpop.f32.mrb[0].mxu0
      %v3120 = vadd.f32 0.0, %v3119
      %v3121 = vpop.f32.mrb[0].mxu0
      %3122 = vmatprep.mubr.f32.mxu0 0.0
      %3123 = vmatmul.mubr.f32.gmra.mrb[0].mxu0 %v2906
      %v3124 = vpop.f32.mrb[0].mxu0
      %v3125 = vadd.f32 0.0, %v3124
      %v3126 = vpop.f32.mrb[0].mxu0
      %3127 = vmatprep.mubr.f32.mxu0 0.0
      %3128 = vmatmul.mubr.f32.gmra.mrb[0].mxu0 %v2909
      %v3129 = vpop.f32.mrb[0].mxu0
      %v3130 = vadd.f32 0.0, %v3129
      %v3131 = vpop.f32.mrb[0].mxu0
      %3132 = vmatprep.mubr.f32.mxu0 0.0
      %3133 = vmatmul.mubr.f32.gmra.mrb[0].mxu0 %v2912
      %v3134 = vpop.f32.mrb[0].mxu0
      %v3135 = vadd.f32 0.0, %v3134
      %v3136 = vpop.f32.mrb[0].mxu0
      %3137 = vmatprep.mubr.f32.mxu0 0.0
      %3138 = vmatmul.mubr.f32.gmra.mrb[0].mxu0 %v2915
      %v3139 = vpop.f32.mrb[0].mxu0
      %v3140 = vadd.f32 0.0, %v3139
      %v3141 = vpop.f32.mrb[0].mxu0
      %3142 = vmatprep.mubr.f32.mxu0 0.0
      %3143 = vmatmul.mubr.f32.gmra.mrb[0].mxu0 %v2918
      %v3144 = vpop.f32.mrb[0].mxu0
      %v3145 = vadd.f32 0.0, %v3144
      %v3146 = vpop.f32.mrb[0].mxu0
      %3147 = vdwg.mxu0
      %v3148 = vadd.f32 %v2749, %v2990
      %v3149 = vadd.f32 %v2750, %v2995
      %v3150 = vadd.f32 %v2751, %v3000
      %v3151 = vadd.f32 %v2752, %v3005
      %v3152 = vadd.f32 %v2753, %v3010
      %v3153 = vadd.f32 %v2754, %v3015
      %v3154 = vadd.f32 %v2755, %v3020
      %v3155 = vadd.f32 %v2756, %v3025
      %v3156 = vadd.f32 %v2757, %v3030
      %v3157 = vadd.f32 %v2758, %v3035
      %v3158 = vadd.f32 %v2759, %v3040
      %v3159 = vadd.f32 %v2760, %v3045
      %v3160 = vadd.f32 %v2761, %v3050
      %v3161 = vadd.f32 %v2762, %v3055
      %v3162 = vadd.f32 %v2763, %v3060
      %v3163 = vadd.f32 %v2764, %v3065
      %v3164 = vadd.f32 %v2765, %v3070
      %v3165 = vadd.f32 %v2766, %v3075
      %v3166 = vadd.f32 %v2767, %v3080
      %v3167 = vadd.f32 %v2768, %v3085
      %v3168 = vadd.f32 %v2769, %v3090
      %v3169 = vadd.f32 %v2770, %v3095
      %v3170 = vadd.f32 %v2771, %v3100
      %v3171 = vadd.f32 %v2772, %v3105
      %v3172 = vadd.f32 %v2773, %v3110
      %v3173 = vadd.f32 %v2774, %v3115
      %v3174 = vadd.f32 %v2775, %v3120
      %v3175 = vadd.f32 %v2776, %v3125
      %v3176 = vadd.f32 %v2777, %v3130
      %v3177 = vadd.f32 %v2778, %v3135
      %v3178 = vadd.f32 %v2779, %v3140
      %v3179 = vadd.f32 %v2780, %v3145
      %v3181 = vrot.slane %v233, 7
      %v3184 = vrot.slane %v232, 7
      %v3185 = vsel %vm749, %v2115, %v3184
      %v3186 = vsel %vm749, %v3184, %v3181
      %v3190 = vsel %vm749, %v3181, %v757
      %v3191 = vsel %vm877, %v3190, 0.0
      %v3192 = vsel %vm878, %v760, 0.0
      %v3193 = vsel %vm879, %v762, 0.0
      %v3194 = vsel %vm880, %v764, 0.0
      %v3195 = vsel %vm881, %v766, 0.0
      %v3196 = vsel %vm882, %v768, 0.0
      %v3197 = vsel %vm883, %v770, 0.0
      %v3198 = vsel %vm884, %v772, 0.0
      %v3199 = vsel %vm885, %v774, 0.0
      %v3200 = vsel %vm886, %v776, 0.0
      %v3201 = vsel %vm887, %v778, 0.0
      %v3202 = vsel %vm888, %v780, 0.0
      %v3203 = vsel %vm889, %v782, 0.0
      %v3204 = vsel %vm890, %v784, 0.0
      %v3205 = vsel %vm891, %v786, 0.0
      %v3206 = vsel %vm892, %v788, 0.0
      %v3207 = vsel %vm893, %v790, 0.0
      %v3208 = vsel %vm894, %v792, 0.0
      %v3209 = vsel %vm895, %v794, 0.0
      %v3210 = vsel %vm896, %v796, 0.0
      %v3211 = vsel %vm897, %v798, 0.0
      %v3212 = vsel %vm898, %v800, 0.0
      %v3213 = vsel %vm899, %v802, 0.0
      %v3214 = vsel %vm900, %v804, 0.0
      %v3215 = vsel %vm901, %v806, 0.0
      %v3216 = vsel %vm902, %v808, 0.0
      %v3217 = vsel %vm903, %v810, 0.0
      %v3218 = vsel %vm904, %v811, 0.0
      %v3219 = vsel %vm905, %v2119, 0.0
      %v3220 = vsel %vm906, %v2120, 0.0
      %v3221 = vsel %vm907, %v3185, 0.0
      %v3222 = vsel %vm908, %v3186, 0.0
      %s3223 = scalar_lea.vmem %s1, 24
      %v3224 = vld [vmem:[%s3223] sm:$0xf]
      %v3226 = vsel %vm944, %v3191, 0
      %v3229 = vsel %vm944, %v3192, 0
      %v3232 = vsel %vm944, %v3193, 0
      %v3235 = vsel %vm944, %v3194, 0
      %v3238 = vsel %vm944, %v3195, 0
      %v3241 = vsel %vm944, %v3196, 0
      %v3244 = vsel %vm944, %v3197, 0
      %v3247 = vsel %vm944, %v3198, 0
      %v3250 = vsel %vm944, %v3199, 0
      %v3253 = vsel %vm944, %v3200, 0
      %v3256 = vsel %vm944, %v3201, 0
      %v3259 = vsel %vm944, %v3202, 0
      %v3262 = vsel %vm944, %v3203, 0
      %v3265 = vsel %vm944, %v3204, 0
      %v3268 = vsel %vm944, %v3205, 0
      %v3271 = vsel %vm944, %v3206, 0
      %v3274 = vsel %vm944, %v3207, 0
      %v3277 = vsel %vm944, %v3208, 0
      %v3280 = vsel %vm944, %v3209, 0
      %v3283 = vsel %vm944, %v3210, 0
      %v3286 = vsel %vm944, %v3211, 0
      %v3289 = vsel %vm944, %v3212, 0
      %v3292 = vsel %vm944, %v3213, 0
      %v3295 = vsel %vm944, %v3214, 0
      %v3298 = vsel %vm944, %v3215, 0
      %v3301 = vsel %vm944, %v3216, 0
      %v3304 = vsel %vm944, %v3217, 0
      %v3307 = vsel %vm944, %v3218, 0
      %v3310 = vsel %vm944, %v3219, 0
      %v3313 = vsel %vm944, %v3220, 0
      %v3316 = vsel %vm944, %v3221, 0
      %v3319 = vsel %vm944, %v3222, 0
      %v3322 = vsel %vm1009, %v3224, 0
      %3324 = vmatprep.subr.mxu0 0.0
      %3325 = vmatpush1.msra.mxu0 %v3322
      %3326 = vmatprep.subr.mxu0 0.0
      %3327 = vmatpush1.msra.mxu0 0.0
      %3328 = vmatprep.subr.mxu0 0.0
      %3329 = vmatpush1.msra.mxu0 0.0
      %3330 = vmatprep.subr.mxu0 0.0
      %3331 = vmatpush1.msra.mxu0 0.0
      %3332 = vmatprep.subr.mxu0 0.0
      %3333 = vmatpush1.msra.mxu0 0.0
      %3334 = vmatprep.subr.mxu0 0.0
      %3335 = vmatpush1.msra.mxu0 0.0
      %3336 = vmatprep.subr.mxu0 0.0
      %3337 = vmatpush1.msra.mxu0 0.0
      %3338 = vmatprep.subr.mxu0 0.0
      %3339 = vmatpush1.msra.mxu0 0.0
      %3340 = vmatprep.subr.mxu0 0.0
      %3341 = vmatpush1.msra.mxu0 0.0
      %3342 = vmatprep.subr.mxu0 0.0
      %3343 = vmatpush1.msra.mxu0 0.0
      %3344 = vmatprep.subr.mxu0 0.0
      %3345 = vmatpush1.msra.mxu0 0.0
      %3346 = vmatprep.subr.mxu0 0.0
      %3347 = vmatpush1.msra.mxu0 0.0
      %3348 = vmatprep.subr.mxu0 0.0
      %3349 = vmatpush1.msra.mxu0 0.0
      %3350 = vmatprep.subr.mxu0 0.0
      %3351 = vmatpush1.msra.mxu0 0.0
      %3352 = vmatprep.subr.mxu0 0.0
      %3353 = vmatpush1.msra.mxu0 0.0
      %3354 = vmatprep.subr.mxu0 0.0
      %3355 = vmatpush1.msra.mxu0 0.0
      %3356 = vmatprep.subr.mxu0 0.0
      %3357 = vmatpush1.msra.mxu0 0.0
      %3358 = vmatprep.subr.mxu0 0.0
      %3359 = vmatpush1.msra.mxu0 0.0
      %3360 = vmatprep.subr.mxu0 0.0
      %3361 = vmatpush1.msra.mxu0 0.0
      %3362 = vmatprep.subr.mxu0 0.0
      %3363 = vmatpush1.msra.mxu0 0.0
      %3364 = vmatprep.subr.mxu0 0.0
      %3365 = vmatpush1.msra.mxu0 0.0
      %3366 = vmatprep.subr.mxu0 0.0
      %3367 = vmatpush1.msra.mxu0 0.0
      %3368 = vmatprep.subr.mxu0 0.0
      %3369 = vmatpush1.msra.mxu0 0.0
      %3370 = vmatprep.subr.mxu0 0.0
      %3371 = vmatpush1.msra.mxu0 0.0
      %3372 = vmatprep.subr.mxu0 0.0
      %3373 = vmatpush1.msra.mxu0 0.0
      %3374 = vmatprep.subr.mxu0 0.0
      %3375 = vmatpush1.msra.mxu0 0.0
      %3376 = vmatprep.subr.mxu0 0.0
      %3377 = vmatpush1.msra.mxu0 0.0
      %3378 = vmatprep.subr.mxu0 0.0
      %3379 = vmatpush1.msra.mxu0 0.0
      %3380 = vmatprep.subr.mxu0 0.0
      %3381 = vmatpush1.msra.mxu0 0.0
      %3382 = vmatprep.subr.mxu0 0.0
      %3383 = vmatpush1.msra.mxu0 0.0
      %3384 = vmatprep.subr.mxu0 0.0
      %3385 = vmatpush1.msra.mxu0 0.0
      %3386 = vmatprep.subr.mxu0 0.0
      %3387 = vmatpush1.msra.mxu0 0.0
      %3388 = vmatprep.mubr.f32.mxu0 0.0
      %3389 = vmatmul.mubr.f32.gmra.mrb[0].mxu0 %v3226
      %v3390 = vpop.f32.mrb[0].mxu0
      %v3391 = vadd.f32 0.0, %v3390
      %v3392 = vpop.f32.mrb[0].mxu0
      %3393 = vmatprep.mubr.f32.mxu0 0.0
      %3394 = vmatmul.mubr.f32.gmra.mrb[0].mxu0 %v3229
      %v3395 = vpop.f32.mrb[0].mxu0
      %v3396 = vadd.f32 0.0, %v3395
      %v3397 = vpop.f32.mrb[0].mxu0
      %3398 = vmatprep.mubr.f32.mxu0 0.0
      %3399 = vmatmul.mubr.f32.gmra.mrb[0].mxu0 %v3232
      %v3400 = vpop.f32.mrb[0].mxu0
      %v3401 = vadd.f32 0.0, %v3400
      %v3402 = vpop.f32.mrb[0].mxu0
      %3403 = vmatprep.mubr.f32.mxu0 0.0
      %3404 = vmatmul.mubr.f32.gmra.mrb[0].mxu0 %v3235
      %v3405 = vpop.f32.mrb[0].mxu0
      %v3406 = vadd.f32 0.0, %v3405
      %v3407 = vpop.f32.mrb[0].mxu0
      %3408 = vmatprep.mubr.f32.mxu0 0.0
      %3409 = vmatmul.mubr.f32.gmra.mrb[0].mxu0 %v3238
      %v3410 = vpop.f32.mrb[0].mxu0
      %v3411 = vadd.f32 0.0, %v3410
      %v3412 = vpop.f32.mrb[0].mxu0
      %3413 = vmatprep.mubr.f32.mxu0 0.0
      %3414 = vmatmul.mubr.f32.gmra.mrb[0].mxu0 %v3241
      %v3415 = vpop.f32.mrb[0].mxu0
      %v3416 = vadd.f32 0.0, %v3415
      %v3417 = vpop.f32.mrb[0].mxu0
      %3418 = vmatprep.mubr.f32.mxu0 0.0
      %3419 = vmatmul.mubr.f32.gmra.mrb[0].mxu0 %v3244
      %v3420 = vpop.f32.mrb[0].mxu0
      %v3421 = vadd.f32 0.0, %v3420
      %v3422 = vpop.f32.mrb[0].mxu0
      %3423 = vmatprep.mubr.f32.mxu0 0.0
      %3424 = vmatmul.mubr.f32.gmra.mrb[0].mxu0 %v3247
      %v3425 = vpop.f32.mrb[0].mxu0
      %v3426 = vadd.f32 0.0, %v3425
      %v3427 = vpop.f32.mrb[0].mxu0
      %3428 = vmatprep.mubr.f32.mxu0 0.0
      %3429 = vmatmul.mubr.f32.gmra.mrb[0].mxu0 %v3250
      %v3430 = vpop.f32.mrb[0].mxu0
      %v3431 = vadd.f32 0.0, %v3430
      %v3432 = vpop.f32.mrb[0].mxu0
      %3433 = vmatprep.mubr.f32.mxu0 0.0
      %3434 = vmatmul.mubr.f32.gmra.mrb[0].mxu0 %v3253
      %v3435 = vpop.f32.mrb[0].mxu0
      %v3436 = vadd.f32 0.0, %v3435
      %v3437 = vpop.f32.mrb[0].mxu0
      %3438 = vmatprep.mubr.f32.mxu0 0.0
      %3439 = vmatmul.mubr.f32.gmra.mrb[0].mxu0 %v3256
      %v3440 = vpop.f32.mrb[0].mxu0
      %v3441 = vadd.f32 0.0, %v3440
      %v3442 = vpop.f32.mrb[0].mxu0
      %3443 = vmatprep.mubr.f32.mxu0 0.0
      %3444 = vmatmul.mubr.f32.gmra.mrb[0].mxu0 %v3259
      %v3445 = vpop.f32.mrb[0].mxu0
      %v3446 = vadd.f32 0.0, %v3445
      %v3447 = vpop.f32.mrb[0].mxu0
      %3448 = vmatprep.mubr.f32.mxu0 0.0
      %3449 = vmatmul.mubr.f32.gmra.mrb[0].mxu0 %v3262
      %v3450 = vpop.f32.mrb[0].mxu0
      %v3451 = vadd.f32 0.0, %v3450
      %v3452 = vpop.f32.mrb[0].mxu0
      %3453 = vmatprep.mubr.f32.mxu0 0.0
      %3454 = vmatmul.mubr.f32.gmra.mrb[0].mxu0 %v3265
      %v3455 = vpop.f32.mrb[0].mxu0
      %v3456 = vadd.f32 0.0, %v3455
      %v3457 = vpop.f32.mrb[0].mxu0
      %3458 = vmatprep.mubr.f32.mxu0 0.0
      %3459 = vmatmul.mubr.f32.gmra.mrb[0].mxu0 %v3268
      %v3460 = vpop.f32.mrb[0].mxu0
      %v3461 = vadd.f32 0.0, %v3460
      %v3462 = vpop.f32.mrb[0].mxu0
      %3463 = vmatprep.mubr.f32.mxu0 0.0
      %3464 = vmatmul.mubr.f32.gmra.mrb[0].mxu0 %v3271
      %v3465 = vpop.f32.mrb[0].mxu0
      %v3466 = vadd.f32 0.0, %v3465
      %v3467 = vpop.f32.mrb[0].mxu0
      %3468 = vmatprep.mubr.f32.mxu0 0.0
      %3469 = vmatmul.mubr.f32.gmra.mrb[0].mxu0 %v3274
      %v3470 = vpop.f32.mrb[0].mxu0
      %v3471 = vadd.f32 0.0, %v3470
      %v3472 = vpop.f32.mrb[0].mxu0
      %3473 = vmatprep.mubr.f32.mxu0 0.0
      %3474 = vmatmul.mubr.f32.gmra.mrb[0].mxu0 %v3277
      %v3475 = vpop.f32.mrb[0].mxu0
      %v3476 = vadd.f32 0.0, %v3475
      %v3477 = vpop.f32.mrb[0].mxu0
      %3478 = vmatprep.mubr.f32.mxu0 0.0
      %3479 = vmatmul.mubr.f32.gmra.mrb[0].mxu0 %v3280
      %v3480 = vpop.f32.mrb[0].mxu0
      %v3481 = vadd.f32 0.0, %v3480
      %v3482 = vpop.f32.mrb[0].mxu0
      %3483 = vmatprep.mubr.f32.mxu0 0.0
      %3484 = vmatmul.mubr.f32.gmra.mrb[0].mxu0 %v3283
      %v3485 = vpop.f32.mrb[0].mxu0
      %v3486 = vadd.f32 0.0, %v3485
      %v3487 = vpop.f32.mrb[0].mxu0
      %3488 = vmatprep.mubr.f32.mxu0 0.0
      %3489 = vmatmul.mubr.f32.gmra.mrb[0].mxu0 %v3286
      %v3490 = vpop.f32.mrb[0].mxu0
      %v3491 = vadd.f32 0.0, %v3490
      %v3492 = vpop.f32.mrb[0].mxu0
      %3493 = vmatprep.mubr.f32.mxu0 0.0
      %3494 = vmatmul.mubr.f32.gmra.mrb[0].mxu0 %v3289
      %v3495 = vpop.f32.mrb[0].mxu0
      %v3496 = vadd.f32 0.0, %v3495
      %v3497 = vpop.f32.mrb[0].mxu0
      %3498 = vmatprep.mubr.f32.mxu0 0.0
      %3499 = vmatmul.mubr.f32.gmra.mrb[0].mxu0 %v3292
      %v3500 = vpop.f32.mrb[0].mxu0
      %v3501 = vadd.f32 0.0, %v3500
      %v3502 = vpop.f32.mrb[0].mxu0
      %3503 = vmatprep.mubr.f32.mxu0 0.0
      %3504 = vmatmul.mubr.f32.gmra.mrb[0].mxu0 %v3295
      %v3505 = vpop.f32.mrb[0].mxu0
      %v3506 = vadd.f32 0.0, %v3505
      %v3507 = vpop.f32.mrb[0].mxu0
      %3508 = vmatprep.mubr.f32.mxu0 0.0
      %3509 = vmatmul.mubr.f32.gmra.mrb[0].mxu0 %v3298
      %v3510 = vpop.f32.mrb[0].mxu0
      %v3511 = vadd.f32 0.0, %v3510
      %v3512 = vpop.f32.mrb[0].mxu0
      %3513 = vmatprep.mubr.f32.mxu0 0.0
      %3514 = vmatmul.mubr.f32.gmra.mrb[0].mxu0 %v3301
      %v3515 = vpop.f32.mrb[0].mxu0
      %v3516 = vadd.f32 0.0, %v3515
      %v3517 = vpop.f32.mrb[0].mxu0
      %3518 = vmatprep.mubr.f32.mxu0 0.0
      %3519 = vmatmul.mubr.f32.gmra.mrb[0].mxu0 %v3304
      %v3520 = vpop.f32.mrb[0].mxu0
      %v3521 = vadd.f32 0.0, %v3520
      %v3522 = vpop.f32.mrb[0].mxu0
      %3523 = vmatprep.mubr.f32.mxu0 0.0
      %3524 = vmatmul.mubr.f32.gmra.mrb[0].mxu0 %v3307
      %v3525 = vpop.f32.mrb[0].mxu0
      %v3526 = vadd.f32 0.0, %v3525
      %v3527 = vpop.f32.mrb[0].mxu0
      %3528 = vmatprep.mubr.f32.mxu0 0.0
      %3529 = vmatmul.mubr.f32.gmra.mrb[0].mxu0 %v3310
      %v3530 = vpop.f32.mrb[0].mxu0
      %v3531 = vadd.f32 0.0, %v3530
      %v3532 = vpop.f32.mrb[0].mxu0
      %3533 = vmatprep.mubr.f32.mxu0 0.0
      %3534 = vmatmul.mubr.f32.gmra.mrb[0].mxu0 %v3313
      %v3535 = vpop.f32.mrb[0].mxu0
      %v3536 = vadd.f32 0.0, %v3535
      %v3537 = vpop.f32.mrb[0].mxu0
      %3538 = vmatprep.mubr.f32.mxu0 0.0
      %3539 = vmatmul.mubr.f32.gmra.mrb[0].mxu0 %v3316
      %v3540 = vpop.f32.mrb[0].mxu0
      %v3541 = vadd.f32 0.0, %v3540
      %v3542 = vpop.f32.mrb[0].mxu0
      %3543 = vmatprep.mubr.f32.mxu0 0.0
      %3544 = vmatmul.mubr.f32.gmra.mrb[0].mxu0 %v3319
      %v3545 = vpop.f32.mrb[0].mxu0
      %v3546 = vadd.f32 0.0, %v3545
      %v3547 = vpop.f32.mrb[0].mxu0
      %3548 = vdwg.mxu0
      %v3549 = vadd.f32 %v3148, %v3391
      %v3550 = vadd.f32 %v3149, %v3396
      %v3551 = vadd.f32 %v3150, %v3401
      %v3552 = vadd.f32 %v3151, %v3406
      %v3553 = vadd.f32 %v3152, %v3411
      %v3554 = vadd.f32 %v3153, %v3416
      %v3555 = vadd.f32 %v3154, %v3421
      %v3556 = vadd.f32 %v3155, %v3426
      %v3557 = vadd.f32 %v3156, %v3431
      %v3558 = vadd.f32 %v3157, %v3436
      %v3559 = vadd.f32 %v3158, %v3441
      %v3560 = vadd.f32 %v3159, %v3446
      %v3561 = vadd.f32 %v3160, %v3451
      %v3562 = vadd.f32 %v3161, %v3456
      %v3563 = vadd.f32 %v3162, %v3461
      %v3564 = vadd.f32 %v3163, %v3466
      %v3565 = vadd.f32 %v3164, %v3471
      %v3566 = vadd.f32 %v3165, %v3476
      %v3567 = vadd.f32 %v3166, %v3481
      %v3568 = vadd.f32 %v3167, %v3486
      %v3569 = vadd.f32 %v3168, %v3491
      %v3570 = vadd.f32 %v3169, %v3496
      %v3571 = vadd.f32 %v3170, %v3501
      %v3572 = vadd.f32 %v3171, %v3506
      %v3573 = vadd.f32 %v3172, %v3511
      %v3574 = vadd.f32 %v3173, %v3516
      %v3575 = vadd.f32 %v3174, %v3521
      %v3576 = vadd.f32 %v3175, %v3526
      %v3577 = vadd.f32 %v3176, %v3531
      %v3578 = vadd.f32 %v3177, %v3536
      %v3579 = vadd.f32 %v3178, %v3541
      %v3580 = vadd.f32 %v3179, %v3546
      %s3581 = scalar_lea.vmem %s1, 28
      %v3582 = vld [vmem:[%s3581] sm:$0xf]
      %v3583 = vsel %vm944, %v232, 0
      %v3585 = vsel %vm944, %v233, 0
      %v3588 = vsel %vm1009, %v3582, 0
      %3590 = vmatprep.subr.mxu0 0.0
      %3591 = vmatpush1.msra.mxu0 %v3588
      %3592 = vmatprep.subr.mxu0 0.0
      %3593 = vmatpush1.msra.mxu0 0.0
      %3594 = vmatprep.subr.mxu0 0.0
      %3595 = vmatpush1.msra.mxu0 0.0
      %3596 = vmatprep.subr.mxu0 0.0
      %3597 = vmatpush1.msra.mxu0 0.0
      %3598 = vmatprep.subr.mxu0 0.0
      %3599 = vmatpush1.msra.mxu0 0.0
      %3600 = vmatprep.subr.mxu0 0.0
      %3601 = vmatpush1.msra.mxu0 0.0
      %3602 = vmatprep.subr.mxu0 0.0
      %3603 = vmatpush1.msra.mxu0 0.0
      %3604 = vmatprep.subr.mxu0 0.0
      %3605 = vmatpush1.msra.mxu0 0.0
      %3606 = vmatprep.subr.mxu0 0.0
      %3607 = vmatpush1.msra.mxu0 0.0
      %3608 = vmatprep.subr.mxu0 0.0
      %3609 = vmatpush1.msra.mxu0 0.0
      %3610 = vmatprep.subr.mxu0 0.0
      %3611 = vmatpush1.msra.mxu0 0.0
      %3612 = vmatprep.subr.mxu0 0.0
      %3613 = vmatpush1.msra.mxu0 0.0
      %3614 = vmatprep.subr.mxu0 0.0
      %3615 = vmatpush1.msra.mxu0 0.0
      %3616 = vmatprep.subr.mxu0 0.0
      %3617 = vmatpush1.msra.mxu0 0.0
      %3618 = vmatprep.subr.mxu0 0.0
      %3619 = vmatpush1.msra.mxu0 0.0
      %3620 = vmatprep.subr.mxu0 0.0
      %3621 = vmatpush1.msra.mxu0 0.0
      %3622 = vmatprep.subr.mxu0 0.0
      %3623 = vmatpush1.msra.mxu0 0.0
      %3624 = vmatprep.subr.mxu0 0.0
      %3625 = vmatpush1.msra.mxu0 0.0
      %3626 = vmatprep.subr.mxu0 0.0
      %3627 = vmatpush1.msra.mxu0 0.0
      %3628 = vmatprep.subr.mxu0 0.0
      %3629 = vmatpush1.msra.mxu0 0.0
      %3630 = vmatprep.subr.mxu0 0.0
      %3631 = vmatpush1.msra.mxu0 0.0
      %3632 = vmatprep.subr.mxu0 0.0
      %3633 = vmatpush1.msra.mxu0 0.0
      %3634 = vmatprep.subr.mxu0 0.0
      %3635 = vmatpush1.msra.mxu0 0.0
      %3636 = vmatprep.subr.mxu0 0.0
      %3637 = vmatpush1.msra.mxu0 0.0
      %3638 = vmatprep.subr.mxu0 0.0
      %3639 = vmatpush1.msra.mxu0 0.0
      %3640 = vmatprep.subr.mxu0 0.0
      %3641 = vmatpush1.msra.mxu0 0.0
      %3642 = vmatprep.subr.mxu0 0.0
      %3643 = vmatpush1.msra.mxu0 0.0
      %3644 = vmatprep.subr.mxu0 0.0
      %3645 = vmatpush1.msra.mxu0 0.0
      %3646 = vmatprep.subr.mxu0 0.0
      %3647 = vmatpush1.msra.mxu0 0.0
      %3648 = vmatprep.subr.mxu0 0.0
      %3649 = vmatpush1.msra.mxu0 0.0
      %3650 = vmatprep.subr.mxu0 0.0
      %3651 = vmatpush1.msra.mxu0 0.0
      %3652 = vmatprep.subr.mxu0 0.0
      %3653 = vmatpush1.msra.mxu0 0.0
      %3654 = vmatprep.mubr.f32.mxu0 0.0
      %3655 = vmatmul.mubr.f32.gmra.mrb[0].mxu0 %v953
      %v3656 = vpop.f32.mrb[0].mxu0
      %v3657 = vadd.f32 0.0, %v3656
      %v3658 = vpop.f32.mrb[0].mxu0
      %3659 = vmatprep.mubr.f32.mxu0 0.0
      %3660 = vmatmul.mubr.f32.gmra.mrb[0].mxu0 %v955
      %v3661 = vpop.f32.mrb[0].mxu0
      %v3662 = vadd.f32 0.0, %v3661
      %v3663 = vpop.f32.mrb[0].mxu0
      %3664 = vmatprep.mubr.f32.mxu0 0.0
      %3665 = vmatmul.mubr.f32.gmra.mrb[0].mxu0 %v957
      %v3666 = vpop.f32.mrb[0].mxu0
      %v3667 = vadd.f32 0.0, %v3666
      %v3668 = vpop.f32.mrb[0].mxu0
      %3669 = vmatprep.mubr.f32.mxu0 0.0
      %3670 = vmatmul.mubr.f32.gmra.mrb[0].mxu0 %v959
      %v3671 = vpop.f32.mrb[0].mxu0
      %v3672 = vadd.f32 0.0, %v3671
      %v3673 = vpop.f32.mrb[0].mxu0
      %3674 = vmatprep.mubr.f32.mxu0 0.0
      %3675 = vmatmul.mubr.f32.gmra.mrb[0].mxu0 %v961
      %v3676 = vpop.f32.mrb[0].mxu0
      %v3677 = vadd.f32 0.0, %v3676
      %v3678 = vpop.f32.mrb[0].mxu0
      %3679 = vmatprep.mubr.f32.mxu0 0.0
      %3680 = vmatmul.mubr.f32.gmra.mrb[0].mxu0 %v963
      %v3681 = vpop.f32.mrb[0].mxu0
      %v3682 = vadd.f32 0.0, %v3681
      %v3683 = vpop.f32.mrb[0].mxu0
      %3684 = vmatprep.mubr.f32.mxu0 0.0
      %3685 = vmatmul.mubr.f32.gmra.mrb[0].mxu0 %v965
      %v3686 = vpop.f32.mrb[0].mxu0
      %v3687 = vadd.f32 0.0, %v3686
      %v3688 = vpop.f32.mrb[0].mxu0
      %3689 = vmatprep.mubr.f32.mxu0 0.0
      %3690 = vmatmul.mubr.f32.gmra.mrb[0].mxu0 %v967
      %v3691 = vpop.f32.mrb[0].mxu0
      %v3692 = vadd.f32 0.0, %v3691
      %v3693 = vpop.f32.mrb[0].mxu0
      %3694 = vmatprep.mubr.f32.mxu0 0.0
      %3695 = vmatmul.mubr.f32.gmra.mrb[0].mxu0 %v969
      %v3696 = vpop.f32.mrb[0].mxu0
      %v3697 = vadd.f32 0.0, %v3696
      %v3698 = vpop.f32.mrb[0].mxu0
      %3699 = vmatprep.mubr.f32.mxu0 0.0
      %3700 = vmatmul.mubr.f32.gmra.mrb[0].mxu0 %v971
      %v3701 = vpop.f32.mrb[0].mxu0
      %v3702 = vadd.f32 0.0, %v3701
      %v3703 = vpop.f32.mrb[0].mxu0
      %3704 = vmatprep.mubr.f32.mxu0 0.0
      %3705 = vmatmul.mubr.f32.gmra.mrb[0].mxu0 %v973
      %v3706 = vpop.f32.mrb[0].mxu0
      %v3707 = vadd.f32 0.0, %v3706
      %v3708 = vpop.f32.mrb[0].mxu0
      %3709 = vmatprep.mubr.f32.mxu0 0.0
      %3710 = vmatmul.mubr.f32.gmra.mrb[0].mxu0 %v975
      %v3711 = vpop.f32.mrb[0].mxu0
      %v3712 = vadd.f32 0.0, %v3711
      %v3713 = vpop.f32.mrb[0].mxu0
      %3714 = vmatprep.mubr.f32.mxu0 0.0
      %3715 = vmatmul.mubr.f32.gmra.mrb[0].mxu0 %v977
      %v3716 = vpop.f32.mrb[0].mxu0
      %v3717 = vadd.f32 0.0, %v3716
      %v3718 = vpop.f32.mrb[0].mxu0
      %3719 = vmatprep.mubr.f32.mxu0 0.0
      %3720 = vmatmul.mubr.f32.gmra.mrb[0].mxu0 %v979
      %v3721 = vpop.f32.mrb[0].mxu0
      %v3722 = vadd.f32 0.0, %v3721
      %v3723 = vpop.f32.mrb[0].mxu0
      %3724 = vmatprep.mubr.f32.mxu0 0.0
      %3725 = vmatmul.mubr.f32.gmra.mrb[0].mxu0 %v981
      %v3726 = vpop.f32.mrb[0].mxu0
      %v3727 = vadd.f32 0.0, %v3726
      %v3728 = vpop.f32.mrb[0].mxu0
      %3729 = vmatprep.mubr.f32.mxu0 0.0
      %3730 = vmatmul.mubr.f32.gmra.mrb[0].mxu0 %v983
      %v3731 = vpop.f32.mrb[0].mxu0
      %v3732 = vadd.f32 0.0, %v3731
      %v3733 = vpop.f32.mrb[0].mxu0
      %3734 = vmatprep.mubr.f32.mxu0 0.0
      %3735 = vmatmul.mubr.f32.gmra.mrb[0].mxu0 %v985
      %v3736 = vpop.f32.mrb[0].mxu0
      %v3737 = vadd.f32 0.0, %v3736
      %v3738 = vpop.f32.mrb[0].mxu0
      %3739 = vmatprep.mubr.f32.mxu0 0.0
      %3740 = vmatmul.mubr.f32.gmra.mrb[0].mxu0 %v987
      %v3741 = vpop.f32.mrb[0].mxu0
      %v3742 = vadd.f32 0.0, %v3741
      %v3743 = vpop.f32.mrb[0].mxu0
      %3744 = vmatprep.mubr.f32.mxu0 0.0
      %3745 = vmatmul.mubr.f32.gmra.mrb[0].mxu0 %v989
      %v3746 = vpop.f32.mrb[0].mxu0
      %v3747 = vadd.f32 0.0, %v3746
      %v3748 = vpop.f32.mrb[0].mxu0
      %3749 = vmatprep.mubr.f32.mxu0 0.0
      %3750 = vmatmul.mubr.f32.gmra.mrb[0].mxu0 %v991
      %v3751 = vpop.f32.mrb[0].mxu0
      %v3752 = vadd.f32 0.0, %v3751
      %v3753 = vpop.f32.mrb[0].mxu0
      %3754 = vmatprep.mubr.f32.mxu0 0.0
      %3755 = vmatmul.mubr.f32.gmra.mrb[0].mxu0 %v993
      %v3756 = vpop.f32.mrb[0].mxu0
      %v3757 = vadd.f32 0.0, %v3756
      %v3758 = vpop.f32.mrb[0].mxu0
      %3759 = vmatprep.mubr.f32.mxu0 0.0
      %3760 = vmatmul.mubr.f32.gmra.mrb[0].mxu0 %v995
      %v3761 = vpop.f32.mrb[0].mxu0
      %v3762 = vadd.f32 0.0, %v3761
      %v3763 = vpop.f32.mrb[0].mxu0
      %3764 = vmatprep.mubr.f32.mxu0 0.0
      %3765 = vmatmul.mubr.f32.gmra.mrb[0].mxu0 %v997
      %v3766 = vpop.f32.mrb[0].mxu0
      %v3767 = vadd.f32 0.0, %v3766
      %v3768 = vpop.f32.mrb[0].mxu0
      %3769 = vmatprep.mubr.f32.mxu0 0.0
      %3770 = vmatmul.mubr.f32.gmra.mrb[0].mxu0 %v999
      %v3771 = vpop.f32.mrb[0].mxu0
      %v3772 = vadd.f32 0.0, %v3771
      %v3773 = vpop.f32.mrb[0].mxu0
      %3774 = vmatprep.mubr.f32.mxu0 0.0
      %3775 = vmatmul.mubr.f32.gmra.mrb[0].mxu0 %v1001
      %v3776 = vpop.f32.mrb[0].mxu0
      %v3777 = vadd.f32 0.0, %v3776
      %v3778 = vpop.f32.mrb[0].mxu0
      %3779 = vmatprep.mubr.f32.mxu0 0.0
      %3780 = vmatmul.mubr.f32.gmra.mrb[0].mxu0 %v1003
      %v3781 = vpop.f32.mrb[0].mxu0
      %v3782 = vadd.f32 0.0, %v3781
      %v3783 = vpop.f32.mrb[0].mxu0
      %3784 = vmatprep.mubr.f32.mxu0 0.0
      %3785 = vmatmul.mubr.f32.gmra.mrb[0].mxu0 %v1005
      %v3786 = vpop.f32.mrb[0].mxu0
      %v3787 = vadd.f32 0.0, %v3786
      %v3788 = vpop.f32.mrb[0].mxu0
      %3789 = vmatprep.mubr.f32.mxu0 0.0
      %3790 = vmatmul.mubr.f32.gmra.mrb[0].mxu0 %v1007
      %v3791 = vpop.f32.mrb[0].mxu0
      %v3792 = vadd.f32 0.0, %v3791
      %v3793 = vpop.f32.mrb[0].mxu0
      %3794 = vmatprep.mubr.f32.mxu0 0.0
      %3795 = vmatmul.mubr.f32.gmra.mrb[0].mxu0 %v2517
      %v3796 = vpop.f32.mrb[0].mxu0
      %v3797 = vadd.f32 0.0, %v3796
      %v3798 = vpop.f32.mrb[0].mxu0
      %3799 = vmatprep.mubr.f32.mxu0 0.0
      %3800 = vmatmul.mubr.f32.gmra.mrb[0].mxu0 %v2519
      %v3801 = vpop.f32.mrb[0].mxu0
      %v3802 = vadd.f32 0.0, %v3801
      %v3803 = vpop.f32.mrb[0].mxu0
      %3804 = vmatprep.mubr.f32.mxu0 0.0
      %3805 = vmatmul.mubr.f32.gmra.mrb[0].mxu0 %v3583
      %v3806 = vpop.f32.mrb[0].mxu0
      %v3807 = vadd.f32 0.0, %v3806
      %v3808 = vpop.f32.mrb[0].mxu0
      %3809 = vmatprep.mubr.f32.mxu0 0.0
      %3810 = vmatmul.mubr.f32.gmra.mrb[0].mxu0 %v3585
      %v3811 = vpop.f32.mrb[0].mxu0
      %v3812 = vadd.f32 0.0, %v3811
      %v3813 = vpop.f32.mrb[0].mxu0
      %3814 = vdwg.mxu0
      %v3815 = vadd.f32 %v3549, %v3657
      %v3816 = vadd.f32 %v3550, %v3662
      %v3817 = vadd.f32 %v3551, %v3667
      %v3818 = vadd.f32 %v3552, %v3672
      %v3819 = vadd.f32 %v3553, %v3677
      %v3820 = vadd.f32 %v3554, %v3682
      %v3821 = vadd.f32 %v3555, %v3687
      %v3822 = vadd.f32 %v3556, %v3692
      %v3823 = vadd.f32 %v3557, %v3697
      %v3824 = vadd.f32 %v3558, %v3702
      %v3825 = vadd.f32 %v3559, %v3707
      %v3826 = vadd.f32 %v3560, %v3712
      %v3827 = vadd.f32 %v3561, %v3717
      %v3828 = vadd.f32 %v3562, %v3722
      %v3829 = vadd.f32 %v3563, %v3727
      %v3830 = vadd.f32 %v3564, %v3732
      %v3831 = vadd.f32 %v3565, %v3737
      %v3832 = vadd.f32 %v3566, %v3742
      %v3833 = vadd.f32 %v3567, %v3747
      %v3834 = vadd.f32 %v3568, %v3752
      %v3835 = vadd.f32 %v3569, %v3757
      %v3836 = vadd.f32 %v3570, %v3762
      %v3837 = vadd.f32 %v3571, %v3767
      %v3838 = vadd.f32 %v3572, %v3772
      %v3839 = vadd.f32 %v3573, %v3777
      %v3840 = vadd.f32 %v3574, %v3782
      %v3841 = vadd.f32 %v3575, %v3787
      %v3842 = vadd.f32 %v3576, %v3792
      %v3843 = vadd.f32 %v3577, %v3797
      %v3844 = vadd.f32 %v3578, %v3802
      %v3845 = vadd.f32 %v3579, %v3807
      %v3846 = vadd.f32 %v3580, %v3812
      %v3847 = vrot.slane %v232, 1
      %v3848 = vsel %vm1562, %v2783, %v3847
      %v3849 = vrot.slane %v233, 1
      %v3850 = vsel %vm1562, %v3847, %v3849
      %v3855 = vsel %vm1562, %v3849, %v1570
      %v3856 = vsel %vm1692, %v1573, 0.0
      %v3857 = vsel %vm1693, %v1575, 0.0
      %v3858 = vsel %vm1694, %v1577, 0.0
      %v3859 = vsel %vm1695, %v1579, 0.0
      %v3860 = vsel %vm1696, %v1581, 0.0
      %v3861 = vsel %vm1697, %v1583, 0.0
      %v3862 = vsel %vm1698, %v1585, 0.0
      %v3863 = vsel %vm1699, %v1587, 0.0
      %v3864 = vsel %vm1700, %v1589, 0.0
      %v3865 = vsel %vm1701, %v1591, 0.0
      %v3866 = vsel %vm1702, %v1593, 0.0
      %v3867 = vsel %vm1703, %v1595, 0.0
      %v3868 = vsel %vm1704, %v1597, 0.0
      %v3869 = vsel %vm1705, %v1599, 0.0
      %v3870 = vsel %vm1706, %v1601, 0.0
      %v3871 = vsel %vm1707, %v1603, 0.0
      %v3872 = vsel %vm1708, %v1605, 0.0
      %v3873 = vsel %vm1709, %v1607, 0.0
      %v3874 = vsel %vm1710, %v1609, 0.0
      %v3875 = vsel %vm1711, %v1611, 0.0
      %v3876 = vsel %vm1712, %v1613, 0.0
      %v3877 = vsel %vm1713, %v1615, 0.0
      %v3878 = vsel %vm1714, %v1617, 0.0
      %v3879 = vsel %vm1715, %v1619, 0.0
      %v3880 = vsel %vm1716, %v1621, 0.0
      %v3881 = vsel %vm1717, %v1623, 0.0
      %v3882 = vsel %vm1718, %v1625, 0.0
      %v3883 = vsel %vm1719, %v2782, 0.0
      %v3884 = vsel %vm1720, %v2784, 0.0
      %v3885 = vsel %vm1721, %v3848, 0.0
      %v3886 = vsel %vm1722, %v3850, 0.0
      %v3887 = vsel %vm1723, %v3855, 0.0
      %s3888 = scalar_lea.vmem %s1, 32
      %v3889 = vld [vmem:[%s3888] sm:$0xf]
      %v3891 = vsel %vm944, %v3856, 0
      %v3894 = vsel %vm944, %v3857, 0
      %v3897 = vsel %vm944, %v3858, 0
      %v3900 = vsel %vm944, %v3859, 0
      %v3903 = vsel %vm944, %v3860, 0
      %v3906 = vsel %vm944, %v3861, 0
      %v3909 = vsel %vm944, %v3862, 0
      %v3912 = vsel %vm944, %v3863, 0
      %v3915 = vsel %vm944, %v3864, 0
      %v3918 = vsel %vm944, %v3865, 0
      %v3921 = vsel %vm944, %v3866, 0
      %v3924 = vsel %vm944, %v3867, 0
      %v3927 = vsel %vm944, %v3868, 0
      %v3930 = vsel %vm944, %v3869, 0
      %v3933 = vsel %vm944, %v3870, 0
      %v3936 = vsel %vm944, %v3871, 0
      %v3939 = vsel %vm944, %v3872, 0
      %v3942 = vsel %vm944, %v3873, 0
      %v3945 = vsel %vm944, %v3874, 0
      %v3948 = vsel %vm944, %v3875, 0
      %v3951 = vsel %vm944, %v3876, 0
      %v3954 = vsel %vm944, %v3877, 0
      %v3957 = vsel %vm944, %v3878, 0
      %v3960 = vsel %vm944, %v3879, 0
      %v3963 = vsel %vm944, %v3880, 0
      %v3966 = vsel %vm944, %v3881, 0
      %v3969 = vsel %vm944, %v3882, 0
      %v3972 = vsel %vm944, %v3883, 0
      %v3975 = vsel %vm944, %v3884, 0
      %v3978 = vsel %vm944, %v3885, 0
      %v3981 = vsel %vm944, %v3886, 0
      %v3984 = vsel %vm944, %v3887, 0
      %v3987 = vsel %vm1009, %v3889, 0
      %3989 = vmatprep.subr.mxu0 0.0
      %3990 = vmatpush1.msra.mxu0 %v3987
      %3991 = vmatprep.subr.mxu0 0.0
      %3992 = vmatpush1.msra.mxu0 0.0
      %3993 = vmatprep.subr.mxu0 0.0
      %3994 = vmatpush1.msra.mxu0 0.0
      %3995 = vmatprep.subr.mxu0 0.0
      %3996 = vmatpush1.msra.mxu0 0.0
      %3997 = vmatprep.subr.mxu0 0.0
      %3998 = vmatpush1.msra.mxu0 0.0
      %3999 = vmatprep.subr.mxu0 0.0
      %4000 = vmatpush1.msra.mxu0 0.0
      %4001 = vmatprep.subr.mxu0 0.0
      %4002 = vmatpush1.msra.mxu0 0.0
      %4003 = vmatprep.subr.mxu0 0.0
      %4004 = vmatpush1.msra.mxu0 0.0
      %4005 = vmatprep.subr.mxu0 0.0
      %4006 = vmatpush1.msra.mxu0 0.0
      %4007 = vmatprep.subr.mxu0 0.0
      %4008 = vmatpush1.msra.mxu0 0.0
      %4009 = vmatprep.subr.mxu0 0.0
      %4010 = vmatpush1.msra.mxu0 0.0
      %4011 = vmatprep.subr.mxu0 0.0
      %4012 = vmatpush1.msra.mxu0 0.0
      %4013 = vmatprep.subr.mxu0 0.0
      %4014 = vmatpush1.msra.mxu0 0.0
      %4015 = vmatprep.subr.mxu0 0.0
      %4016 = vmatpush1.msra.mxu0 0.0
      %4017 = vmatprep.subr.mxu0 0.0
      %4018 = vmatpush1.msra.mxu0 0.0
      %4019 = vmatprep.subr.mxu0 0.0
      %4020 = vmatpush1.msra.mxu0 0.0
      %4021 = vmatprep.subr.mxu0 0.0
      %4022 = vmatpush1.msra.mxu0 0.0
      %4023 = vmatprep.subr.mxu0 0.0
      %4024 = vmatpush1.msra.mxu0 0.0
      %4025 = vmatprep.subr.mxu0 0.0
      %4026 = vmatpush1.msra.mxu0 0.0
      %4027 = vmatprep.subr.mxu0 0.0
      %4028 = vmatpush1.msra.mxu0 0.0
      %4029 = vmatprep.subr.mxu0 0.0
      %4030 = vmatpush1.msra.mxu0 0.0
      %4031 = vmatprep.subr.mxu0 0.0
      %4032 = vmatpush1.msra.mxu0 0.0
      %4033 = vmatprep.subr.mxu0 0.0
      %4034 = vmatpush1.msra.mxu0 0.0
      %4035 = vmatprep.subr.mxu0 0.0
      %4036 = vmatpush1.msra.mxu0 0.0
      %4037 = vmatprep.subr.mxu0 0.0
      %4038 = vmatpush1.msra.mxu0 0.0
      %4039 = vmatprep.subr.mxu0 0.0
      %4040 = vmatpush1.msra.mxu0 0.0
      %4041 = vmatprep.subr.mxu0 0.0
      %4042 = vmatpush1.msra.mxu0 0.0
      %4043 = vmatprep.subr.mxu0 0.0
      %4044 = vmatpush1.msra.mxu0 0.0
      %4045 = vmatprep.subr.mxu0 0.0
      %4046 = vmatpush1.msra.mxu0 0.0
      %4047 = vmatprep.subr.mxu0 0.0
      %4048 = vmatpush1.msra.mxu0 0.0
      %4049 = vmatprep.subr.mxu0 0.0
      %4050 = vmatpush1.msra.mxu0 0.0
      %4051 = vmatprep.subr.mxu0 0.0
      %4052 = vmatpush1.msra.mxu0 0.0
      %4053 = vmatprep.mubr.f32.mxu0 0.0
      %4054 = vmatmul.mubr.f32.gmra.mrb[0].mxu0 %v3891
      %v4055 = vpop.f32.mrb[0].mxu0
      %v4056 = vadd.f32 0.0, %v4055
      %v4057 = vpop.f32.mrb[0].mxu0
      %4058 = vmatprep.mubr.f32.mxu0 0.0
      %4059 = vmatmul.mubr.f32.gmra.mrb[0].mxu0 %v3894
      %v4060 = vpop.f32.mrb[0].mxu0
      %v4061 = vadd.f32 0.0, %v4060
      %v4062 = vpop.f32.mrb[0].mxu0
      %4063 = vmatprep.mubr.f32.mxu0 0.0
      %4064 = vmatmul.mubr.f32.gmra.mrb[0].mxu0 %v3897
      %v4065 = vpop.f32.mrb[0].mxu0
      %v4066 = vadd.f32 0.0, %v4065
      %v4067 = vpop.f32.mrb[0].mxu0
      %4068 = vmatprep.mubr.f32.mxu0 0.0
      %4069 = vmatmul.mubr.f32.gmra.mrb[0].mxu0 %v3900
      %v4070 = vpop.f32.mrb[0].mxu0
      %v4071 = vadd.f32 0.0, %v4070
      %v4072 = vpop.f32.mrb[0].mxu0
      %4073 = vmatprep.mubr.f32.mxu0 0.0
      %4074 = vmatmul.mubr.f32.gmra.mrb[0].mxu0 %v3903
      %v4075 = vpop.f32.mrb[0].mxu0
      %v4076 = vadd.f32 0.0, %v4075
      %v4077 = vpop.f32.mrb[0].mxu0
      %4078 = vmatprep.mubr.f32.mxu0 0.0
      %4079 = vmatmul.mubr.f32.gmra.mrb[0].mxu0 %v3906
      %v4080 = vpop.f32.mrb[0].mxu0
      %v4081 = vadd.f32 0.0, %v4080
      %v4082 = vpop.f32.mrb[0].mxu0
      %4083 = vmatprep.mubr.f32.mxu0 0.0
      %4084 = vmatmul.mubr.f32.gmra.mrb[0].mxu0 %v3909
      %v4085 = vpop.f32.mrb[0].mxu0
      %v4086 = vadd.f32 0.0, %v4085
      %v4087 = vpop.f32.mrb[0].mxu0
      %4088 = vmatprep.mubr.f32.mxu0 0.0
      %4089 = vmatmul.mubr.f32.gmra.mrb[0].mxu0 %v3912
      %v4090 = vpop.f32.mrb[0].mxu0
      %v4091 = vadd.f32 0.0, %v4090
      %v4092 = vpop.f32.mrb[0].mxu0
      %4093 = vmatprep.mubr.f32.mxu0 0.0
      %4094 = vmatmul.mubr.f32.gmra.mrb[0].mxu0 %v3915
      %v4095 = vpop.f32.mrb[0].mxu0
      %v4096 = vadd.f32 0.0, %v4095
      %v4097 = vpop.f32.mrb[0].mxu0
      %4098 = vmatprep.mubr.f32.mxu0 0.0
      %4099 = vmatmul.mubr.f32.gmra.mrb[0].mxu0 %v3918
      %v4100 = vpop.f32.mrb[0].mxu0
      %v4101 = vadd.f32 0.0, %v4100
      %v4102 = vpop.f32.mrb[0].mxu0
      %4103 = vmatprep.mubr.f32.mxu0 0.0
      %4104 = vmatmul.mubr.f32.gmra.mrb[0].mxu0 %v3921
      %v4105 = vpop.f32.mrb[0].mxu0
      %v4106 = vadd.f32 0.0, %v4105
      %v4107 = vpop.f32.mrb[0].mxu0
      %4108 = vmatprep.mubr.f32.mxu0 0.0
      %4109 = vmatmul.mubr.f32.gmra.mrb[0].mxu0 %v3924
      %v4110 = vpop.f32.mrb[0].mxu0
      %v4111 = vadd.f32 0.0, %v4110
      %v4112 = vpop.f32.mrb[0].mxu0
      %4113 = vmatprep.mubr.f32.mxu0 0.0
      %4114 = vmatmul.mubr.f32.gmra.mrb[0].mxu0 %v3927
      %v4115 = vpop.f32.mrb[0].mxu0
      %v4116 = vadd.f32 0.0, %v4115
      %v4117 = vpop.f32.mrb[0].mxu0
      %4118 = vmatprep.mubr.f32.mxu0 0.0
      %4119 = vmatmul.mubr.f32.gmra.mrb[0].mxu0 %v3930
      %v4120 = vpop.f32.mrb[0].mxu0
      %v4121 = vadd.f32 0.0, %v4120
      %v4122 = vpop.f32.mrb[0].mxu0
      %4123 = vmatprep.mubr.f32.mxu0 0.0
      %4124 = vmatmul.mubr.f32.gmra.mrb[0].mxu0 %v3933
      %v4125 = vpop.f32.mrb[0].mxu0
      %v4126 = vadd.f32 0.0, %v4125
      %v4127 = vpop.f32.mrb[0].mxu0
      %4128 = vmatprep.mubr.f32.mxu0 0.0
      %4129 = vmatmul.mubr.f32.gmra.mrb[0].mxu0 %v3936
      %v4130 = vpop.f32.mrb[0].mxu0
      %v4131 = vadd.f32 0.0, %v4130
      %v4132 = vpop.f32.mrb[0].mxu0
      %4133 = vmatprep.mubr.f32.mxu0 0.0
      %4134 = vmatmul.mubr.f32.gmra.mrb[0].mxu0 %v3939
      %v4135 = vpop.f32.mrb[0].mxu0
      %v4136 = vadd.f32 0.0, %v4135
      %v4137 = vpop.f32.mrb[0].mxu0
      %4138 = vmatprep.mubr.f32.mxu0 0.0
      %4139 = vmatmul.mubr.f32.gmra.mrb[0].mxu0 %v3942
      %v4140 = vpop.f32.mrb[0].mxu0
      %v4141 = vadd.f32 0.0, %v4140
      %v4142 = vpop.f32.mrb[0].mxu0
      %4143 = vmatprep.mubr.f32.mxu0 0.0
      %4144 = vmatmul.mubr.f32.gmra.mrb[0].mxu0 %v3945
      %v4145 = vpop.f32.mrb[0].mxu0
      %v4146 = vadd.f32 0.0, %v4145
      %v4147 = vpop.f32.mrb[0].mxu0
      %4148 = vmatprep.mubr.f32.mxu0 0.0
      %4149 = vmatmul.mubr.f32.gmra.mrb[0].mxu0 %v3948
      %v4150 = vpop.f32.mrb[0].mxu0
      %v4151 = vadd.f32 0.0, %v4150
      %v4152 = vpop.f32.mrb[0].mxu0
      %4153 = vmatprep.mubr.f32.mxu0 0.0
      %4154 = vmatmul.mubr.f32.gmra.mrb[0].mxu0 %v3951
      %v4155 = vpop.f32.mrb[0].mxu0
      %v4156 = vadd.f32 0.0, %v4155
      %v4157 = vpop.f32.mrb[0].mxu0
      %4158 = vmatprep.mubr.f32.mxu0 0.0
      %4159 = vmatmul.mubr.f32.gmra.mrb[0].mxu0 %v3954
      %v4160 = vpop.f32.mrb[0].mxu0
      %v4161 = vadd.f32 0.0, %v4160
      %v4162 = vpop.f32.mrb[0].mxu0
      %4163 = vmatprep.mubr.f32.mxu0 0.0
      %4164 = vmatmul.mubr.f32.gmra.mrb[0].mxu0 %v3957
      %v4165 = vpop.f32.mrb[0].mxu0
      %v4166 = vadd.f32 0.0, %v4165
      %v4167 = vpop.f32.mrb[0].mxu0
      %4168 = vmatprep.mubr.f32.mxu0 0.0
      %4169 = vmatmul.mubr.f32.gmra.mrb[0].mxu0 %v3960
      %v4170 = vpop.f32.mrb[0].mxu0
      %v4171 = vadd.f32 0.0, %v4170
      %v4172 = vpop.f32.mrb[0].mxu0
      %4173 = vmatprep.mubr.f32.mxu0 0.0
      %4174 = vmatmul.mubr.f32.gmra.mrb[0].mxu0 %v3963
      %v4175 = vpop.f32.mrb[0].mxu0
      %v4176 = vadd.f32 0.0, %v4175
      %v4177 = vpop.f32.mrb[0].mxu0
      %4178 = vmatprep.mubr.f32.mxu0 0.0
      %4179 = vmatmul.mubr.f32.gmra.mrb[0].mxu0 %v3966
      %v4180 = vpop.f32.mrb[0].mxu0
      %v4181 = vadd.f32 0.0, %v4180
      %v4182 = vpop.f32.mrb[0].mxu0
      %4183 = vmatprep.mubr.f32.mxu0 0.0
      %4184 = vmatmul.mubr.f32.gmra.mrb[0].mxu0 %v3969
      %v4185 = vpop.f32.mrb[0].mxu0
      %v4186 = vadd.f32 0.0, %v4185
      %v4187 = vpop.f32.mrb[0].mxu0
      %4188 = vmatprep.mubr.f32.mxu0 0.0
      %4189 = vmatmul.mubr.f32.gmra.mrb[0].mxu0 %v3972
      %v4190 = vpop.f32.mrb[0].mxu0
      %v4191 = vadd.f32 0.0, %v4190
      %v4192 = vpop.f32.mrb[0].mxu0
      %4193 = vmatprep.mubr.f32.mxu0 0.0
      %4194 = vmatmul.mubr.f32.gmra.mrb[0].mxu0 %v3975
      %v4195 = vpop.f32.mrb[0].mxu0
      %v4196 = vadd.f32 0.0, %v4195
      %v4197 = vpop.f32.mrb[0].mxu0
      %4198 = vmatprep.mubr.f32.mxu0 0.0
      %4199 = vmatmul.mubr.f32.gmra.mrb[0].mxu0 %v3978
      %v4200 = vpop.f32.mrb[0].mxu0
      %v4201 = vadd.f32 0.0, %v4200
      %v4202 = vpop.f32.mrb[0].mxu0
      %4203 = vmatprep.mubr.f32.mxu0 0.0
      %4204 = vmatmul.mubr.f32.gmra.mrb[0].mxu0 %v3981
      %v4205 = vpop.f32.mrb[0].mxu0
      %v4206 = vadd.f32 0.0, %v4205
      %v4207 = vpop.f32.mrb[0].mxu0
      %4208 = vmatprep.mubr.f32.mxu0 0.0
      %4209 = vmatmul.mubr.f32.gmra.mrb[0].mxu0 %v3984
      %v4210 = vpop.f32.mrb[0].mxu0
      %v4211 = vadd.f32 0.0, %v4210
      %v4212 = vpop.f32.mrb[0].mxu0
      %4213 = vdwg.mxu0
      %v4214 = vadd.f32 %v3815, %v4056
      %v4215 = vadd.f32 %v3816, %v4061
      %v4216 = vadd.f32 %v3817, %v4066
      %v4217 = vadd.f32 %v3818, %v4071
      %v4218 = vadd.f32 %v3819, %v4076
      %v4219 = vadd.f32 %v3820, %v4081
      %v4220 = vadd.f32 %v3821, %v4086
      %v4221 = vadd.f32 %v3822, %v4091
      %v4222 = vadd.f32 %v3823, %v4096
      %v4223 = vadd.f32 %v3824, %v4101
      %v4224 = vadd.f32 %v3825, %v4106
      %v4225 = vadd.f32 %v3826, %v4111
      %v4226 = vadd.f32 %v3827, %v4116
      %v4227 = vadd.f32 %v3828, %v4121
      %v4228 = vadd.f32 %v3829, %v4126
      %v4229 = vadd.f32 %v3830, %v4131
      %v4230 = vadd.f32 %v3831, %v4136
      %v4231 = vadd.f32 %v3832, %v4141
      %v4232 = vadd.f32 %v3833, %v4146
      %v4233 = vadd.f32 %v3834, %v4151
      %v4234 = vadd.f32 %v3835, %v4156
      %v4235 = vadd.f32 %v3836, %v4161
      %v4236 = vadd.f32 %v3837, %v4166
      %v4237 = vadd.f32 %v3838, %v4171
      %v4238 = vadd.f32 %v3839, %v4176
      %v4239 = vadd.f32 %v3840, %v4181
      %v4240 = vadd.f32 %v3841, %v4186
      %v4241 = vadd.f32 %v3842, %v4191
      %v4242 = vadd.f32 %v3843, %v4196
      %v4243 = vadd.f32 %v3844, %v4201
      %v4244 = vadd.f32 %v3845, %v4206
      %v4245 = vadd.f32 %v3846, %v4211
      %v4246 = vld [vmem:[%s2] sm:$0x1]
      %v4248 = vlaneseq
      %v4249 = vshrl.u32 %v4248, 7
      %v4250 = vsub.s32 0, %v4249
      %v4251 = vrot.slane %v4246, %v4250
      %v4253 = vmul.f32 %v4214, %v4251
      %v4254 = vmul.f32 %v4215, %v4251
      %v4255 = vmul.f32 %v4216, %v4251
      %v4256 = vmul.f32 %v4217, %v4251
      %v4257 = vmul.f32 %v4218, %v4251
      %v4258 = vmul.f32 %v4219, %v4251
      %v4259 = vmul.f32 %v4220, %v4251
      %v4260 = vmul.f32 %v4221, %v4251
      %v4261 = vmul.f32 %v4222, %v4251
      %v4262 = vmul.f32 %v4223, %v4251
      %v4263 = vmul.f32 %v4224, %v4251
      %v4264 = vmul.f32 %v4225, %v4251
      %v4265 = vmul.f32 %v4226, %v4251
      %v4266 = vmul.f32 %v4227, %v4251
      %v4267 = vmul.f32 %v4228, %v4251
      %v4268 = vmul.f32 %v4229, %v4251
      %v4269 = vmul.f32 %v4230, %v4251
      %v4270 = vmul.f32 %v4231, %v4251
      %v4271 = vmul.f32 %v4232, %v4251
      %v4272 = vmul.f32 %v4233, %v4251
      %v4273 = vmul.f32 %v4234, %v4251
      %v4274 = vmul.f32 %v4235, %v4251
      %v4275 = vmul.f32 %v4236, %v4251
      %v4276 = vmul.f32 %v4237, %v4251
      %v4277 = vmul.f32 %v4238, %v4251
      %v4278 = vmul.f32 %v4239, %v4251
      %v4279 = vmul.f32 %v4240, %v4251
      %v4280 = vmul.f32 %v4241, %v4251
      %v4281 = vmul.f32 %v4242, %v4251
      %v4282 = vmul.f32 %v4243, %v4251
      %v4283 = vmul.f32 %v4244, %v4251
      %v4284 = vmul.f32 %v4245, %v4251
      %v4285 = vld [vmem:[%s3] sm:$0x1]
      %v4287 = vlaneseq
      %v4288 = vshrl.u32 %v4287, 7
      %v4289 = vsub.s32 0, %v4288
      %v4290 = vrot.slane %v4285, %v4289
      %v4292 = vadd.f32 %v4253, %v4290
      %v4293 = vadd.f32 %v4254, %v4290
      %v4294 = vadd.f32 %v4255, %v4290
      %v4295 = vadd.f32 %v4256, %v4290
      %v4296 = vadd.f32 %v4257, %v4290
      %v4297 = vadd.f32 %v4258, %v4290
      %v4298 = vadd.f32 %v4259, %v4290
      %v4299 = vadd.f32 %v4260, %v4290
      %v4300 = vadd.f32 %v4261, %v4290
      %v4301 = vadd.f32 %v4262, %v4290
      %v4302 = vadd.f32 %v4263, %v4290
      %v4303 = vadd.f32 %v4264, %v4290
      %v4304 = vadd.f32 %v4265, %v4290
      %v4305 = vadd.f32 %v4266, %v4290
      %v4306 = vadd.f32 %v4267, %v4290
      %v4307 = vadd.f32 %v4268, %v4290
      %v4308 = vadd.f32 %v4269, %v4290
      %v4309 = vadd.f32 %v4270, %v4290
      %v4310 = vadd.f32 %v4271, %v4290
      %v4311 = vadd.f32 %v4272, %v4290
      %v4312 = vadd.f32 %v4273, %v4290
      %v4313 = vadd.f32 %v4274, %v4290
      %v4314 = vadd.f32 %v4275, %v4290
      %v4315 = vadd.f32 %v4276, %v4290
      %v4316 = vadd.f32 %v4277, %v4290
      %v4317 = vadd.f32 %v4278, %v4290
      %v4318 = vadd.f32 %v4279, %v4290
      %v4319 = vadd.f32 %v4280, %v4290
      %v4320 = vadd.f32 %v4281, %v4290
      %v4321 = vadd.f32 %v4282, %v4290
      %v4322 = vadd.f32 %v4283, %v4290
      %v4323 = vadd.f32 %v4284, %v4290
      %v4324 = vmax.f32 %v4292, 0.0
      %v4325 = vmax.f32 %v4293, 0.0
      %v4326 = vmax.f32 %v4294, 0.0
      %v4327 = vmax.f32 %v4295, 0.0
      %v4328 = vmax.f32 %v4296, 0.0
      %v4329 = vmax.f32 %v4297, 0.0
      %v4330 = vmax.f32 %v4298, 0.0
      %v4331 = vmax.f32 %v4299, 0.0
      %v4332 = vmax.f32 %v4300, 0.0
      %v4333 = vmax.f32 %v4301, 0.0
      %v4334 = vmax.f32 %v4302, 0.0
      %v4335 = vmax.f32 %v4303, 0.0
      %v4336 = vmax.f32 %v4304, 0.0
      %v4337 = vmax.f32 %v4305, 0.0
      %v4338 = vmax.f32 %v4306, 0.0
      %v4339 = vmax.f32 %v4307, 0.0
      %v4340 = vmax.f32 %v4308, 0.0
      %v4341 = vmax.f32 %v4309, 0.0
      %v4342 = vmax.f32 %v4310, 0.0
      %v4343 = vmax.f32 %v4311, 0.0
      %v4344 = vmax.f32 %v4312, 0.0
      %v4345 = vmax.f32 %v4313, 0.0
      %v4346 = vmax.f32 %v4314, 0.0
      %v4347 = vmax.f32 %v4315, 0.0
      %v4348 = vmax.f32 %v4316, 0.0
      %v4349 = vmax.f32 %v4317, 0.0
      %v4350 = vmax.f32 %v4318, 0.0
      %v4351 = vmax.f32 %v4319, 0.0
      %v4352 = vmax.f32 %v4320, 0.0
      %v4353 = vmax.f32 %v4321, 0.0
      %v4354 = vmax.f32 %v4322, 0.0
      %v4355 = vmax.f32 %v4323, 0.0
      %vm4356 = vcmask 64512
      %4357 = vst.msk [vmem:[%s197] sm:$0xff] %vm4356, %v4324
      %4358 = vst.msk [vmem:[%s197 + $0x8] sm:$0xff] %vm4356, %v4325
      %4359 = vst.msk [vmem:[%s197 + $0x10] sm:$0xff] %vm4356, %v4326
      %4360 = vst.msk [vmem:[%s197 + $0x18] sm:$0xff] %vm4356, %v4327
      %4361 = vst.msk [vmem:[%s197 + $0x20] sm:$0xff] %vm4356, %v4328
      %4362 = vst.msk [vmem:[%s197 + $0x28] sm:$0xff] %vm4356, %v4329
      %4363 = vst.msk [vmem:[%s197 + $0x30] sm:$0xff] %vm4356, %v4330
      %4364 = vst.msk [vmem:[%s197 + $0x38] sm:$0xff] %vm4356, %v4331
      %4365 = vst.msk [vmem:[%s197 + $0x40] sm:$0xff] %vm4356, %v4332
      %4366 = vst.msk [vmem:[%s197 + $0x48] sm:$0xff] %vm4356, %v4333
      %4367 = vst.msk [vmem:[%s197 + $0x50] sm:$0xff] %vm4356, %v4334
      %4368 = vst.msk [vmem:[%s197 + $0x58] sm:$0xff] %vm4356, %v4335
      %4369 = vst.msk [vmem:[%s197 + $0x60] sm:$0xff] %vm4356, %v4336
      %4370 = vst.msk [vmem:[%s197 + $0x68] sm:$0xff] %vm4356, %v4337
      %4371 = vst.msk [vmem:[%s197 + $0x70] sm:$0xff] %vm4356, %v4338
      %4372 = vst.msk [vmem:[%s197 + $0x78] sm:$0xff] %vm4356, %v4339
      %4373 = vst.msk [vmem:[%s197 + $0x80] sm:$0xff] %vm4356, %v4340
      %4374 = vst.msk [vmem:[%s197 + $0x88] sm:$0xff] %vm4356, %v4341
      %4375 = vst.msk [vmem:[%s197 + $0x90] sm:$0xff] %vm4356, %v4342
      %4376 = vst.msk [vmem:[%s197 + $0x98] sm:$0xff] %vm4356, %v4343
      %4377 = vst.msk [vmem:[%s197 + $0xa0] sm:$0xff] %vm4356, %v4344
      %4378 = vst.msk [vmem:[%s197 + $0xa8] sm:$0xff] %vm4356, %v4345
      %4379 = vst.msk [vmem:[%s197 + $0xb0] sm:$0xff] %vm4356, %v4346
      %4380 = vst.msk [vmem:[%s197 + $0xb8] sm:$0xff] %vm4356, %v4347
      %4381 = vst.msk [vmem:[%s197 + $0xc0] sm:$0xff] %vm4356, %v4348
      %4382 = vst.msk [vmem:[%s197 + $0xc8] sm:$0xff] %vm4356, %v4349
      %4383 = vst.msk [vmem:[%s197 + $0xd0] sm:$0xff] %vm4356, %v4350
      %4384 = vst.msk [vmem:[%s197 + $0xd8] sm:$0xff] %vm4356, %v4351
      %4385 = vst.msk [vmem:[%s197 + $0xe0] sm:$0xff] %vm4356, %v4352
      %4386 = vst.msk [vmem:[%s197 + $0xe8] sm:$0xff] %vm4356, %v4353
      %4387 = vst.msk [vmem:[%s197 + $0xf0] sm:$0xff] %vm4356, %v4354
      %4388 = vst.msk [vmem:[%s197 + $0xf8] sm:$0xff] %vm4356, %v4355
      %p4389 = scmp.lt.s32.totalorder %s15, 1
      %s4390 = scalar_select %p4389, %s15, 1
      %s4391 = smul.addr %s4390, 32
      %s4392 = smul.addr %s4391, 8
      %s4393 = scalar_lea.vmem %s4, %s4392
      // Predicated region
      $region37: #{tpu_custom_call.1} parent=35 // pred_check
        %p4394 = pneg %p122
      $region38: #{tpu_custom_call.1} parent=35 // pred_check_branch
        %4396 = sbr.rel (%p4394) target = $region40
      $region39: #{tpu_custom_call.1} parent=35 // pred_region
        _
      $region40: #{tpu_custom_call.1} parent=35 // pred_fallthru
        _
    $region36: #{tpu_custom_call.1} parent=5 // pred_fallthru
      _
    %p4397 = scmp.le.s32.totalorder 2, %s10
    // Predicated region
    $region41: #{tpu_custom_call.1} parent=5 // pred_check
      %p4398 = pneg %p4397
    $region42: #{tpu_custom_call.1} parent=5 // pred_check_branch
      %4400 = sbr.rel (%p4398) target = $region44
    $region43: #{tpu_custom_call.1} parent=5 // pred_region
      %s4401 = ssub.s32 %s10, 2
      // Predicated region
      $region45: #{tpu_custom_call.1} parent=43 // pred_check
        %p4402 = pneg %p128
      $region46: #{tpu_custom_call.1} parent=43 // pred_check_branch
        %4404 = sbr.rel (%p4402) target = $region48
      $region47: #{tpu_custom_call.1} parent=43 // pred_region
        %p4405 = scmp.lt.s32.totalorder %s16, 1
        %s4406 = scalar_select %p4405, %s16, 1
        %s4407 = smul.addr %s4406, 32
        %s4408 = smul.addr %s4407, 8
        %s4409 = scalar_lea.vmem %s4, %s4408
      $region48: #{tpu_custom_call.1} parent=43 // pred_fallthru
        _
    $region44: #{tpu_custom_call.1} parent=5 // pred_fallthru
      _
  $region6: #{tpu_custom_call.1} parent=0 // loop_footer
    %s14 = sadd.s32 1, %s10
  $region7: #{tpu_custom_call.1} parent=0 // loop_footer_branch
    %9 = sbr.rel target = $region3
  $region8: #{tpu_custom_call.1} parent=0 // loop_exit
    _

</llo_original>
